<compile_context>
chip_gen: v6e
topology: v6e:2x2x1
jax: 0.10.0
libtpu: 0.0.40
codegen_flags: <defaults>
</compile_context>

<pallas_src>
import functools
import math

import jax
import jax.numpy as jnp
from jax.experimental import pallas as pl
from jax.experimental.pallas import tpu as pltpu


# ---------------------------------------------------------------------------
# tiling / compiler-param helpers
# ---------------------------------------------------------------------------

def _detect_max_row_tile():
    """v5e/v6e (128 MiB physical VMEM) can afford bigger row tiles than v7x (64 MiB)."""
    try:
        info = pltpu.get_tpu_info()
        vmem = getattr(info, "vmem_capacity_bytes", 0) or 0
        if vmem > 96 * 1024 * 1024:
            return 1024
    except Exception:
        pass
    return 512


_MAX_ROW_TILE = _detect_max_row_tile()
# Explicit scoped-VMEM cap: v5e's default is only 16 MiB; usage at these shapes is
# far below physical on every generation, so a generous cap is safe everywhere.
_VMEM_LIMIT_BYTES = 64 * 1024 * 1024


def _row_tile(m):
    """Full extent when small, else the largest power-of-two divisor <= cap."""
    if m <= _MAX_ROW_TILE:
        return m
    t = _MAX_ROW_TILE
    while t >= 8:
        if m % t == 0:
            return t
        t //= 2
    return _MAX_ROW_TILE  # ragged final block: Pallas pads reads / drops OOB writes


def _cparams(n_axes=1):
    return pltpu.CompilerParams(
        dimension_semantics=("parallel",) * n_axes,
        vmem_limit_bytes=_VMEM_LIMIT_BYTES)


def _ln(y, g, b, eps):
    """Row LayerNorm in f32. y:(rows,D) f32, g/b:(1,D) f32."""
    mean = jnp.mean(y, axis=-1, keepdims=True)
    var = jnp.mean(jnp.square(y - mean), axis=-1, keepdims=True)
    return (y - mean) * jax.lax.rsqrt(var + eps) * g + b


# ---------------------------------------------------------------------------
# attention building block (used by both fused attention kernels)
# ---------------------------------------------------------------------------

def _one_head(q, k, v):
    """q:(Sq,hd) k,v:(Sk,hd) bf16 -> (Sq,hd) f32. Scale is pre-folded into q."""
    s = jax.lax.dot_general(q, k, (((1,), (1,)), ((), ())),
                            preferred_element_type=jnp.float32)
    m = jnp.max(s, axis=-1, keepdims=True)
    p = jnp.exp(s - m)
    l = jnp.sum(p, axis=-1, keepdims=True)
    o = jnp.dot(p.astype(jnp.bfloat16), v, preferred_element_type=jnp.float32)
    # normalize the (Sq,hd) output instead of the (Sq,Sk) probs; EUP reciprocal.
    return o * pl.reciprocal(l, approx=True)


# ---------------------------------------------------------------------------
# fused self-attention block: QKV proj -> MHA -> out proj -> +res -> LN
# ---------------------------------------------------------------------------

def _self_attn_block_kernel(x_ref, wqkv_ref, bqkv_ref, wo_ref, bo_ref, g_ref, bb_ref,
                            o_ref, attn_sc, *, n_heads, eps):
    x = x_ref[0]                                       # (S, D) bf16
    D = x.shape[-1]
    hd = D // n_heads
    # fused QKV projection (softmax scale already folded into q columns / bias)
    qkv = jnp.dot(x, wqkv_ref[...], preferred_element_type=jnp.float32) + bqkv_ref[...]
    qkv = qkv.astype(jnp.bfloat16)                     # single cast hoisted above loop
    for h in range(n_heads):
        q = qkv[:, h * hd:(h + 1) * hd]
        k = qkv[:, D + h * hd:D + (h + 1) * hd]
        v = qkv[:, 2 * D + h * hd:2 * D + (h + 1) * hd]
        attn_sc[:, h * hd:(h + 1) * hd] = _one_head(q, k, v)   # direct per-head store
    # fused out-projection + residual + LayerNorm
    y = jnp.dot(attn_sc[...].astype(jnp.bfloat16), wo_ref[...],
                preferred_element_type=jnp.float32)
    y = y + bo_ref[...] + x.astype(jnp.float32)
    o_ref[0] = _ln(y, g_ref[...], bb_ref[...], eps).astype(o_ref.dtype)


def self_attn_block(x3, ap, ln, n_heads, eps=1e-5):
    B, S, D = x3.shape
    g, b = ln
    return pl.pallas_call(
        functools.partial(_self_attn_block_kernel, n_heads=n_heads, eps=eps),
        out_shape=jax.ShapeDtypeStruct((B, S, D), jnp.bfloat16),
        grid=(B,),
        in_specs=[
            pl.BlockSpec((1, S, D), lambda i: (i, 0, 0)),
            pl.BlockSpec((D, 3 * D), lambda i: (0, 0)),
            pl.BlockSpec((1, 3 * D), lambda i: (0, 0)),
            pl.BlockSpec((D, D), lambda i: (0, 0)),
            pl.BlockSpec((1, D), lambda i: (0, 0)),
            pl.BlockSpec((1, D), lambda i: (0, 0)),
            pl.BlockSpec((1, D), lambda i: (0, 0)),
        ],
        out_specs=pl.BlockSpec((1, S, D), lambda i: (i, 0, 0)),
        scratch_shapes=[pltpu.VMEM((S, D), jnp.float32)],
        compiler_params=_cparams(1),
    )(x3, ap['wqkv'], ap['bqkv'], ap['wo'], ap['bo'], g, b)


# ---------------------------------------------------------------------------
# fused cross-attention block: q / kv proj -> MHA -> out proj -> +res -> LN
# ---------------------------------------------------------------------------

def _cross_attn_block_kernel(x_ref, mem_ref, wq_ref, bq_ref, wkv_ref, bkv_ref,
                             wo_ref, bo_ref, g_ref, bb_ref, o_ref, attn_sc,
                             *, n_heads, eps):
    x = x_ref[0]                                       # (Sq, D) bf16
    mem = mem_ref[0]                                   # (Sk, D) bf16
    D = x.shape[-1]
    hd = D // n_heads
    q_all = (jnp.dot(x, wq_ref[...], preferred_element_type=jnp.float32)
             + bq_ref[...]).astype(jnp.bfloat16)       # scale folded into wq/bq
    kv = (jnp.dot(mem, wkv_ref[...], preferred_element_type=jnp.float32)
          + bkv_ref[...]).astype(jnp.bfloat16)         # packed [k | v]
    for h in range(n_heads):
        q = q_all[:, h * hd:(h + 1) * hd]
        k = kv[:, h * hd:(h + 1) * hd]
        v = kv[:, D + h * hd:D + (h + 1) * hd]
        attn_sc[:, h * hd:(h + 1) * hd] = _one_head(q, k, v)
    y = jnp.dot(attn_sc[...].astype(jnp.bfloat16), wo_ref[...],
                preferred_element_type=jnp.float32)
    y = y + bo_ref[...] + x.astype(jnp.float32)
    o_ref[0] = _ln(y, g_ref[...], bb_ref[...], eps).astype(o_ref.dtype)


def cross_attn_block(x3, mem3, ap, ln, n_heads, eps=1e-5):
    B, Sq, D = x3.shape
    Sk = mem3.shape[1]
    g, b = ln
    return pl.pallas_call(
        functools.partial(_cross_attn_block_kernel, n_heads=n_heads, eps=eps),
        out_shape=jax.ShapeDtypeStruct((B, Sq, D), jnp.bfloat16),
        grid=(B,),
        in_specs=[
            pl.BlockSpec((1, Sq, D), lambda i: (i, 0, 0)),
            pl.BlockSpec((1, Sk, D), lambda i: (i, 0, 0)),
            pl.BlockSpec((D, D), lambda i: (0, 0)),
            pl.BlockSpec((1, D), lambda i: (0, 0)),
            pl.BlockSpec((D, 2 * D), lambda i: (0, 0)),
            pl.BlockSpec((1, 2 * D), lambda i: (0, 0)),
            pl.BlockSpec((D, D), lambda i: (0, 0)),
            pl.BlockSpec((1, D), lambda i: (0, 0)),
            pl.BlockSpec((1, D), lambda i: (0, 0)),
            pl.BlockSpec((1, D), lambda i: (0, 0)),
        ],
        out_specs=pl.BlockSpec((1, Sq, D), lambda i: (i, 0, 0)),
        scratch_shapes=[pltpu.VMEM((Sq, D), jnp.float32)],
        compiler_params=_cparams(1),
    )(x3, mem3, ap['wq'], ap['bq'], ap['wkv'], ap['bkv'], ap['wo'], ap['bo'], g, b)


# ---------------------------------------------------------------------------
# fused FFN block: lin1 + ReLU + lin2 + residual + LayerNorm
# ---------------------------------------------------------------------------

def _ffn_add_ln_kernel(x_ref, w1_ref, b1_ref, w2_ref, b2_ref, g_ref, bb_ref, o_ref,
                       *, eps):
    x = x_ref[...]                                     # (tm, D) bf16
    h = jnp.dot(x, w1_ref[...], preferred_element_type=jnp.float32)
    h = jnp.maximum(h + b1_ref[...], 0.0)
    y = jnp.dot(h.astype(jnp.bfloat16), w2_ref[...], preferred_element_type=jnp.float32)
    y = y + b2_ref[...] + x.astype(jnp.float32)        # residual
    o_ref[...] = _ln(y, g_ref[...], bb_ref[...], eps).astype(o_ref.dtype)


def ffn_add_ln(x, fp, ln, eps=1e-5):
    M, D = x.shape
    F = fp['w1'].shape[1]
    g, b = ln
    tm = _row_tile(M)
    return pl.pallas_call(
        functools.partial(_ffn_add_ln_kernel, eps=eps),
        out_shape=jax.ShapeDtypeStruct((M, D), jnp.bfloat16),
        grid=(pl.cdiv(M, tm),),
        in_specs=[
            pl.BlockSpec((tm, D), lambda i: (i, 0)),
            pl.BlockSpec((D, F), lambda i: (0, 0)),
            pl.BlockSpec((1, F), lambda i: (0, 0)),
            pl.BlockSpec((F, D), lambda i: (0, 0)),
            pl.BlockSpec((1, D), lambda i: (0, 0)),
            pl.BlockSpec((1, D), lambda i: (0, 0)),
            pl.BlockSpec((1, D), lambda i: (0, 0)),
        ],
        out_specs=pl.BlockSpec((tm, D), lambda i: (i, 0)),
        compiler_params=_cparams(1),
    )(x, fp['w1'], fp['b1'], fp['w2'], fp['b2'], g, b)


# ---------------------------------------------------------------------------
# standalone LayerNorm (encoder / decoder final norms)
# ---------------------------------------------------------------------------

def _layernorm_kernel(x_ref, g_ref, b_ref, o_ref, *, eps):
    o_ref[...] = _ln(x_ref[...].astype(jnp.float32), g_ref[...], b_ref[...],
                     eps).astype(o_ref.dtype)


def layernorm(x, ln, eps=1e-5):
    M, D = x.shape
    g, b = ln
    tm = _row_tile(M)
    return pl.pallas_call(
        functools.partial(_layernorm_kernel, eps=eps),
        out_shape=jax.ShapeDtypeStruct((M, D), jnp.bfloat16),
        grid=(pl.cdiv(M, tm),),
        in_specs=[
            pl.BlockSpec((tm, D), lambda i: (i, 0)),
            pl.BlockSpec((1, D), lambda i: (0, 0)),
            pl.BlockSpec((1, D), lambda i: (0, 0)),
        ],
        out_specs=pl.BlockSpec((tm, D), lambda i: (i, 0)),
        compiler_params=_cparams(1),
    )(x, g, b)


# ---------------------------------------------------------------------------
# fused 3-layer MLP head
# ---------------------------------------------------------------------------

def _mlp_head_kernel(x_ref, w1_ref, b1_ref, w2_ref, b2_ref, w3_ref, b3_ref, o_ref):
    h = jnp.dot(x_ref[...], w1_ref[...], preferred_element_type=jnp.float32)
    h = jnp.maximum(h + b1_ref[...], 0.0)
    h = jnp.dot(h.astype(jnp.bfloat16), w2_ref[...], preferred_element_type=jnp.float32)
    h = jnp.maximum(h + b2_ref[...], 0.0)
    y = jnp.dot(h.astype(jnp.bfloat16), w3_ref[...], preferred_element_type=jnp.float32)
    o_ref[...] = y + b3_ref[...]


def mlp_head(x, hp):
    M, D = x.shape
    H1, H2, N = hp['w1'].shape[1], hp['w2'].shape[1], hp['w3'].shape[1]
    tm = _row_tile(M)
    return pl.pallas_call(
        _mlp_head_kernel,
        out_shape=jax.ShapeDtypeStruct((M, N), jnp.float32),
        grid=(pl.cdiv(M, tm),),
        in_specs=[
            pl.BlockSpec((tm, D), lambda i: (i, 0)),
            pl.BlockSpec((D, H1), lambda i: (0, 0)),
            pl.BlockSpec((1, H1), lambda i: (0, 0)),
            pl.BlockSpec((H1, H2), lambda i: (0, 0)),
            pl.BlockSpec((1, H2), lambda i: (0, 0)),
            pl.BlockSpec((H2, N), lambda i: (0, 0)),
            pl.BlockSpec((1, N), lambda i: (0, 0)),
        ],
        out_specs=pl.BlockSpec((tm, N), lambda i: (i, 0)),
        compiler_params=_cparams(1),
    )(x, hp['w1'], hp['b1'], hp['w2'], hp['b2'], hp['w3'], hp['b3'])


# ---------------------------------------------------------------------------
# weight packing: transpose, fold attention scale, pre-cast weights to bf16
# ---------------------------------------------------------------------------

def prepare_params(params, n_heads):
    """One-time packing: weights -> (in,out)-major bf16 (halves DMA bytes & VMEM),
    softmax scale folded into the q projection, biases/LN params as (1,N) f32."""
    D = params['enc_norm_g'].shape[0]
    hd = D // n_heads
    scale = 1.0 / math.sqrt(hd)

    def bf16(w):
        return w.astype(jnp.bfloat16)

    def row(v):
        return v.reshape(1, -1).astype(jnp.float32)

    def self_mha(p):
        w = p['in_proj_w'].T                     # (D, 3D): [q | k | v] columns
        b = p['in_proj_b']
        sv = jnp.concatenate([jnp.full((D,), scale, jnp.float32),
                              jnp.ones((2 * D,), jnp.float32)])
        return dict(wqkv=bf16(w * sv[None, :]), bqkv=row(b * sv),
                    wo=bf16(p['out_proj_w'].T), bo=row(p['out_proj_b']))

    def cross_mha(p):
        w = p['in_proj_w']                       # (3D, D)
        b = p['in_proj_b']
        return dict(wq=bf16(w[:D].T * scale), bq=row(b[:D] * scale),
                    wkv=bf16(w[D:].T), bkv=row(b[D:]),
                    wo=bf16(p['out_proj_w'].T), bo=row(p['out_proj_b']))

    def ffn(p):
        return dict(w1=bf16(p['lin1_w'].T), b1=row(p['lin1_b']),
                    w2=bf16(p['lin2_w'].T), b2=row(p['lin2_b']))

    def ln(g, b):
        return (row(g), row(b))

    enc_layers = [dict(self_attn=self_mha(lp['self_attn']),
                       ln1=ln(lp['ln1_g'], lp['ln1_b']),
                       ffn=ffn(lp),
                       ln2=ln(lp['ln2_g'], lp['ln2_b']))
                  for lp in params['enc_layers']]
    dec_layers = [dict(self_attn=self_mha(lp['self_attn']),
                       ln1=ln(lp['ln1_g'], lp['ln1_b']),
                       cross_attn=cross_mha(lp['cross_attn']),
                       ln2=ln(lp['ln2_g'], lp['ln2_b']),
                       ffn=ffn(lp),
                       ln3=ln(lp['ln3_g'], lp['ln3_b']))
                  for lp in params['dec_layers']]
    head = dict(w1=bf16(params['head_w1'].T), b1=row(params['head_b1']),
                w2=bf16(params['head_w2'].T), b2=row(params['head_b2']),
                w3=bf16(params['head_w3'].T), b3=row(params['head_b3']))

    return dict(pos_encoding=params['pos_encoding'],
                query_pos=params['query_pos'],
                enc_layers=enc_layers, dec_layers=dec_layers,
                enc_norm=ln(params['enc_norm_g'], params['enc_norm_b']),
                dec_norm=ln(params['dec_norm_g'], params['dec_norm_b']),
                head=head)


# ---------------------------------------------------------------------------
# model forward (plain JAX glue around the fused kernels)
# ---------------------------------------------------------------------------

def event_painter_forward(x, prep, *, n_heads):
    """x: (batch, feat_map_h*feat_map_w, hidden_dim) f32 -> (batch, max_n_events, 4) f32."""
    B, S, D = x.shape
    x = (x + prep['pos_encoding'][None, :, :]).astype(jnp.bfloat16)

    # encoder
    mem = x.reshape(B * S, D)
    for lp in prep['enc_layers']:
        mem = self_attn_block(mem.reshape(B, S, D), lp['self_attn'], lp['ln1'],
                              n_heads).reshape(B * S, D)
        mem = ffn_add_ln(mem, lp['ffn'], lp['ln2'])
    mem = layernorm(mem, prep['enc_norm'])
    mem3 = mem.reshape(B, S, D)

    # decoder
    E = prep['query_pos'].shape[0]
    tgt = jnp.broadcast_to(prep['query_pos'].astype(jnp.bfloat16)[None, :, :], (B, E, D))
    out = tgt.reshape(B * E, D)
    for lp in prep['dec_layers']:
        out = self_attn_block(out.reshape(B, E, D), lp['self_attn'], lp['ln1'],
                              n_heads).reshape(B * E, D)
        out = cross_attn_block(out.reshape(B, E, D), mem3, lp['cross_attn'],
                               lp['ln2'], n_heads).reshape(B * E, D)
        out = ffn_add_ln(out, lp['ffn'], lp['ln3'])
    out = layernorm(out, prep['dec_norm'])

    y = mlp_head(out, prep['head'])
    return y.reshape(B, E, 4)


# ---------------------------------------------------------------------------
# deterministic synthetic parameter init (shapes follow the PyTorch module)
# ---------------------------------------------------------------------------

def init_params(key, *, hidden_dim, n_heads, n_enc, n_dec, dim_ff,
                max_n_events, src_len):
    keys = iter(jax.random.split(key, 1024))
    D, F = hidden_dim, dim_ff

    def nrm(shape, scale=0.02):
        return jax.random.normal(next(keys), shape, jnp.float32) * scale

    def uni(shape):
        return jax.random.uniform(next(keys), shape, jnp.float32)

    def ones(shape):
        return jnp.ones(shape, jnp.float32)

    def zeros(shape):
        return jnp.zeros(shape, jnp.float32)

    def mha_p():
        return dict(in_proj_w=nrm((3 * D, D)), in_proj_b=nrm((3 * D,)),
                    out_proj_w=nrm((D, D)), out_proj_b=nrm((D,)))

    def enc_p():
        return dict(self_attn=mha_p(),
                    lin1_w=nrm((F, D)), lin1_b=nrm((F,)),
                    lin2_w=nrm((D, F)), lin2_b=nrm((D,)),
                    ln1_g=ones((D,)), ln1_b=zeros((D,)),
                    ln2_g=ones((D,)), ln2_b=zeros((D,)))

    def dec_p():
        d = enc_p()
        d['cross_attn'] = mha_p()
        d['ln3_g'] = ones((D,))
        d['ln3_b'] = zeros((D,))
        return d

    return dict(
        query_pos=uni((max_n_events, D)),       # torch.rand
        pos_encoding=uni((src_len, D)),         # torch.rand
        enc_layers=[enc_p() for _ in range(n_enc)],
        dec_layers=[dec_p() for _ in range(n_dec)],
        enc_norm_g=ones((D,)), enc_norm_b=zeros((D,)),
        dec_norm_g=ones((D,)), dec_norm_b=zeros((D,)),
        head_w1=nrm((D, D)), head_b1=nrm((D,)),
        head_w2=nrm((D, D)), head_b2=nrm((D,)),
        head_w3=nrm((4, D)), head_b3=nrm((4,)),
    )


# ---------------------------------------------------------------------------
# main
# ---------------------------------------------------------------------------

if __name__ == "__main__":
    # Small shapes consistent with the module (EventPainter defaults are
    # hidden_dim=64, heads=8, 3+3 layers, 512 events, 34x34 feature map,
    # dim_feedforward=2048 — shrunk here for a synthetic test).
    hidden_dim = 32
    n_heads = 4
    n_enc = 2
    n_dec = 2
    dim_ff = 64
    max_n_events = 8
    feat_h = feat_w = 4
    batch = 2
    src_len = feat_h * feat_w

    key = jax.random.PRNGKey(0)
    kx, kp = jax.random.split(key)
    params = init_params(kp, hidden_dim=hidden_dim, n_heads=n_heads,
                         n_enc=n_enc, n_dec=n_dec, dim_ff=dim_ff,
                         max_n_events=max_n_events, src_len=src_len)
    # one-time packing: bf16 weights stay resident in HBM as bf16
    prep = prepare_params(params, n_heads)

    # x: vision feature matrix, (batch, feat_map_h*feat_map_w, hidden_dim)
    x = jax.random.normal(kx, (batch, src_len, hidden_dim), jnp.float32)

    fwd = jax.jit(functools.partial(event_painter_forward, n_heads=n_heads))
    out = fwd(x, prep)
    out = jax.block_until_ready(out)
    assert out.shape == (batch, max_n_events, 4), out.shape
    assert bool(jnp.all(jnp.isfinite(out)))
    print("KERNEL_OK")
</pallas_src>

<mosaic_0001>
module attributes {stable_mosaic.version = 11 : i64} {
  func.func @_self_attn_block_kernel(%arg0: i32, %arg1: memref<1x16x32xbf16, #tpu.memory_space<vmem>>, %arg2: memref<32x96xbf16, #tpu.memory_space<vmem>>, %arg3: memref<1x96xf32, #tpu.memory_space<vmem>>, %arg4: memref<32x32xbf16, #tpu.memory_space<vmem>>, %arg5: memref<1x32xf32, #tpu.memory_space<vmem>>, %arg6: memref<1x32xf32, #tpu.memory_space<vmem>>, %arg7: memref<1x32xf32, #tpu.memory_space<vmem>>, %arg8: memref<1x16x32xbf16, #tpu.memory_space<vmem>>, %arg9: memref<16x32xf32, #tpu.memory_space<vmem>>) attributes {dimension_semantics = [#tpu.dimension_semantics<parallel>], iteration_bounds = array<i64: 2>, scalar_prefetch = 0 : i64, scratch_operands = 1 : i64, tpu.core_type = #tpu.core_type<tc>, window_params = [{transform_indices = @transform_0, window_bounds = array<i64: 1, 16, 32>}, {pipeline_mode = #tpu.pipeline_mode<synchronous>, transform_indices = @transform_1, window_bounds = array<i64: 32, 96>}, {pipeline_mode = #tpu.pipeline_mode<synchronous>, transform_indices = @transform_2, window_bounds = array<i64: 1, 96>}, {pipeline_mode = #tpu.pipeline_mode<synchronous>, transform_indices = @transform_3, window_bounds = array<i64: 32, 32>}, {pipeline_mode = #tpu.pipeline_mode<synchronous>, transform_indices = @transform_4, window_bounds = array<i64: 1, 32>}, {pipeline_mode = #tpu.pipeline_mode<synchronous>, transform_indices = @transform_5, window_bounds = array<i64: 1, 32>}, {pipeline_mode = #tpu.pipeline_mode<synchronous>, transform_indices = @transform_6, window_bounds = array<i64: 1, 32>}, {transform_indices = @transform_7, window_bounds = array<i64: 1, 16, 32>}]} {
    %c0 = arith.constant 0 : index
    %c0_0 = arith.constant 0 : index
    %c0_1 = arith.constant 0 : index
    %0 = vector.load %arg1[%c0, %c0_0, %c0_1] : memref<1x16x32xbf16, #tpu.memory_space<vmem>>, vector<1x16x32xbf16>
    %1 = vector.shape_cast %0 : vector<1x16x32xbf16> to vector<16x32xbf16>
    %c0_2 = arith.constant 0 : index
    %c0_3 = arith.constant 0 : index
    %2 = vector.load %arg2[%c0_2, %c0_3] : memref<32x96xbf16, #tpu.memory_space<vmem>>, vector<32x96xbf16>
    %cst = arith.constant dense<0.000000e+00> : vector<16x96xf32>
    %3 = tpu.matmul %1, %2, %cst {dimension_numbers = #tpu.dot_dimension_numbers<[1], [0], [0], [1], [0, 0, 1, 1], [], []>} : vector<16x32xbf16>, vector<32x96xbf16>, vector<16x96xf32> -> vector<16x96xf32>
    %c0_4 = arith.constant 0 : index
    %c0_5 = arith.constant 0 : index
    %4 = vector.load %arg3[%c0_4, %c0_5] : memref<1x96xf32, #tpu.memory_space<vmem>>, vector<1x96xf32>
    %5 = vector.broadcast %4 : vector<1x96xf32> to vector<16x96xf32>
    %6 = arith.addf %3, %5 : vector<16x96xf32>
    %7 = arith.truncf %6 : vector<16x96xf32> to vector<16x96xbf16>
    %8 = vector.extract_strided_slice %7 {offsets = [0, 0], sizes = [16, 8], strides = [1, 1]} : vector<16x96xbf16> to vector<16x8xbf16>
    %9 = vector.extract_strided_slice %7 {offsets = [0, 32], sizes = [16, 8], strides = [1, 1]} : vector<16x96xbf16> to vector<16x8xbf16>
    %10 = vector.extract_strided_slice %7 {offsets = [0, 64], sizes = [16, 8], strides = [1, 1]} : vector<16x96xbf16> to vector<16x8xbf16>
    %cst_6 = arith.constant dense<0.000000e+00> : vector<16x16xf32>
    %11 = tpu.matmul %8, %9, %cst_6 {dimension_numbers = #tpu.dot_dimension_numbers<[1], [1], [0], [0], [0, 0, 1, 0], [], []>} : vector<16x8xbf16>, vector<16x8xbf16>, vector<16x16xf32> -> vector<16x16xf32>
    %cst_7 = arith.constant dense<0xFF800000> : vector<16xf32>
    %12 = vector.multi_reduction <maximumf>, %11, %cst_7 [1] : vector<16x16xf32> to vector<16xf32>
    %13 = vector.shape_cast %12 : vector<16xf32> to vector<16x1xf32>
    %14 = vector.broadcast %13 : vector<16x1xf32> to vector<16x16xf32>
    %15 = arith.subf %11, %14 : vector<16x16xf32>
    %16 = math.exp %15 : vector<16x16xf32>
    %cst_8 = arith.constant dense<0.000000e+00> : vector<16xf32>
    %17 = vector.multi_reduction <add>, %16, %cst_8 [1] : vector<16x16xf32> to vector<16xf32>
    %18 = vector.shape_cast %17 : vector<16xf32> to vector<16x1xf32>
    %19 = arith.truncf %16 : vector<16x16xf32> to vector<16x16xbf16>
    %cst_9 = arith.constant dense<0.000000e+00> : vector<16x8xf32>
    %20 = tpu.matmul %19, %10, %cst_9 {dimension_numbers = #tpu.dot_dimension_numbers<[1], [0], [0], [1], [0, 0, 1, 1], [], []>} : vector<16x16xbf16>, vector<16x8xbf16>, vector<16x8xf32> -> vector<16x8xf32>
    %21 = tpu.reciprocal %18 {approx = true} : vector<16x1xf32> -> vector<16x1xf32>
    %22 = vector.broadcast %21 : vector<16x1xf32> to vector<16x8xf32>
    %23 = arith.mulf %20, %22 : vector<16x8xf32>
    %c0_10 = arith.constant 0 : index
    %c0_11 = arith.constant 0 : index
    %24 = vector.load %arg9[%c0_10, %c0_11] : memref<16x32xf32, #tpu.memory_space<vmem>>, vector<16x8xf32>
    tpu.vector_store %arg9[%c0_10, %c0_11], %23 {strides = array<i32>} : memref<16x32xf32, #tpu.memory_space<vmem>>, vector<16x8xf32>,
    %25 = vector.extract_strided_slice %7 {offsets = [0, 8], sizes = [16, 8], strides = [1, 1]} : vector<16x96xbf16> to vector<16x8xbf16>
    %26 = vector.extract_strided_slice %7 {offsets = [0, 40], sizes = [16, 8], strides = [1, 1]} : vector<16x96xbf16> to vector<16x8xbf16>
    %27 = vector.extract_strided_slice %7 {offsets = [0, 72], sizes = [16, 8], strides = [1, 1]} : vector<16x96xbf16> to vector<16x8xbf16>
    %cst_12 = arith.constant dense<0.000000e+00> : vector<16x16xf32>
    %28 = tpu.matmul %25, %26, %cst_12 {dimension_numbers = #tpu.dot_dimension_numbers<[1], [1], [0], [0], [0, 0, 1, 0], [], []>} : vector<16x8xbf16>, vector<16x8xbf16>, vector<16x16xf32> -> vector<16x16xf32>
    %cst_13 = arith.constant dense<0xFF800000> : vector<16xf32>
    %29 = vector.multi_reduction <maximumf>, %28, %cst_13 [1] : vector<16x16xf32> to vector<16xf32>
    %30 = vector.shape_cast %29 : vector<16xf32> to vector<16x1xf32>
    %31 = vector.broadcast %30 : vector<16x1xf32> to vector<16x16xf32>
    %32 = arith.subf %28, %31 : vector<16x16xf32>
    %33 = math.exp %32 : vector<16x16xf32>
    %cst_14 = arith.constant dense<0.000000e+00> : vector<16xf32>
    %34 = vector.multi_reduction <add>, %33, %cst_14 [1] : vector<16x16xf32> to vector<16xf32>
    %35 = vector.shape_cast %34 : vector<16xf32> to vector<16x1xf32>
    %36 = arith.truncf %33 : vector<16x16xf32> to vector<16x16xbf16>
    %cst_15 = arith.constant dense<0.000000e+00> : vector<16x8xf32>
    %37 = tpu.matmul %36, %27, %cst_15 {dimension_numbers = #tpu.dot_dimension_numbers<[1], [0], [0], [1], [0, 0, 1, 1], [], []>} : vector<16x16xbf16>, vector<16x8xbf16>, vector<16x8xf32> -> vector<16x8xf32>
    %38 = tpu.reciprocal %35 {approx = true} : vector<16x1xf32> -> vector<16x1xf32>
    %39 = vector.broadcast %38 : vector<16x1xf32> to vector<16x8xf32>
    %40 = arith.mulf %37, %39 : vector<16x8xf32>
    %c0_16 = arith.constant 0 : index
    %c8 = arith.constant 8 : index
    %41 = vector.load %arg9[%c0_16, %c8] : memref<16x32xf32, #tpu.memory_space<vmem>>, vector<16x8xf32>
    tpu.vector_store %arg9[%c0_16, %c8], %40 {strides = array<i32>} : memref<16x32xf32, #tpu.memory_space<vmem>>, vector<16x8xf32>,
    %42 = vector.extract_strided_slice %7 {offsets = [0, 16], sizes = [16, 8], strides = [1, 1]} : vector<16x96xbf16> to vector<16x8xbf16>
    %43 = vector.extract_strided_slice %7 {offsets = [0, 48], sizes = [16, 8], strides = [1, 1]} : vector<16x96xbf16> to vector<16x8xbf16>
    %44 = vector.extract_strided_slice %7 {offsets = [0, 80], sizes = [16, 8], strides = [1, 1]} : vector<16x96xbf16> to vector<16x8xbf16>
    %cst_17 = arith.constant dense<0.000000e+00> : vector<16x16xf32>
    %45 = tpu.matmul %42, %43, %cst_17 {dimension_numbers = #tpu.dot_dimension_numbers<[1], [1], [0], [0], [0, 0, 1, 0], [], []>} : vector<16x8xbf16>, vector<16x8xbf16>, vector<16x16xf32> -> vector<16x16xf32>
    %cst_18 = arith.constant dense<0xFF800000> : vector<16xf32>
    %46 = vector.multi_reduction <maximumf>, %45, %cst_18 [1] : vector<16x16xf32> to vector<16xf32>
    %47 = vector.shape_cast %46 : vector<16xf32> to vector<16x1xf32>
    %48 = vector.broadcast %47 : vector<16x1xf32> to vector<16x16xf32>
    %49 = arith.subf %45, %48 : vector<16x16xf32>
    %50 = math.exp %49 : vector<16x16xf32>
    %cst_19 = arith.constant dense<0.000000e+00> : vector<16xf32>
    %51 = vector.multi_reduction <add>, %50, %cst_19 [1] : vector<16x16xf32> to vector<16xf32>
    %52 = vector.shape_cast %51 : vector<16xf32> to vector<16x1xf32>
    %53 = arith.truncf %50 : vector<16x16xf32> to vector<16x16xbf16>
    %cst_20 = arith.constant dense<0.000000e+00> : vector<16x8xf32>
    %54 = tpu.matmul %53, %44, %cst_20 {dimension_numbers = #tpu.dot_dimension_numbers<[1], [0], [0], [1], [0, 0, 1, 1], [], []>} : vector<16x16xbf16>, vector<16x8xbf16>, vector<16x8xf32> -> vector<16x8xf32>
    %55 = tpu.reciprocal %52 {approx = true} : vector<16x1xf32> -> vector<16x1xf32>
    %56 = vector.broadcast %55 : vector<16x1xf32> to vector<16x8xf32>
    %57 = arith.mulf %54, %56 : vector<16x8xf32>
    %c0_21 = arith.constant 0 : index
    %c16 = arith.constant 16 : index
    %58 = vector.load %arg9[%c0_21, %c16] : memref<16x32xf32, #tpu.memory_space<vmem>>, vector<16x8xf32>
    tpu.vector_store %arg9[%c0_21, %c16], %57 {strides = array<i32>} : memref<16x32xf32, #tpu.memory_space<vmem>>, vector<16x8xf32>,
    %59 = vector.extract_strided_slice %7 {offsets = [0, 24], sizes = [16, 8], strides = [1, 1]} : vector<16x96xbf16> to vector<16x8xbf16>
    %60 = vector.extract_strided_slice %7 {offsets = [0, 56], sizes = [16, 8], strides = [1, 1]} : vector<16x96xbf16> to vector<16x8xbf16>
    %61 = vector.extract_strided_slice %7 {offsets = [0, 88], sizes = [16, 8], strides = [1, 1]} : vector<16x96xbf16> to vector<16x8xbf16>
    %cst_22 = arith.constant dense<0.000000e+00> : vector<16x16xf32>
    %62 = tpu.matmul %59, %60, %cst_22 {dimension_numbers = #tpu.dot_dimension_numbers<[1], [1], [0], [0], [0, 0, 1, 0], [], []>} : vector<16x8xbf16>, vector<16x8xbf16>, vector<16x16xf32> -> vector<16x16xf32>
    %cst_23 = arith.constant dense<0xFF800000> : vector<16xf32>
    %63 = vector.multi_reduction <maximumf>, %62, %cst_23 [1] : vector<16x16xf32> to vector<16xf32>
    %64 = vector.shape_cast %63 : vector<16xf32> to vector<16x1xf32>
    %65 = vector.broadcast %64 : vector<16x1xf32> to vector<16x16xf32>
    %66 = arith.subf %62, %65 : vector<16x16xf32>
    %67 = math.exp %66 : vector<16x16xf32>
    %cst_24 = arith.constant dense<0.000000e+00> : vector<16xf32>
    %68 = vector.multi_reduction <add>, %67, %cst_24 [1] : vector<16x16xf32> to vector<16xf32>
    %69 = vector.shape_cast %68 : vector<16xf32> to vector<16x1xf32>
    %70 = arith.truncf %67 : vector<16x16xf32> to vector<16x16xbf16>
    %cst_25 = arith.constant dense<0.000000e+00> : vector<16x8xf32>
    %71 = tpu.matmul %70, %61, %cst_25 {dimension_numbers = #tpu.dot_dimension_numbers<[1], [0], [0], [1], [0, 0, 1, 1], [], []>} : vector<16x16xbf16>, vector<16x8xbf16>, vector<16x8xf32> -> vector<16x8xf32>
    %72 = tpu.reciprocal %69 {approx = true} : vector<16x1xf32> -> vector<16x1xf32>
    %73 = vector.broadcast %72 : vector<16x1xf32> to vector<16x8xf32>
    %74 = arith.mulf %71, %73 : vector<16x8xf32>
    %c0_26 = arith.constant 0 : index
    %c24 = arith.constant 24 : index
    %75 = vector.load %arg9[%c0_26, %c24] : memref<16x32xf32, #tpu.memory_space<vmem>>, vector<16x8xf32>
    tpu.vector_store %arg9[%c0_26, %c24], %74 {strides = array<i32>} : memref<16x32xf32, #tpu.memory_space<vmem>>, vector<16x8xf32>,
    %c0_27 = arith.constant 0 : index
    %c0_28 = arith.constant 0 : index
    %76 = vector.load %arg9[%c0_27, %c0_28] : memref<16x32xf32, #tpu.memory_space<vmem>>, vector<16x32xf32>
    %77 = arith.truncf %76 : vector<16x32xf32> to vector<16x32xbf16>
    %c0_29 = arith.constant 0 : index
    %c0_30 = arith.constant 0 : index
    %78 = vector.load %arg4[%c0_29, %c0_30] : memref<32x32xbf16, #tpu.memory_space<vmem>>, vector<32x32xbf16>
    %cst_31 = arith.constant dense<0.000000e+00> : vector<16x32xf32>
    %79 = tpu.matmul %77, %78, %cst_31 {dimension_numbers = #tpu.dot_dimension_numbers<[1], [0], [0], [1], [0, 0, 1, 1], [], []>} : vector<16x32xbf16>, vector<32x32xbf16>, vector<16x32xf32> -> vector<16x32xf32>
    %c0_32 = arith.constant 0 : index
    %c0_33 = arith.constant 0 : index
    %80 = vector.load %arg5[%c0_32, %c0_33] : memref<1x32xf32, #tpu.memory_space<vmem>>, vector<1x32xf32>
    %81 = vector.broadcast %80 : vector<1x32xf32> to vector<16x32xf32>
    %82 = arith.addf %79, %81 : vector<16x32xf32>
    %83 = arith.extf %1 : vector<16x32xbf16> to vector<16x32xf32>
    %84 = arith.addf %82, %83 : vector<16x32xf32>
    %c0_34 = arith.constant 0 : index
    %c0_35 = arith.constant 0 : index
    %85 = vector.load %arg6[%c0_34, %c0_35] : memref<1x32xf32, #tpu.memory_space<vmem>>, vector<1x32xf32>
    %c0_36 = arith.constant 0 : index
    %c0_37 = arith.constant 0 : index
    %86 = vector.load %arg7[%c0_36, %c0_37] : memref<1x32xf32, #tpu.memory_space<vmem>>, vector<1x32xf32>
    %cst_38 = arith.constant dense<0.000000e+00> : vector<16xf32>
    %87 = vector.multi_reduction <add>, %84, %cst_38 [1] : vector<16x32xf32> to vector<16xf32>
    %88 = vector.shape_cast %87 : vector<16xf32> to vector<16x1xf32>
    %cst_39 = arith.constant 3.200000e+01 : f32
    %89 = vector.broadcast %cst_39 : f32 to vector<16x1xf32>
    %90 = arith.divf %88, %89 : vector<16x1xf32>
    %91 = vector.broadcast %90 : vector<16x1xf32> to vector<16x32xf32>
    %92 = arith.subf %84, %91 : vector<16x32xf32>
    %93 = arith.mulf %92, %92 : vector<16x32xf32>
    %cst_40 = arith.constant dense<0.000000e+00> : vector<16xf32>
    %94 = vector.multi_reduction <add>, %93, %cst_40 [1] : vector<16x32xf32> to vector<16xf32>
    %95 = vector.shape_cast %94 : vector<16xf32> to vector<16x1xf32>
    %cst_41 = arith.constant 3.200000e+01 : f32
    %96 = vector.broadcast %cst_41 : f32 to vector<16x1xf32>
    %97 = arith.divf %95, %96 : vector<16x1xf32>
    %98 = vector.broadcast %90 : vector<16x1xf32> to vector<16x32xf32>
    %99 = arith.subf %84, %98 : vector<16x32xf32>
    %cst_42 = arith.constant 9.99999974E-6 : f32
    %100 = vector.broadcast %cst_42 : f32 to vector<16x1xf32>
    %101 = arith.addf %97, %100 : vector<16x1xf32>
    %102 = math.rsqrt %101 : vector<16x1xf32>
    %103 = vector.broadcast %102 : vector<16x1xf32> to vector<16x32xf32>
    %104 = arith.mulf %99, %103 : vector<16x32xf32>
    %105 = vector.broadcast %85 : vector<1x32xf32> to vector<16x32xf32>
    %106 = arith.mulf %104, %105 : vector<16x32xf32>
    %107 = vector.broadcast %86 : vector<1x32xf32> to vector<16x32xf32>
    %108 = arith.addf %106, %107 : vector<16x32xf32>
    %109 = arith.truncf %108 : vector<16x32xf32> to vector<16x32xbf16>
    %c0_43 = arith.constant 0 : index
    %c0_44 = arith.constant 0 : index
    %c0_45 = arith.constant 0 : index
    %110 = vector.load %arg8[%c0_43, %c0_44, %c0_45] : memref<1x16x32xbf16, #tpu.memory_space<vmem>>, vector<1x16x32xbf16>
    %111 = vector.shape_cast %110 : vector<1x16x32xbf16> to vector<16x32xbf16>
    %112 = vector.shape_cast %109 : vector<16x32xbf16> to vector<1x16x32xbf16>
    tpu.vector_store %arg8[%c0_43, %c0_44, %c0_45], %112 {strides = array<i32>} : memref<1x16x32xbf16, #tpu.memory_space<vmem>>, vector<1x16x32xbf16>,
    return
  }
  func.func @transform_0(%arg0: i32) -> (i32, i32, i32) {
    %c0_i32 = arith.constant 0 : i32
    %c0_i32_0 = arith.constant 0 : i32
    %c0_i32_1 = arith.constant 0 : i32
    return %arg0, %c0_i32, %c0_i32_0 : i32, i32, i32
  }
  func.func @transform_1(%arg0: i32) -> (i32, i32) {
    %c0_i32 = arith.constant 0 : i32
    %c0_i32_0 = arith.constant 0 : i32
    %c0_i32_1 = arith.constant 0 : i32
    return %c0_i32, %c0_i32_0 : i32, i32
  }
  func.func @transform_2(%arg0: i32) -> (i32, i32) {
    %c0_i32 = arith.constant 0 : i32
    %c0_i32_0 = arith.constant 0 : i32
    %c0_i32_1 = arith.constant 0 : i32
    return %c0_i32, %c0_i32_0 : i32, i32
  }
  func.func @transform_3(%arg0: i32) -> (i32, i32) {
    %c0_i32 = arith.constant 0 : i32
    %c0_i32_0 = arith.constant 0 : i32
    %c0_i32_1 = arith.constant 0 : i32
    return %c0_i32, %c0_i32_0 : i32, i32
  }
  func.func @transform_4(%arg0: i32) -> (i32, i32) {
    %c0_i32 = arith.constant 0 : i32
    %c0_i32_0 = arith.constant 0 : i32
    %c0_i32_1 = arith.constant 0 : i32
    return %c0_i32, %c0_i32_0 : i32, i32
  }
  func.func @transform_5(%arg0: i32) -> (i32, i32) {
    %c0_i32 = arith.constant 0 : i32
    %c0_i32_0 = arith.constant 0 : i32
    %c0_i32_1 = arith.constant 0 : i32
    return %c0_i32, %c0_i32_0 : i32, i32
  }
  func.func @transform_6(%arg0: i32) -> (i32, i32) {
    %c0_i32 = arith.constant 0 : i32
    %c0_i32_0 = arith.constant 0 : i32
    %c0_i32_1 = arith.constant 0 : i32
    return %c0_i32, %c0_i32_0 : i32, i32
  }
  func.func @transform_7(%arg0: i32) -> (i32, i32, i32) {
    %c0_i32 = arith.constant 0 : i32
    %c0_i32_0 = arith.constant 0 : i32
    %c0_i32_1 = arith.constant 0 : i32
    return %arg0, %c0_i32, %c0_i32_0 : i32, i32, i32
  }
}

module attributes {stable_mosaic.version = 11 : i64} {
  func.func @_ffn_add_ln_kernel(%arg0: i32, %arg1: memref<32x32xbf16, #tpu.memory_space<vmem>>, %arg2: memref<32x64xbf16, #tpu.memory_space<vmem>>, %arg3: memref<1x64xf32, #tpu.memory_space<vmem>>, %arg4: memref<64x32xbf16, #tpu.memory_space<vmem>>, %arg5: memref<1x32xf32, #tpu.memory_space<vmem>>, %arg6: memref<1x32xf32, #tpu.memory_space<vmem>>, %arg7: memref<1x32xf32, #tpu.memory_space<vmem>>, %arg8: memref<32x32xbf16, #tpu.memory_space<vmem>>) attributes {dimension_semantics = [#tpu.dimension_semantics<parallel>], iteration_bounds = array<i64: 1>, scalar_prefetch = 0 : i64, scratch_operands = 0 : i64, tpu.core_type = #tpu.core_type<tc>, window_params = [{transform_indices = @transform_0, window_bounds = array<i64: 32, 32>}, {pipeline_mode = #tpu.pipeline_mode<synchronous>, transform_indices = @transform_1, window_bounds = array<i64: 32, 64>}, {pipeline_mode = #tpu.pipeline_mode<synchronous>, transform_indices = @transform_2, window_bounds = array<i64: 1, 64>}, {pipeline_mode = #tpu.pipeline_mode<synchronous>, transform_indices = @transform_3, window_bounds = array<i64: 64, 32>}, {pipeline_mode = #tpu.pipeline_mode<synchronous>, transform_indices = @transform_4, window_bounds = array<i64: 1, 32>}, {pipeline_mode = #tpu.pipeline_mode<synchronous>, transform_indices = @transform_5, window_bounds = array<i64: 1, 32>}, {pipeline_mode = #tpu.pipeline_mode<synchronous>, transform_indices = @transform_6, window_bounds = array<i64: 1, 32>}, {transform_indices = @transform_7, window_bounds = array<i64: 32, 32>}]} {
    %c0 = arith.constant 0 : index
    %c0_0 = arith.constant 0 : index
    %0 = vector.load %arg1[%c0, %c0_0] : memref<32x32xbf16, #tpu.memory_space<vmem>>, vector<32x32xbf16>
    %c0_1 = arith.constant 0 : index
    %c0_2 = arith.constant 0 : index
    %1 = vector.load %arg2[%c0_1, %c0_2] : memref<32x64xbf16, #tpu.memory_space<vmem>>, vector<32x64xbf16>
    %cst = arith.constant dense<0.000000e+00> : vector<32x64xf32>
    %2 = tpu.matmul %0, %1, %cst {dimension_numbers = #tpu.dot_dimension_numbers<[1], [0], [0], [1], [0, 0, 1, 1], [], []>} : vector<32x32xbf16>, vector<32x64xbf16>, vector<32x64xf32> -> vector<32x64xf32>
    %c0_3 = arith.constant 0 : index
    %c0_4 = arith.constant 0 : index
    %3 = vector.load %arg3[%c0_3, %c0_4] : memref<1x64xf32, #tpu.memory_space<vmem>>, vector<1x64xf32>
    %4 = vector.broadcast %3 : vector<1x64xf32> to vector<32x64xf32>
    %5 = arith.addf %2, %4 : vector<32x64xf32>
    %cst_5 = arith.constant 0.000000e+00 : f32
    %6 = vector.broadcast %cst_5 : f32 to vector<32x64xf32>
    %7 = arith.maximumf %5, %6 : vector<32x64xf32>
    %8 = arith.truncf %7 : vector<32x64xf32> to vector<32x64xbf16>
    %c0_6 = arith.constant 0 : index
    %c0_7 = arith.constant 0 : index
    %9 = vector.load %arg4[%c0_6, %c0_7] : memref<64x32xbf16, #tpu.memory_space<vmem>>, vector<64x32xbf16>
    %cst_8 = arith.constant dense<0.000000e+00> : vector<32x32xf32>
    %10 = tpu.matmul %8, %9, %cst_8 {dimension_numbers = #tpu.dot_dimension_numbers<[1], [0], [0], [1], [0, 0, 1, 1], [], []>} : vector<32x64xbf16>, vector<64x32xbf16>, vector<32x32xf32> -> vector<32x32xf32>
    %c0_9 = arith.constant 0 : index
    %c0_10 = arith.constant 0 : index
    %11 = vector.load %arg5[%c0_9, %c0_10] : memref<1x32xf32, #tpu.memory_space<vmem>>, vector<1x32xf32>
    %12 = vector.broadcast %11 : vector<1x32xf32> to vector<32x32xf32>
    %13 = arith.addf %10, %12 : vector<32x32xf32>
    %14 = arith.extf %0 : vector<32x32xbf16> to vector<32x32xf32>
    %15 = arith.addf %13, %14 : vector<32x32xf32>
    %c0_11 = arith.constant 0 : index
    %c0_12 = arith.constant 0 : index
    %16 = vector.load %arg6[%c0_11, %c0_12] : memref<1x32xf32, #tpu.memory_space<vmem>>, vector<1x32xf32>
    %c0_13 = arith.constant 0 : index
    %c0_14 = arith.constant 0 : index
    %17 = vector.load %arg7[%c0_13, %c0_14] : memref<1x32xf32, #tpu.memory_space<vmem>>, vector<1x32xf32>
    %cst_15 = arith.constant dense<0.000000e+00> : vector<32xf32>
    %18 = vector.multi_reduction <add>, %15, %cst_15 [1] : vector<32x32xf32> to vector<32xf32>
    %19 = vector.shape_cast %18 : vector<32xf32> to vector<32x1xf32>
    %cst_16 = arith.constant 3.200000e+01 : f32
    %20 = vector.broadcast %cst_16 : f32 to vector<32x1xf32>
    %21 = arith.divf %19, %20 : vector<32x1xf32>
    %22 = vector.broadcast %21 : vector<32x1xf32> to vector<32x32xf32>
    %23 = arith.subf %15, %22 : vector<32x32xf32>
    %24 = arith.mulf %23, %23 : vector<32x32xf32>
    %cst_17 = arith.constant dense<0.000000e+00> : vector<32xf32>
    %25 = vector.multi_reduction <add>, %24, %cst_17 [1] : vector<32x32xf32> to vector<32xf32>
    %26 = vector.shape_cast %25 : vector<32xf32> to vector<32x1xf32>
    %cst_18 = arith.constant 3.200000e+01 : f32
    %27 = vector.broadcast %cst_18 : f32 to vector<32x1xf32>
    %28 = arith.divf %26, %27 : vector<32x1xf32>
    %29 = vector.broadcast %21 : vector<32x1xf32> to vector<32x32xf32>
    %30 = arith.subf %15, %29 : vector<32x32xf32>
    %cst_19 = arith.constant 9.99999974E-6 : f32
    %31 = vector.broadcast %cst_19 : f32 to vector<32x1xf32>
    %32 = arith.addf %28, %31 : vector<32x1xf32>
    %33 = math.rsqrt %32 : vector<32x1xf32>
    %34 = vector.broadcast %33 : vector<32x1xf32> to vector<32x32xf32>
    %35 = arith.mulf %30, %34 : vector<32x32xf32>
    %36 = vector.broadcast %16 : vector<1x32xf32> to vector<32x32xf32>
    %37 = arith.mulf %35, %36 : vector<32x32xf32>
    %38 = vector.broadcast %17 : vector<1x32xf32> to vector<32x32xf32>
    %39 = arith.addf %37, %38 : vector<32x32xf32>
    %40 = arith.truncf %39 : vector<32x32xf32> to vector<32x32xbf16>
    %c0_20 = arith.constant 0 : index
    %c0_21 = arith.constant 0 : index
    %41 = vector.load %arg8[%c0_20, %c0_21] : memref<32x32xbf16, #tpu.memory_space<vmem>>, vector<32x32xbf16>
    tpu.vector_store %arg8[%c0_20, %c0_21], %40 {strides = array<i32>} : memref<32x32xbf16, #tpu.memory_space<vmem>>, vector<32x32xbf16>,
    return
  }
  func.func @transform_0(%arg0: i32) -> (i32, i32) {
    %c0_i32 = arith.constant 0 : i32
    %c0_i32_0 = arith.constant 0 : i32
    return %arg0, %c0_i32 : i32, i32
  }
  func.func @transform_1(%arg0: i32) -> (i32, i32) {
    %c0_i32 = arith.constant 0 : i32
    %c0_i32_0 = arith.constant 0 : i32
    %c0_i32_1 = arith.constant 0 : i32
    return %c0_i32, %c0_i32_0 : i32, i32
  }
  func.func @transform_2(%arg0: i32) -> (i32, i32) {
    %c0_i32 = arith.constant 0 : i32
    %c0_i32_0 = arith.constant 0 : i32
    %c0_i32_1 = arith.constant 0 : i32
    return %c0_i32, %c0_i32_0 : i32, i32
  }
  func.func @transform_3(%arg0: i32) -> (i32, i32) {
    %c0_i32 = arith.constant 0 : i32
    %c0_i32_0 = arith.constant 0 : i32
    %c0_i32_1 = arith.constant 0 : i32
    return %c0_i32, %c0_i32_0 : i32, i32
  }
  func.func @transform_4(%arg0: i32) -> (i32, i32) {
    %c0_i32 = arith.constant 0 : i32
    %c0_i32_0 = arith.constant 0 : i32
    %c0_i32_1 = arith.constant 0 : i32
    return %c0_i32, %c0_i32_0 : i32, i32
  }
  func.func @transform_5(%arg0: i32) -> (i32, i32) {
    %c0_i32 = arith.constant 0 : i32
    %c0_i32_0 = arith.constant 0 : i32
    %c0_i32_1 = arith.constant 0 : i32
    return %c0_i32, %c0_i32_0 : i32, i32
  }
  func.func @transform_6(%arg0: i32) -> (i32, i32) {
    %c0_i32 = arith.constant 0 : i32
    %c0_i32_0 = arith.constant 0 : i32
    %c0_i32_1 = arith.constant 0 : i32
    return %c0_i32, %c0_i32_0 : i32, i32
  }
  func.func @transform_7(%arg0: i32) -> (i32, i32) {
    %c0_i32 = arith.constant 0 : i32
    %c0_i32_0 = arith.constant 0 : i32
    return %arg0, %c0_i32 : i32, i32
  }
}

module attributes {stable_mosaic.version = 11 : i64} {
  func.func @_layernorm_kernel(%arg0: i32, %arg1: memref<32x32xbf16, #tpu.memory_space<vmem>>, %arg2: memref<1x32xf32, #tpu.memory_space<vmem>>, %arg3: memref<1x32xf32, #tpu.memory_space<vmem>>, %arg4: memref<32x32xbf16, #tpu.memory_space<vmem>>) attributes {dimension_semantics = [#tpu.dimension_semantics<parallel>], iteration_bounds = array<i64: 1>, scalar_prefetch = 0 : i64, scratch_operands = 0 : i64, tpu.core_type = #tpu.core_type<tc>, window_params = [{transform_indices = @transform_0, window_bounds = array<i64: 32, 32>}, {pipeline_mode = #tpu.pipeline_mode<synchronous>, transform_indices = @transform_1, window_bounds = array<i64: 1, 32>}, {pipeline_mode = #tpu.pipeline_mode<synchronous>, transform_indices = @transform_2, window_bounds = array<i64: 1, 32>}, {transform_indices = @transform_3, window_bounds = array<i64: 32, 32>}]} {
    %c0 = arith.constant 0 : index
    %c0_0 = arith.constant 0 : index
    %0 = vector.load %arg1[%c0, %c0_0] : memref<32x32xbf16, #tpu.memory_space<vmem>>, vector<32x32xbf16>
    %1 = arith.extf %0 : vector<32x32xbf16> to vector<32x32xf32>
    %c0_1 = arith.constant 0 : index
    %c0_2 = arith.constant 0 : index
    %2 = vector.load %arg2[%c0_1, %c0_2] : memref<1x32xf32, #tpu.memory_space<vmem>>, vector<1x32xf32>
    %c0_3 = arith.constant 0 : index
    %c0_4 = arith.constant 0 : index
    %3 = vector.load %arg3[%c0_3, %c0_4] : memref<1x32xf32, #tpu.memory_space<vmem>>, vector<1x32xf32>
    %cst = arith.constant dense<0.000000e+00> : vector<32xf32>
    %4 = vector.multi_reduction <add>, %1, %cst [1] : vector<32x32xf32> to vector<32xf32>
    %5 = vector.shape_cast %4 : vector<32xf32> to vector<32x1xf32>
    %cst_5 = arith.constant 3.200000e+01 : f32
    %6 = vector.broadcast %cst_5 : f32 to vector<32x1xf32>
    %7 = arith.divf %5, %6 : vector<32x1xf32>
    %8 = vector.broadcast %7 : vector<32x1xf32> to vector<32x32xf32>
    %9 = arith.subf %1, %8 : vector<32x32xf32>
    %10 = arith.mulf %9, %9 : vector<32x32xf32>
    %cst_6 = arith.constant dense<0.000000e+00> : vector<32xf32>
    %11 = vector.multi_reduction <add>, %10, %cst_6 [1] : vector<32x32xf32> to vector<32xf32>
    %12 = vector.shape_cast %11 : vector<32xf32> to vector<32x1xf32>
    %cst_7 = arith.constant 3.200000e+01 : f32
    %13 = vector.broadcast %cst_7 : f32 to vector<32x1xf32>
    %14 = arith.divf %12, %13 : vector<32x1xf32>
    %15 = vector.broadcast %7 : vector<32x1xf32> to vector<32x32xf32>
    %16 = arith.subf %1, %15 : vector<32x32xf32>
    %cst_8 = arith.constant 9.99999974E-6 : f32
    %17 = vector.broadcast %cst_8 : f32 to vector<32x1xf32>
    %18 = arith.addf %14, %17 : vector<32x1xf32>
    %19 = math.rsqrt %18 : vector<32x1xf32>
    %20 = vector.broadcast %19 : vector<32x1xf32> to vector<32x32xf32>
    %21 = arith.mulf %16, %20 : vector<32x32xf32>
    %22 = vector.broadcast %2 : vector<1x32xf32> to vector<32x32xf32>
    %23 = arith.mulf %21, %22 : vector<32x32xf32>
    %24 = vector.broadcast %3 : vector<1x32xf32> to vector<32x32xf32>
    %25 = arith.addf %23, %24 : vector<32x32xf32>
    %26 = arith.truncf %25 : vector<32x32xf32> to vector<32x32xbf16>
    %c0_9 = arith.constant 0 : index
    %c0_10 = arith.constant 0 : index
    %27 = vector.load %arg4[%c0_9, %c0_10] : memref<32x32xbf16, #tpu.memory_space<vmem>>, vector<32x32xbf16>
    tpu.vector_store %arg4[%c0_9, %c0_10], %26 {strides = array<i32>} : memref<32x32xbf16, #tpu.memory_space<vmem>>, vector<32x32xbf16>,
    return
  }
  func.func @transform_0(%arg0: i32) -> (i32, i32) {
    %c0_i32 = arith.constant 0 : i32
    %c0_i32_0 = arith.constant 0 : i32
    return %arg0, %c0_i32 : i32, i32
  }
  func.func @transform_1(%arg0: i32) -> (i32, i32) {
    %c0_i32 = arith.constant 0 : i32
    %c0_i32_0 = arith.constant 0 : i32
    %c0_i32_1 = arith.constant 0 : i32
    return %c0_i32, %c0_i32_0 : i32, i32
  }
  func.func @transform_2(%arg0: i32) -> (i32, i32) {
    %c0_i32 = arith.constant 0 : i32
    %c0_i32_0 = arith.constant 0 : i32
    %c0_i32_1 = arith.constant 0 : i32
    return %c0_i32, %c0_i32_0 : i32, i32
  }
  func.func @transform_3(%arg0: i32) -> (i32, i32) {
    %c0_i32 = arith.constant 0 : i32
    %c0_i32_0 = arith.constant 0 : i32
    return %arg0, %c0_i32 : i32, i32
  }
}

module attributes {stable_mosaic.version = 11 : i64} {
  func.func @_self_attn_block_kernel(%arg0: i32, %arg1: memref<1x8x32xbf16, #tpu.memory_space<vmem>>, %arg2: memref<32x96xbf16, #tpu.memory_space<vmem>>, %arg3: memref<1x96xf32, #tpu.memory_space<vmem>>, %arg4: memref<32x32xbf16, #tpu.memory_space<vmem>>, %arg5: memref<1x32xf32, #tpu.memory_space<vmem>>, %arg6: memref<1x32xf32, #tpu.memory_space<vmem>>, %arg7: memref<1x32xf32, #tpu.memory_space<vmem>>, %arg8: memref<1x8x32xbf16, #tpu.memory_space<vmem>>, %arg9: memref<8x32xf32, #tpu.memory_space<vmem>>) attributes {dimension_semantics = [#tpu.dimension_semantics<parallel>], iteration_bounds = array<i64: 2>, scalar_prefetch = 0 : i64, scratch_operands = 1 : i64, tpu.core_type = #tpu.core_type<tc>, window_params = [{transform_indices = @transform_0, window_bounds = array<i64: 1, 8, 32>}, {pipeline_mode = #tpu.pipeline_mode<synchronous>, transform_indices = @transform_1, window_bounds = array<i64: 32, 96>}, {pipeline_mode = #tpu.pipeline_mode<synchronous>, transform_indices = @transform_2, window_bounds = array<i64: 1, 96>}, {pipeline_mode = #tpu.pipeline_mode<synchronous>, transform_indices = @transform_3, window_bounds = array<i64: 32, 32>}, {pipeline_mode = #tpu.pipeline_mode<synchronous>, transform_indices = @transform_4, window_bounds = array<i64: 1, 32>}, {pipeline_mode = #tpu.pipeline_mode<synchronous>, transform_indices = @transform_5, window_bounds = array<i64: 1, 32>}, {pipeline_mode = #tpu.pipeline_mode<synchronous>, transform_indices = @transform_6, window_bounds = array<i64: 1, 32>}, {transform_indices = @transform_7, window_bounds = array<i64: 1, 8, 32>}]} {
    %c0 = arith.constant 0 : index
    %c0_0 = arith.constant 0 : index
    %c0_1 = arith.constant 0 : index
    %0 = vector.load %arg1[%c0, %c0_0, %c0_1] : memref<1x8x32xbf16, #tpu.memory_space<vmem>>, vector<1x8x32xbf16>
    %1 = vector.shape_cast %0 : vector<1x8x32xbf16> to vector<8x32xbf16>
    %c0_2 = arith.constant 0 : index
    %c0_3 = arith.constant 0 : index
    %2 = vector.load %arg2[%c0_2, %c0_3] : memref<32x96xbf16, #tpu.memory_space<vmem>>, vector<32x96xbf16>
    %cst = arith.constant dense<0.000000e+00> : vector<8x96xf32>
    %3 = tpu.matmul %1, %2, %cst {dimension_numbers = #tpu.dot_dimension_numbers<[1], [0], [0], [1], [0, 0, 1, 1], [], []>} : vector<8x32xbf16>, vector<32x96xbf16>, vector<8x96xf32> -> vector<8x96xf32>
    %c0_4 = arith.constant 0 : index
    %c0_5 = arith.constant 0 : index
    %4 = vector.load %arg3[%c0_4, %c0_5] : memref<1x96xf32, #tpu.memory_space<vmem>>, vector<1x96xf32>
    %5 = vector.broadcast %4 : vector<1x96xf32> to vector<8x96xf32>
    %6 = arith.addf %3, %5 : vector<8x96xf32>
    %7 = arith.truncf %6 : vector<8x96xf32> to vector<8x96xbf16>
    %8 = vector.extract_strided_slice %7 {offsets = [0, 0], sizes = [8, 8], strides = [1, 1]} : vector<8x96xbf16> to vector<8x8xbf16>
    %9 = vector.extract_strided_slice %7 {offsets = [0, 32], sizes = [8, 8], strides = [1, 1]} : vector<8x96xbf16> to vector<8x8xbf16>
    %10 = vector.extract_strided_slice %7 {offsets = [0, 64], sizes = [8, 8], strides = [1, 1]} : vector<8x96xbf16> to vector<8x8xbf16>
    %cst_6 = arith.constant dense<0.000000e+00> : vector<8x8xf32>
    %11 = tpu.matmul %8, %9, %cst_6 {dimension_numbers = #tpu.dot_dimension_numbers<[1], [1], [0], [0], [0, 0, 1, 0], [], []>} : vector<8x8xbf16>, vector<8x8xbf16>, vector<8x8xf32> -> vector<8x8xf32>
    %cst_7 = arith.constant dense<0xFF800000> : vector<8xf32>
    %12 = vector.multi_reduction <maximumf>, %11, %cst_7 [1] : vector<8x8xf32> to vector<8xf32>
    %13 = vector.shape_cast %12 : vector<8xf32> to vector<8x1xf32>
    %14 = vector.broadcast %13 : vector<8x1xf32> to vector<8x8xf32>
    %15 = arith.subf %11, %14 : vector<8x8xf32>
    %16 = math.exp %15 : vector<8x8xf32>
    %cst_8 = arith.constant dense<0.000000e+00> : vector<8xf32>
    %17 = vector.multi_reduction <add>, %16, %cst_8 [1] : vector<8x8xf32> to vector<8xf32>
    %18 = vector.shape_cast %17 : vector<8xf32> to vector<8x1xf32>
    %19 = arith.truncf %16 : vector<8x8xf32> to vector<8x8xbf16>
    %cst_9 = arith.constant dense<0.000000e+00> : vector<8x8xf32>
    %20 = tpu.matmul %19, %10, %cst_9 {dimension_numbers = #tpu.dot_dimension_numbers<[1], [0], [0], [1], [0, 0, 1, 1], [], []>} : vector<8x8xbf16>, vector<8x8xbf16>, vector<8x8xf32> -> vector<8x8xf32>
    %21 = tpu.reciprocal %18 {approx = true} : vector<8x1xf32> -> vector<8x1xf32>
    %22 = vector.broadcast %21 : vector<8x1xf32> to vector<8x8xf32>
    %23 = arith.mulf %20, %22 : vector<8x8xf32>
    %c0_10 = arith.constant 0 : index
    %c0_11 = arith.constant 0 : index
    %24 = vector.load %arg9[%c0_10, %c0_11] : memref<8x32xf32, #tpu.memory_space<vmem>>, vector<8x8xf32>
    tpu.vector_store %arg9[%c0_10, %c0_11], %23 {strides = array<i32>} : memref<8x32xf32, #tpu.memory_space<vmem>>, vector<8x8xf32>,
    %25 = vector.extract_strided_slice %7 {offsets = [0, 8], sizes = [8, 8], strides = [1, 1]} : vector<8x96xbf16> to vector<8x8xbf16>
    %26 = vector.extract_strided_slice %7 {offsets = [0, 40], sizes = [8, 8], strides = [1, 1]} : vector<8x96xbf16> to vector<8x8xbf16>
    %27 = vector.extract_strided_slice %7 {offsets = [0, 72], sizes = [8, 8], strides = [1, 1]} : vector<8x96xbf16> to vector<8x8xbf16>
    %cst_12 = arith.constant dense<0.000000e+00> : vector<8x8xf32>
    %28 = tpu.matmul %25, %26, %cst_12 {dimension_numbers = #tpu.dot_dimension_numbers<[1], [1], [0], [0], [0, 0, 1, 0], [], []>} : vector<8x8xbf16>, vector<8x8xbf16>, vector<8x8xf32> -> vector<8x8xf32>
    %cst_13 = arith.constant dense<0xFF800000> : vector<8xf32>
    %29 = vector.multi_reduction <maximumf>, %28, %cst_13 [1] : vector<8x8xf32> to vector<8xf32>
    %30 = vector.shape_cast %29 : vector<8xf32> to vector<8x1xf32>
    %31 = vector.broadcast %30 : vector<8x1xf32> to vector<8x8xf32>
    %32 = arith.subf %28, %31 : vector<8x8xf32>
    %33 = math.exp %32 : vector<8x8xf32>
    %cst_14 = arith.constant dense<0.000000e+00> : vector<8xf32>
    %34 = vector.multi_reduction <add>, %33, %cst_14 [1] : vector<8x8xf32> to vector<8xf32>
    %35 = vector.shape_cast %34 : vector<8xf32> to vector<8x1xf32>
    %36 = arith.truncf %33 : vector<8x8xf32> to vector<8x8xbf16>
    %cst_15 = arith.constant dense<0.000000e+00> : vector<8x8xf32>
    %37 = tpu.matmul %36, %27, %cst_15 {dimension_numbers = #tpu.dot_dimension_numbers<[1], [0], [0], [1], [0, 0, 1, 1], [], []>} : vector<8x8xbf16>, vector<8x8xbf16>, vector<8x8xf32> -> vector<8x8xf32>
    %38 = tpu.reciprocal %35 {approx = true} : vector<8x1xf32> -> vector<8x1xf32>
    %39 = vector.broadcast %38 : vector<8x1xf32> to vector<8x8xf32>
    %40 = arith.mulf %37, %39 : vector<8x8xf32>
    %c0_16 = arith.constant 0 : index
    %c8 = arith.constant 8 : index
    %41 = vector.load %arg9[%c0_16, %c8] : memref<8x32xf32, #tpu.memory_space<vmem>>, vector<8x8xf32>
    tpu.vector_store %arg9[%c0_16, %c8], %40 {strides = array<i32>} : memref<8x32xf32, #tpu.memory_space<vmem>>, vector<8x8xf32>,
    %42 = vector.extract_strided_slice %7 {offsets = [0, 16], sizes = [8, 8], strides = [1, 1]} : vector<8x96xbf16> to vector<8x8xbf16>
    %43 = vector.extract_strided_slice %7 {offsets = [0, 48], sizes = [8, 8], strides = [1, 1]} : vector<8x96xbf16> to vector<8x8xbf16>
    %44 = vector.extract_strided_slice %7 {offsets = [0, 80], sizes = [8, 8], strides = [1, 1]} : vector<8x96xbf16> to vector<8x8xbf16>
    %cst_17 = arith.constant dense<0.000000e+00> : vector<8x8xf32>
    %45 = tpu.matmul %42, %43, %cst_17 {dimension_numbers = #tpu.dot_dimension_numbers<[1], [1], [0], [0], [0, 0, 1, 0], [], []>} : vector<8x8xbf16>, vector<8x8xbf16>, vector<8x8xf32> -> vector<8x8xf32>
    %cst_18 = arith.constant dense<0xFF800000> : vector<8xf32>
    %46 = vector.multi_reduction <maximumf>, %45, %cst_18 [1] : vector<8x8xf32> to vector<8xf32>
    %47 = vector.shape_cast %46 : vector<8xf32> to vector<8x1xf32>
    %48 = vector.broadcast %47 : vector<8x1xf32> to vector<8x8xf32>
    %49 = arith.subf %45, %48 : vector<8x8xf32>
    %50 = math.exp %49 : vector<8x8xf32>
    %cst_19 = arith.constant dense<0.000000e+00> : vector<8xf32>
    %51 = vector.multi_reduction <add>, %50, %cst_19 [1] : vector<8x8xf32> to vector<8xf32>
    %52 = vector.shape_cast %51 : vector<8xf32> to vector<8x1xf32>
    %53 = arith.truncf %50 : vector<8x8xf32> to vector<8x8xbf16>
    %cst_20 = arith.constant dense<0.000000e+00> : vector<8x8xf32>
    %54 = tpu.matmul %53, %44, %cst_20 {dimension_numbers = #tpu.dot_dimension_numbers<[1], [0], [0], [1], [0, 0, 1, 1], [], []>} : vector<8x8xbf16>, vector<8x8xbf16>, vector<8x8xf32> -> vector<8x8xf32>
    %55 = tpu.reciprocal %52 {approx = true} : vector<8x1xf32> -> vector<8x1xf32>
    %56 = vector.broadcast %55 : vector<8x1xf32> to vector<8x8xf32>
    %57 = arith.mulf %54, %56 : vector<8x8xf32>
    %c0_21 = arith.constant 0 : index
    %c16 = arith.constant 16 : index
    %58 = vector.load %arg9[%c0_21, %c16] : memref<8x32xf32, #tpu.memory_space<vmem>>, vector<8x8xf32>
    tpu.vector_store %arg9[%c0_21, %c16], %57 {strides = array<i32>} : memref<8x32xf32, #tpu.memory_space<vmem>>, vector<8x8xf32>,
    %59 = vector.extract_strided_slice %7 {offsets = [0, 24], sizes = [8, 8], strides = [1, 1]} : vector<8x96xbf16> to vector<8x8xbf16>
    %60 = vector.extract_strided_slice %7 {offsets = [0, 56], sizes = [8, 8], strides = [1, 1]} : vector<8x96xbf16> to vector<8x8xbf16>
    %61 = vector.extract_strided_slice %7 {offsets = [0, 88], sizes = [8, 8], strides = [1, 1]} : vector<8x96xbf16> to vector<8x8xbf16>
    %cst_22 = arith.constant dense<0.000000e+00> : vector<8x8xf32>
    %62 = tpu.matmul %59, %60, %cst_22 {dimension_numbers = #tpu.dot_dimension_numbers<[1], [1], [0], [0], [0, 0, 1, 0], [], []>} : vector<8x8xbf16>, vector<8x8xbf16>, vector<8x8xf32> -> vector<8x8xf32>
    %cst_23 = arith.constant dense<0xFF800000> : vector<8xf32>
    %63 = vector.multi_reduction <maximumf>, %62, %cst_23 [1] : vector<8x8xf32> to vector<8xf32>
    %64 = vector.shape_cast %63 : vector<8xf32> to vector<8x1xf32>
    %65 = vector.broadcast %64 : vector<8x1xf32> to vector<8x8xf32>
    %66 = arith.subf %62, %65 : vector<8x8xf32>
    %67 = math.exp %66 : vector<8x8xf32>
    %cst_24 = arith.constant dense<0.000000e+00> : vector<8xf32>
    %68 = vector.multi_reduction <add>, %67, %cst_24 [1] : vector<8x8xf32> to vector<8xf32>
    %69 = vector.shape_cast %68 : vector<8xf32> to vector<8x1xf32>
    %70 = arith.truncf %67 : vector<8x8xf32> to vector<8x8xbf16>
    %cst_25 = arith.constant dense<0.000000e+00> : vector<8x8xf32>
    %71 = tpu.matmul %70, %61, %cst_25 {dimension_numbers = #tpu.dot_dimension_numbers<[1], [0], [0], [1], [0, 0, 1, 1], [], []>} : vector<8x8xbf16>, vector<8x8xbf16>, vector<8x8xf32> -> vector<8x8xf32>
    %72 = tpu.reciprocal %69 {approx = true} : vector<8x1xf32> -> vector<8x1xf32>
    %73 = vector.broadcast %72 : vector<8x1xf32> to vector<8x8xf32>
    %74 = arith.mulf %71, %73 : vector<8x8xf32>
    %c0_26 = arith.constant 0 : index
    %c24 = arith.constant 24 : index
    %75 = vector.load %arg9[%c0_26, %c24] : memref<8x32xf32, #tpu.memory_space<vmem>>, vector<8x8xf32>
    tpu.vector_store %arg9[%c0_26, %c24], %74 {strides = array<i32>} : memref<8x32xf32, #tpu.memory_space<vmem>>, vector<8x8xf32>,
    %c0_27 = arith.constant 0 : index
    %c0_28 = arith.constant 0 : index
    %76 = vector.load %arg9[%c0_27, %c0_28] : memref<8x32xf32, #tpu.memory_space<vmem>>, vector<8x32xf32>
    %77 = arith.truncf %76 : vector<8x32xf32> to vector<8x32xbf16>
    %c0_29 = arith.constant 0 : index
    %c0_30 = arith.constant 0 : index
    %78 = vector.load %arg4[%c0_29, %c0_30] : memref<32x32xbf16, #tpu.memory_space<vmem>>, vector<32x32xbf16>
    %cst_31 = arith.constant dense<0.000000e+00> : vector<8x32xf32>
    %79 = tpu.matmul %77, %78, %cst_31 {dimension_numbers = #tpu.dot_dimension_numbers<[1], [0], [0], [1], [0, 0, 1, 1], [], []>} : vector<8x32xbf16>, vector<32x32xbf16>, vector<8x32xf32> -> vector<8x32xf32>
    %c0_32 = arith.constant 0 : index
    %c0_33 = arith.constant 0 : index
    %80 = vector.load %arg5[%c0_32, %c0_33] : memref<1x32xf32, #tpu.memory_space<vmem>>, vector<1x32xf32>
    %81 = vector.broadcast %80 : vector<1x32xf32> to vector<8x32xf32>
    %82 = arith.addf %79, %81 : vector<8x32xf32>
    %83 = arith.extf %1 : vector<8x32xbf16> to vector<8x32xf32>
    %84 = arith.addf %82, %83 : vector<8x32xf32>
    %c0_34 = arith.constant 0 : index
    %c0_35 = arith.constant 0 : index
    %85 = vector.load %arg6[%c0_34, %c0_35] : memref<1x32xf32, #tpu.memory_space<vmem>>, vector<1x32xf32>
    %c0_36 = arith.constant 0 : index
    %c0_37 = arith.constant 0 : index
    %86 = vector.load %arg7[%c0_36, %c0_37] : memref<1x32xf32, #tpu.memory_space<vmem>>, vector<1x32xf32>
    %cst_38 = arith.constant dense<0.000000e+00> : vector<8xf32>
    %87 = vector.multi_reduction <add>, %84, %cst_38 [1] : vector<8x32xf32> to vector<8xf32>
    %88 = vector.shape_cast %87 : vector<8xf32> to vector<8x1xf32>
    %cst_39 = arith.constant 3.200000e+01 : f32
    %89 = vector.broadcast %cst_39 : f32 to vector<8x1xf32>
    %90 = arith.divf %88, %89 : vector<8x1xf32>
    %91 = vector.broadcast %90 : vector<8x1xf32> to vector<8x32xf32>
    %92 = arith.subf %84, %91 : vector<8x32xf32>
    %93 = arith.mulf %92, %92 : vector<8x32xf32>
    %cst_40 = arith.constant dense<0.000000e+00> : vector<8xf32>
    %94 = vector.multi_reduction <add>, %93, %cst_40 [1] : vector<8x32xf32> to vector<8xf32>
    %95 = vector.shape_cast %94 : vector<8xf32> to vector<8x1xf32>
    %cst_41 = arith.constant 3.200000e+01 : f32
    %96 = vector.broadcast %cst_41 : f32 to vector<8x1xf32>
    %97 = arith.divf %95, %96 : vector<8x1xf32>
    %98 = vector.broadcast %90 : vector<8x1xf32> to vector<8x32xf32>
    %99 = arith.subf %84, %98 : vector<8x32xf32>
    %cst_42 = arith.constant 9.99999974E-6 : f32
    %100 = vector.broadcast %cst_42 : f32 to vector<8x1xf32>
    %101 = arith.addf %97, %100 : vector<8x1xf32>
    %102 = math.rsqrt %101 : vector<8x1xf32>
    %103 = vector.broadcast %102 : vector<8x1xf32> to vector<8x32xf32>
    %104 = arith.mulf %99, %103 : vector<8x32xf32>
    %105 = vector.broadcast %85 : vector<1x32xf32> to vector<8x32xf32>
    %106 = arith.mulf %104, %105 : vector<8x32xf32>
    %107 = vector.broadcast %86 : vector<1x32xf32> to vector<8x32xf32>
    %108 = arith.addf %106, %107 : vector<8x32xf32>
    %109 = arith.truncf %108 : vector<8x32xf32> to vector<8x32xbf16>
    %c0_43 = arith.constant 0 : index
    %c0_44 = arith.constant 0 : index
    %c0_45 = arith.constant 0 : index
    %110 = vector.load %arg8[%c0_43, %c0_44, %c0_45] : memref<1x8x32xbf16, #tpu.memory_space<vmem>>, vector<1x8x32xbf16>
    %111 = vector.shape_cast %110 : vector<1x8x32xbf16> to vector<8x32xbf16>
    %112 = vector.shape_cast %109 : vector<8x32xbf16> to vector<1x8x32xbf16>
    tpu.vector_store %arg8[%c0_43, %c0_44, %c0_45], %112 {strides = array<i32>} : memref<1x8x32xbf16, #tpu.memory_space<vmem>>, vector<1x8x32xbf16>,
    return
  }
  func.func @transform_0(%arg0: i32) -> (i32, i32, i32) {
    %c0_i32 = arith.constant 0 : i32
    %c0_i32_0 = arith.constant 0 : i32
    %c0_i32_1 = arith.constant 0 : i32
    return %arg0, %c0_i32, %c0_i32_0 : i32, i32, i32
  }
  func.func @transform_1(%arg0: i32) -> (i32, i32) {
    %c0_i32 = arith.constant 0 : i32
    %c0_i32_0 = arith.constant 0 : i32
    %c0_i32_1 = arith.constant 0 : i32
    return %c0_i32, %c0_i32_0 : i32, i32
  }
  func.func @transform_2(%arg0: i32) -> (i32, i32) {
    %c0_i32 = arith.constant 0 : i32
    %c0_i32_0 = arith.constant 0 : i32
    %c0_i32_1 = arith.constant 0 : i32
    return %c0_i32, %c0_i32_0 : i32, i32
  }
  func.func @transform_3(%arg0: i32) -> (i32, i32) {
    %c0_i32 = arith.constant 0 : i32
    %c0_i32_0 = arith.constant 0 : i32
    %c0_i32_1 = arith.constant 0 : i32
    return %c0_i32, %c0_i32_0 : i32, i32
  }
  func.func @transform_4(%arg0: i32) -> (i32, i32) {
    %c0_i32 = arith.constant 0 : i32
    %c0_i32_0 = arith.constant 0 : i32
    %c0_i32_1 = arith.constant 0 : i32
    return %c0_i32, %c0_i32_0 : i32, i32
  }
  func.func @transform_5(%arg0: i32) -> (i32, i32) {
    %c0_i32 = arith.constant 0 : i32
    %c0_i32_0 = arith.constant 0 : i32
    %c0_i32_1 = arith.constant 0 : i32
    return %c0_i32, %c0_i32_0 : i32, i32
  }
  func.func @transform_6(%arg0: i32) -> (i32, i32) {
    %c0_i32 = arith.constant 0 : i32
    %c0_i32_0 = arith.constant 0 : i32
    %c0_i32_1 = arith.constant 0 : i32
    return %c0_i32, %c0_i32_0 : i32, i32
  }
  func.func @transform_7(%arg0: i32) -> (i32, i32, i32) {
    %c0_i32 = arith.constant 0 : i32
    %c0_i32_0 = arith.constant 0 : i32
    %c0_i32_1 = arith.constant 0 : i32
    return %arg0, %c0_i32, %c0_i32_0 : i32, i32, i32
  }
}

module attributes {stable_mosaic.version = 11 : i64} {
  func.func @_ffn_add_ln_kernel(%arg0: i32, %arg1: memref<16x32xbf16, #tpu.memory_space<vmem>>, %arg2: memref<32x64xbf16, #tpu.memory_space<vmem>>, %arg3: memref<1x64xf32, #tpu.memory_space<vmem>>, %arg4: memref<64x32xbf16, #tpu.memory_space<vmem>>, %arg5: memref<1x32xf32, #tpu.memory_space<vmem>>, %arg6: memref<1x32xf32, #tpu.memory_space<vmem>>, %arg7: memref<1x32xf32, #tpu.memory_space<vmem>>, %arg8: memref<16x32xbf16, #tpu.memory_space<vmem>>) attributes {dimension_semantics = [#tpu.dimension_semantics<parallel>], iteration_bounds = array<i64: 1>, scalar_prefetch = 0 : i64, scratch_operands = 0 : i64, tpu.core_type = #tpu.core_type<tc>, window_params = [{transform_indices = @transform_0, window_bounds = array<i64: 16, 32>}, {pipeline_mode = #tpu.pipeline_mode<synchronous>, transform_indices = @transform_1, window_bounds = array<i64: 32, 64>}, {pipeline_mode = #tpu.pipeline_mode<synchronous>, transform_indices = @transform_2, window_bounds = array<i64: 1, 64>}, {pipeline_mode = #tpu.pipeline_mode<synchronous>, transform_indices = @transform_3, window_bounds = array<i64: 64, 32>}, {pipeline_mode = #tpu.pipeline_mode<synchronous>, transform_indices = @transform_4, window_bounds = array<i64: 1, 32>}, {pipeline_mode = #tpu.pipeline_mode<synchronous>, transform_indices = @transform_5, window_bounds = array<i64: 1, 32>}, {pipeline_mode = #tpu.pipeline_mode<synchronous>, transform_indices = @transform_6, window_bounds = array<i64: 1, 32>}, {transform_indices = @transform_7, window_bounds = array<i64: 16, 32>}]} {
    %c0 = arith.constant 0 : index
    %c0_0 = arith.constant 0 : index
    %0 = vector.load %arg1[%c0, %c0_0] : memref<16x32xbf16, #tpu.memory_space<vmem>>, vector<16x32xbf16>
    %c0_1 = arith.constant 0 : index
    %c0_2 = arith.constant 0 : index
    %1 = vector.load %arg2[%c0_1, %c0_2] : memref<32x64xbf16, #tpu.memory_space<vmem>>, vector<32x64xbf16>
    %cst = arith.constant dense<0.000000e+00> : vector<16x64xf32>
    %2 = tpu.matmul %0, %1, %cst {dimension_numbers = #tpu.dot_dimension_numbers<[1], [0], [0], [1], [0, 0, 1, 1], [], []>} : vector<16x32xbf16>, vector<32x64xbf16>, vector<16x64xf32> -> vector<16x64xf32>
    %c0_3 = arith.constant 0 : index
    %c0_4 = arith.constant 0 : index
    %3 = vector.load %arg3[%c0_3, %c0_4] : memref<1x64xf32, #tpu.memory_space<vmem>>, vector<1x64xf32>
    %4 = vector.broadcast %3 : vector<1x64xf32> to vector<16x64xf32>
    %5 = arith.addf %2, %4 : vector<16x64xf32>
    %cst_5 = arith.constant 0.000000e+00 : f32
    %6 = vector.broadcast %cst_5 : f32 to vector<16x64xf32>
    %7 = arith.maximumf %5, %6 : vector<16x64xf32>
    %8 = arith.truncf %7 : vector<16x64xf32> to vector<16x64xbf16>
    %c0_6 = arith.constant 0 : index
    %c0_7 = arith.constant 0 : index
    %9 = vector.load %arg4[%c0_6, %c0_7] : memref<64x32xbf16, #tpu.memory_space<vmem>>, vector<64x32xbf16>
    %cst_8 = arith.constant dense<0.000000e+00> : vector<16x32xf32>
    %10 = tpu.matmul %8, %9, %cst_8 {dimension_numbers = #tpu.dot_dimension_numbers<[1], [0], [0], [1], [0, 0, 1, 1], [], []>} : vector<16x64xbf16>, vector<64x32xbf16>, vector<16x32xf32> -> vector<16x32xf32>
    %c0_9 = arith.constant 0 : index
    %c0_10 = arith.constant 0 : index
    %11 = vector.load %arg5[%c0_9, %c0_10] : memref<1x32xf32, #tpu.memory_space<vmem>>, vector<1x32xf32>
    %12 = vector.broadcast %11 : vector<1x32xf32> to vector<16x32xf32>
    %13 = arith.addf %10, %12 : vector<16x32xf32>
    %14 = arith.extf %0 : vector<16x32xbf16> to vector<16x32xf32>
    %15 = arith.addf %13, %14 : vector<16x32xf32>
    %c0_11 = arith.constant 0 : index
    %c0_12 = arith.constant 0 : index
    %16 = vector.load %arg6[%c0_11, %c0_12] : memref<1x32xf32, #tpu.memory_space<vmem>>, vector<1x32xf32>
    %c0_13 = arith.constant 0 : index
    %c0_14 = arith.constant 0 : index
    %17 = vector.load %arg7[%c0_13, %c0_14] : memref<1x32xf32, #tpu.memory_space<vmem>>, vector<1x32xf32>
    %cst_15 = arith.constant dense<0.000000e+00> : vector<16xf32>
    %18 = vector.multi_reduction <add>, %15, %cst_15 [1] : vector<16x32xf32> to vector<16xf32>
    %19 = vector.shape_cast %18 : vector<16xf32> to vector<16x1xf32>
    %cst_16 = arith.constant 3.200000e+01 : f32
    %20 = vector.broadcast %cst_16 : f32 to vector<16x1xf32>
    %21 = arith.divf %19, %20 : vector<16x1xf32>
    %22 = vector.broadcast %21 : vector<16x1xf32> to vector<16x32xf32>
    %23 = arith.subf %15, %22 : vector<16x32xf32>
    %24 = arith.mulf %23, %23 : vector<16x32xf32>
    %cst_17 = arith.constant dense<0.000000e+00> : vector<16xf32>
    %25 = vector.multi_reduction <add>, %24, %cst_17 [1] : vector<16x32xf32> to vector<16xf32>
    %26 = vector.shape_cast %25 : vector<16xf32> to vector<16x1xf32>
    %cst_18 = arith.constant 3.200000e+01 : f32
    %27 = vector.broadcast %cst_18 : f32 to vector<16x1xf32>
    %28 = arith.divf %26, %27 : vector<16x1xf32>
    %29 = vector.broadcast %21 : vector<16x1xf32> to vector<16x32xf32>
    %30 = arith.subf %15, %29 : vector<16x32xf32>
    %cst_19 = arith.constant 9.99999974E-6 : f32
    %31 = vector.broadcast %cst_19 : f32 to vector<16x1xf32>
    %32 = arith.addf %28, %31 : vector<16x1xf32>
    %33 = math.rsqrt %32 : vector<16x1xf32>
    %34 = vector.broadcast %33 : vector<16x1xf32> to vector<16x32xf32>
    %35 = arith.mulf %30, %34 : vector<16x32xf32>
    %36 = vector.broadcast %16 : vector<1x32xf32> to vector<16x32xf32>
    %37 = arith.mulf %35, %36 : vector<16x32xf32>
    %38 = vector.broadcast %17 : vector<1x32xf32> to vector<16x32xf32>
    %39 = arith.addf %37, %38 : vector<16x32xf32>
    %40 = arith.truncf %39 : vector<16x32xf32> to vector<16x32xbf16>
    %c0_20 = arith.constant 0 : index
    %c0_21 = arith.constant 0 : index
    %41 = vector.load %arg8[%c0_20, %c0_21] : memref<16x32xbf16, #tpu.memory_space<vmem>>, vector<16x32xbf16>
    tpu.vector_store %arg8[%c0_20, %c0_21], %40 {strides = array<i32>} : memref<16x32xbf16, #tpu.memory_space<vmem>>, vector<16x32xbf16>,
    return
  }
  func.func @transform_0(%arg0: i32) -> (i32, i32) {
    %c0_i32 = arith.constant 0 : i32
    %c0_i32_0 = arith.constant 0 : i32
    return %arg0, %c0_i32 : i32, i32
  }
  func.func @transform_1(%arg0: i32) -> (i32, i32) {
    %c0_i32 = arith.constant 0 : i32
    %c0_i32_0 = arith.constant 0 : i32
    %c0_i32_1 = arith.constant 0 : i32
    return %c0_i32, %c0_i32_0 : i32, i32
  }
  func.func @transform_2(%arg0: i32) -> (i32, i32) {
    %c0_i32 = arith.constant 0 : i32
    %c0_i32_0 = arith.constant 0 : i32
    %c0_i32_1 = arith.constant 0 : i32
    return %c0_i32, %c0_i32_0 : i32, i32
  }
  func.func @transform_3(%arg0: i32) -> (i32, i32) {
    %c0_i32 = arith.constant 0 : i32
    %c0_i32_0 = arith.constant 0 : i32
    %c0_i32_1 = arith.constant 0 : i32
    return %c0_i32, %c0_i32_0 : i32, i32
  }
  func.func @transform_4(%arg0: i32) -> (i32, i32) {
    %c0_i32 = arith.constant 0 : i32
    %c0_i32_0 = arith.constant 0 : i32
    %c0_i32_1 = arith.constant 0 : i32
    return %c0_i32, %c0_i32_0 : i32, i32
  }
  func.func @transform_5(%arg0: i32) -> (i32, i32) {
    %c0_i32 = arith.constant 0 : i32
    %c0_i32_0 = arith.constant 0 : i32
    %c0_i32_1 = arith.constant 0 : i32
    return %c0_i32, %c0_i32_0 : i32, i32
  }
  func.func @transform_6(%arg0: i32) -> (i32, i32) {
    %c0_i32 = arith.constant 0 : i32
    %c0_i32_0 = arith.constant 0 : i32
    %c0_i32_1 = arith.constant 0 : i32
    return %c0_i32, %c0_i32_0 : i32, i32
  }
  func.func @transform_7(%arg0: i32) -> (i32, i32) {
    %c0_i32 = arith.constant 0 : i32
    %c0_i32_0 = arith.constant 0 : i32
    return %arg0, %c0_i32 : i32, i32
  }
}

module attributes {stable_mosaic.version = 11 : i64} {
  func.func @_cross_attn_block_kernel(%arg0: i32, %arg1: memref<1x8x32xbf16, #tpu.memory_space<vmem>>, %arg2: memref<1x16x32xbf16, #tpu.memory_space<vmem>>, %arg3: memref<32x32xbf16, #tpu.memory_space<vmem>>, %arg4: memref<1x32xf32, #tpu.memory_space<vmem>>, %arg5: memref<32x64xbf16, #tpu.memory_space<vmem>>, %arg6: memref<1x64xf32, #tpu.memory_space<vmem>>, %arg7: memref<32x32xbf16, #tpu.memory_space<vmem>>, %arg8: memref<1x32xf32, #tpu.memory_space<vmem>>, %arg9: memref<1x32xf32, #tpu.memory_space<vmem>>, %arg10: memref<1x32xf32, #tpu.memory_space<vmem>>, %arg11: memref<1x8x32xbf16, #tpu.memory_space<vmem>>, %arg12: memref<8x32xf32, #tpu.memory_space<vmem>>) attributes {dimension_semantics = [#tpu.dimension_semantics<parallel>], iteration_bounds = array<i64: 2>, scalar_prefetch = 0 : i64, scratch_operands = 1 : i64, tpu.core_type = #tpu.core_type<tc>, window_params = [{transform_indices = @transform_0, window_bounds = array<i64: 1, 8, 32>}, {transform_indices = @transform_1, window_bounds = array<i64: 1, 16, 32>}, {pipeline_mode = #tpu.pipeline_mode<synchronous>, transform_indices = @transform_2, window_bounds = array<i64: 32, 32>}, {pipeline_mode = #tpu.pipeline_mode<synchronous>, transform_indices = @transform_3, window_bounds = array<i64: 1, 32>}, {pipeline_mode = #tpu.pipeline_mode<synchronous>, transform_indices = @transform_4, window_bounds = array<i64: 32, 64>}, {pipeline_mode = #tpu.pipeline_mode<synchronous>, transform_indices = @transform_5, window_bounds = array<i64: 1, 64>}, {pipeline_mode = #tpu.pipeline_mode<synchronous>, transform_indices = @transform_6, window_bounds = array<i64: 32, 32>}, {pipeline_mode = #tpu.pipeline_mode<synchronous>, transform_indices = @transform_7, window_bounds = array<i64: 1, 32>}, {pipeline_mode = #tpu.pipeline_mode<synchronous>, transform_indices = @transform_8, window_bounds = array<i64: 1, 32>}, {pipeline_mode = #tpu.pipeline_mode<synchronous>, transform_indices = @transform_9, window_bounds = array<i64: 1, 32>}, {transform_indices = @transform_10, window_bounds = array<i64: 1, 8, 32>}]} {
    %c0 = arith.constant 0 : index
    %c0_0 = arith.constant 0 : index
    %c0_1 = arith.constant 0 : index
    %0 = vector.load %arg1[%c0, %c0_0, %c0_1] : memref<1x8x32xbf16, #tpu.memory_space<vmem>>, vector<1x8x32xbf16>
    %1 = vector.shape_cast %0 : vector<1x8x32xbf16> to vector<8x32xbf16>
    %c0_2 = arith.constant 0 : index
    %c0_3 = arith.constant 0 : index
    %c0_4 = arith.constant 0 : index
    %2 = vector.load %arg2[%c0_2, %c0_3, %c0_4] : memref<1x16x32xbf16, #tpu.memory_space<vmem>>, vector<1x16x32xbf16>
    %3 = vector.shape_cast %2 : vector<1x16x32xbf16> to vector<16x32xbf16>
    %c0_5 = arith.constant 0 : index
    %c0_6 = arith.constant 0 : index
    %4 = vector.load %arg3[%c0_5, %c0_6] : memref<32x32xbf16, #tpu.memory_space<vmem>>, vector<32x32xbf16>
    %cst = arith.constant dense<0.000000e+00> : vector<8x32xf32>
    %5 = tpu.matmul %1, %4, %cst {dimension_numbers = #tpu.dot_dimension_numbers<[1], [0], [0], [1], [0, 0, 1, 1], [], []>} : vector<8x32xbf16>, vector<32x32xbf16>, vector<8x32xf32> -> vector<8x32xf32>
    %c0_7 = arith.constant 0 : index
    %c0_8 = arith.constant 0 : index
    %6 = vector.load %arg4[%c0_7, %c0_8] : memref<1x32xf32, #tpu.memory_space<vmem>>, vector<1x32xf32>
    %7 = vector.broadcast %6 : vector<1x32xf32> to vector<8x32xf32>
    %8 = arith.addf %5, %7 : vector<8x32xf32>
    %9 = arith.truncf %8 : vector<8x32xf32> to vector<8x32xbf16>
    %c0_9 = arith.constant 0 : index
    %c0_10 = arith.constant 0 : index
    %10 = vector.load %arg5[%c0_9, %c0_10] : memref<32x64xbf16, #tpu.memory_space<vmem>>, vector<32x64xbf16>
    %cst_11 = arith.constant dense<0.000000e+00> : vector<16x64xf32>
    %11 = tpu.matmul %3, %10, %cst_11 {dimension_numbers = #tpu.dot_dimension_numbers<[1], [0], [0], [1], [0, 0, 1, 1], [], []>} : vector<16x32xbf16>, vector<32x64xbf16>, vector<16x64xf32> -> vector<16x64xf32>
    %c0_12 = arith.constant 0 : index
    %c0_13 = arith.constant 0 : index
    %12 = vector.load %arg6[%c0_12, %c0_13] : memref<1x64xf32, #tpu.memory_space<vmem>>, vector<1x64xf32>
    %13 = vector.broadcast %12 : vector<1x64xf32> to vector<16x64xf32>
    %14 = arith.addf %11, %13 : vector<16x64xf32>
    %15 = arith.truncf %14 : vector<16x64xf32> to vector<16x64xbf16>
    %16 = vector.extract_strided_slice %9 {offsets = [0, 0], sizes = [8, 8], strides = [1, 1]} : vector<8x32xbf16> to vector<8x8xbf16>
    %17 = vector.extract_strided_slice %15 {offsets = [0, 0], sizes = [16, 8], strides = [1, 1]} : vector<16x64xbf16> to vector<16x8xbf16>
    %18 = vector.extract_strided_slice %15 {offsets = [0, 32], sizes = [16, 8], strides = [1, 1]} : vector<16x64xbf16> to vector<16x8xbf16>
    %cst_14 = arith.constant dense<0.000000e+00> : vector<8x16xf32>
    %19 = tpu.matmul %16, %17, %cst_14 {dimension_numbers = #tpu.dot_dimension_numbers<[1], [1], [0], [0], [0, 0, 1, 0], [], []>} : vector<8x8xbf16>, vector<16x8xbf16>, vector<8x16xf32> -> vector<8x16xf32>
    %cst_15 = arith.constant dense<0xFF800000> : vector<8xf32>
    %20 = vector.multi_reduction <maximumf>, %19, %cst_15 [1] : vector<8x16xf32> to vector<8xf32>
    %21 = vector.shape_cast %20 : vector<8xf32> to vector<8x1xf32>
    %22 = vector.broadcast %21 : vector<8x1xf32> to vector<8x16xf32>
    %23 = arith.subf %19, %22 : vector<8x16xf32>
    %24 = math.exp %23 : vector<8x16xf32>
    %cst_16 = arith.constant dense<0.000000e+00> : vector<8xf32>
    %25 = vector.multi_reduction <add>, %24, %cst_16 [1] : vector<8x16xf32> to vector<8xf32>
    %26 = vector.shape_cast %25 : vector<8xf32> to vector<8x1xf32>
    %27 = arith.truncf %24 : vector<8x16xf32> to vector<8x16xbf16>
    %cst_17 = arith.constant dense<0.000000e+00> : vector<8x8xf32>
    %28 = tpu.matmul %27, %18, %cst_17 {dimension_numbers = #tpu.dot_dimension_numbers<[1], [0], [0], [1], [0, 0, 1, 1], [], []>} : vector<8x16xbf16>, vector<16x8xbf16>, vector<8x8xf32> -> vector<8x8xf32>
    %29 = tpu.reciprocal %26 {approx = true} : vector<8x1xf32> -> vector<8x1xf32>
    %30 = vector.broadcast %29 : vector<8x1xf32> to vector<8x8xf32>
    %31 = arith.mulf %28, %30 : vector<8x8xf32>
    %c0_18 = arith.constant 0 : index
    %c0_19 = arith.constant 0 : index
    %32 = vector.load %arg12[%c0_18, %c0_19] : memref<8x32xf32, #tpu.memory_space<vmem>>, vector<8x8xf32>
    tpu.vector_store %arg12[%c0_18, %c0_19], %31 {strides = array<i32>} : memref<8x32xf32, #tpu.memory_space<vmem>>, vector<8x8xf32>,
    %33 = vector.extract_strided_slice %9 {offsets = [0, 8], sizes = [8, 8], strides = [1, 1]} : vector<8x32xbf16> to vector<8x8xbf16>
    %34 = vector.extract_strided_slice %15 {offsets = [0, 8], sizes = [16, 8], strides = [1, 1]} : vector<16x64xbf16> to vector<16x8xbf16>
    %35 = vector.extract_strided_slice %15 {offsets = [0, 40], sizes = [16, 8], strides = [1, 1]} : vector<16x64xbf16> to vector<16x8xbf16>
    %cst_20 = arith.constant dense<0.000000e+00> : vector<8x16xf32>
    %36 = tpu.matmul %33, %34, %cst_20 {dimension_numbers = #tpu.dot_dimension_numbers<[1], [1], [0], [0], [0, 0, 1, 0], [], []>} : vector<8x8xbf16>, vector<16x8xbf16>, vector<8x16xf32> -> vector<8x16xf32>
    %cst_21 = arith.constant dense<0xFF800000> : vector<8xf32>
    %37 = vector.multi_reduction <maximumf>, %36, %cst_21 [1] : vector<8x16xf32> to vector<8xf32>
    %38 = vector.shape_cast %37 : vector<8xf32> to vector<8x1xf32>
    %39 = vector.broadcast %38 : vector<8x1xf32> to vector<8x16xf32>
    %40 = arith.subf %36, %39 : vector<8x16xf32>
    %41 = math.exp %40 : vector<8x16xf32>
    %cst_22 = arith.constant dense<0.000000e+00> : vector<8xf32>
    %42 = vector.multi_reduction <add>, %41, %cst_22 [1] : vector<8x16xf32> to vector<8xf32>
    %43 = vector.shape_cast %42 : vector<8xf32> to vector<8x1xf32>
    %44 = arith.truncf %41 : vector<8x16xf32> to vector<8x16xbf16>
    %cst_23 = arith.constant dense<0.000000e+00> : vector<8x8xf32>
    %45 = tpu.matmul %44, %35, %cst_23 {dimension_numbers = #tpu.dot_dimension_numbers<[1], [0], [0], [1], [0, 0, 1, 1], [], []>} : vector<8x16xbf16>, vector<16x8xbf16>, vector<8x8xf32> -> vector<8x8xf32>
    %46 = tpu.reciprocal %43 {approx = true} : vector<8x1xf32> -> vector<8x1xf32>
    %47 = vector.broadcast %46 : vector<8x1xf32> to vector<8x8xf32>
    %48 = arith.mulf %45, %47 : vector<8x8xf32>
    %c0_24 = arith.constant 0 : index
    %c8 = arith.constant 8 : index
    %49 = vector.load %arg12[%c0_24, %c8] : memref<8x32xf32, #tpu.memory_space<vmem>>, vector<8x8xf32>
    tpu.vector_store %arg12[%c0_24, %c8], %48 {strides = array<i32>} : memref<8x32xf32, #tpu.memory_space<vmem>>, vector<8x8xf32>,
    %50 = vector.extract_strided_slice %9 {offsets = [0, 16], sizes = [8, 8], strides = [1, 1]} : vector<8x32xbf16> to vector<8x8xbf16>
    %51 = vector.extract_strided_slice %15 {offsets = [0, 16], sizes = [16, 8], strides = [1, 1]} : vector<16x64xbf16> to vector<16x8xbf16>
    %52 = vector.extract_strided_slice %15 {offsets = [0, 48], sizes = [16, 8], strides = [1, 1]} : vector<16x64xbf16> to vector<16x8xbf16>
    %cst_25 = arith.constant dense<0.000000e+00> : vector<8x16xf32>
    %53 = tpu.matmul %50, %51, %cst_25 {dimension_numbers = #tpu.dot_dimension_numbers<[1], [1], [0], [0], [0, 0, 1, 0], [], []>} : vector<8x8xbf16>, vector<16x8xbf16>, vector<8x16xf32> -> vector<8x16xf32>
    %cst_26 = arith.constant dense<0xFF800000> : vector<8xf32>
    %54 = vector.multi_reduction <maximumf>, %53, %cst_26 [1] : vector<8x16xf32> to vector<8xf32>
    %55 = vector.shape_cast %54 : vector<8xf32> to vector<8x1xf32>
    %56 = vector.broadcast %55 : vector<8x1xf32> to vector<8x16xf32>
    %57 = arith.subf %53, %56 : vector<8x16xf32>
    %58 = math.exp %57 : vector<8x16xf32>
    %cst_27 = arith.constant dense<0.000000e+00> : vector<8xf32>
    %59 = vector.multi_reduction <add>, %58, %cst_27 [1] : vector<8x16xf32> to vector<8xf32>
    %60 = vector.shape_cast %59 : vector<8xf32> to vector<8x1xf32>
    %61 = arith.truncf %58 : vector<8x16xf32> to vector<8x16xbf16>
    %cst_28 = arith.constant dense<0.000000e+00> : vector<8x8xf32>
    %62 = tpu.matmul %61, %52, %cst_28 {dimension_numbers = #tpu.dot_dimension_numbers<[1], [0], [0], [1], [0, 0, 1, 1], [], []>} : vector<8x16xbf16>, vector<16x8xbf16>, vector<8x8xf32> -> vector<8x8xf32>
    %63 = tpu.reciprocal %60 {approx = true} : vector<8x1xf32> -> vector<8x1xf32>
    %64 = vector.broadcast %63 : vector<8x1xf32> to vector<8x8xf32>
    %65 = arith.mulf %62, %64 : vector<8x8xf32>
    %c0_29 = arith.constant 0 : index
    %c16 = arith.constant 16 : index
    %66 = vector.load %arg12[%c0_29, %c16] : memref<8x32xf32, #tpu.memory_space<vmem>>, vector<8x8xf32>
    tpu.vector_store %arg12[%c0_29, %c16], %65 {strides = array<i32>} : memref<8x32xf32, #tpu.memory_space<vmem>>, vector<8x8xf32>,
    %67 = vector.extract_strided_slice %9 {offsets = [0, 24], sizes = [8, 8], strides = [1, 1]} : vector<8x32xbf16> to vector<8x8xbf16>
    %68 = vector.extract_strided_slice %15 {offsets = [0, 24], sizes = [16, 8], strides = [1, 1]} : vector<16x64xbf16> to vector<16x8xbf16>
    %69 = vector.extract_strided_slice %15 {offsets = [0, 56], sizes = [16, 8], strides = [1, 1]} : vector<16x64xbf16> to vector<16x8xbf16>
    %cst_30 = arith.constant dense<0.000000e+00> : vector<8x16xf32>
    %70 = tpu.matmul %67, %68, %cst_30 {dimension_numbers = #tpu.dot_dimension_numbers<[1], [1], [0], [0], [0, 0, 1, 0], [], []>} : vector<8x8xbf16>, vector<16x8xbf16>, vector<8x16xf32> -> vector<8x16xf32>
    %cst_31 = arith.constant dense<0xFF800000> : vector<8xf32>
    %71 = vector.multi_reduction <maximumf>, %70, %cst_31 [1] : vector<8x16xf32> to vector<8xf32>
    %72 = vector.shape_cast %71 : vector<8xf32> to vector<8x1xf32>
    %73 = vector.broadcast %72 : vector<8x1xf32> to vector<8x16xf32>
    %74 = arith.subf %70, %73 : vector<8x16xf32>
    %75 = math.exp %74 : vector<8x16xf32>
    %cst_32 = arith.constant dense<0.000000e+00> : vector<8xf32>
    %76 = vector.multi_reduction <add>, %75, %cst_32 [1] : vector<8x16xf32> to vector<8xf32>
    %77 = vector.shape_cast %76 : vector<8xf32> to vector<8x1xf32>
    %78 = arith.truncf %75 : vector<8x16xf32> to vector<8x16xbf16>
    %cst_33 = arith.constant dense<0.000000e+00> : vector<8x8xf32>
    %79 = tpu.matmul %78, %69, %cst_33 {dimension_numbers = #tpu.dot_dimension_numbers<[1], [0], [0], [1], [0, 0, 1, 1], [], []>} : vector<8x16xbf16>, vector<16x8xbf16>, vector<8x8xf32> -> vector<8x8xf32>
    %80 = tpu.reciprocal %77 {approx = true} : vector<8x1xf32> -> vector<8x1xf32>
    %81 = vector.broadcast %80 : vector<8x1xf32> to vector<8x8xf32>
    %82 = arith.mulf %79, %81 : vector<8x8xf32>
    %c0_34 = arith.constant 0 : index
    %c24 = arith.constant 24 : index
    %83 = vector.load %arg12[%c0_34, %c24] : memref<8x32xf32, #tpu.memory_space<vmem>>, vector<8x8xf32>
    tpu.vector_store %arg12[%c0_34, %c24], %82 {strides = array<i32>} : memref<8x32xf32, #tpu.memory_space<vmem>>, vector<8x8xf32>,
    %c0_35 = arith.constant 0 : index
    %c0_36 = arith.constant 0 : index
    %84 = vector.load %arg12[%c0_35, %c0_36] : memref<8x32xf32, #tpu.memory_space<vmem>>, vector<8x32xf32>
    %85 = arith.truncf %84 : vector<8x32xf32> to vector<8x32xbf16>
    %c0_37 = arith.constant 0 : index
    %c0_38 = arith.constant 0 : index
    %86 = vector.load %arg7[%c0_37, %c0_38] : memref<32x32xbf16, #tpu.memory_space<vmem>>, vector<32x32xbf16>
    %cst_39 = arith.constant dense<0.000000e+00> : vector<8x32xf32>
    %87 = tpu.matmul %85, %86, %cst_39 {dimension_numbers = #tpu.dot_dimension_numbers<[1], [0], [0], [1], [0, 0, 1, 1], [], []>} : vector<8x32xbf16>, vector<32x32xbf16>, vector<8x32xf32> -> vector<8x32xf32>
    %c0_40 = arith.constant 0 : index
    %c0_41 = arith.constant 0 : index
    %88 = vector.load %arg8[%c0_40, %c0_41] : memref<1x32xf32, #tpu.memory_space<vmem>>, vector<1x32xf32>
    %89 = vector.broadcast %88 : vector<1x32xf32> to vector<8x32xf32>
    %90 = arith.addf %87, %89 : vector<8x32xf32>
    %91 = arith.extf %1 : vector<8x32xbf16> to vector<8x32xf32>
    %92 = arith.addf %90, %91 : vector<8x32xf32>
    %c0_42 = arith.constant 0 : index
    %c0_43 = arith.constant 0 : index
    %93 = vector.load %arg9[%c0_42, %c0_43] : memref<1x32xf32, #tpu.memory_space<vmem>>, vector<1x32xf32>
    %c0_44 = arith.constant 0 : index
    %c0_45 = arith.constant 0 : index
    %94 = vector.load %arg10[%c0_44, %c0_45] : memref<1x32xf32, #tpu.memory_space<vmem>>, vector<1x32xf32>
    %cst_46 = arith.constant dense<0.000000e+00> : vector<8xf32>
    %95 = vector.multi_reduction <add>, %92, %cst_46 [1] : vector<8x32xf32> to vector<8xf32>
    %96 = vector.shape_cast %95 : vector<8xf32> to vector<8x1xf32>
    %cst_47 = arith.constant 3.200000e+01 : f32
    %97 = vector.broadcast %cst_47 : f32 to vector<8x1xf32>
    %98 = arith.divf %96, %97 : vector<8x1xf32>
    %99 = vector.broadcast %98 : vector<8x1xf32> to vector<8x32xf32>
    %100 = arith.subf %92, %99 : vector<8x32xf32>
    %101 = arith.mulf %100, %100 : vector<8x32xf32>
    %cst_48 = arith.constant dense<0.000000e+00> : vector<8xf32>
    %102 = vector.multi_reduction <add>, %101, %cst_48 [1] : vector<8x32xf32> to vector<8xf32>
    %103 = vector.shape_cast %102 : vector<8xf32> to vector<8x1xf32>
    %cst_49 = arith.constant 3.200000e+01 : f32
    %104 = vector.broadcast %cst_49 : f32 to vector<8x1xf32>
    %105 = arith.divf %103, %104 : vector<8x1xf32>
    %106 = vector.broadcast %98 : vector<8x1xf32> to vector<8x32xf32>
    %107 = arith.subf %92, %106 : vector<8x32xf32>
    %cst_50 = arith.constant 9.99999974E-6 : f32
    %108 = vector.broadcast %cst_50 : f32 to vector<8x1xf32>
    %109 = arith.addf %105, %108 : vector<8x1xf32>
    %110 = math.rsqrt %109 : vector<8x1xf32>
    %111 = vector.broadcast %110 : vector<8x1xf32> to vector<8x32xf32>
    %112 = arith.mulf %107, %111 : vector<8x32xf32>
    %113 = vector.broadcast %93 : vector<1x32xf32> to vector<8x32xf32>
    %114 = arith.mulf %112, %113 : vector<8x32xf32>
    %115 = vector.broadcast %94 : vector<1x32xf32> to vector<8x32xf32>
    %116 = arith.addf %114, %115 : vector<8x32xf32>
    %117 = arith.truncf %116 : vector<8x32xf32> to vector<8x32xbf16>
    %c0_51 = arith.constant 0 : index
    %c0_52 = arith.constant 0 : index
    %c0_53 = arith.constant 0 : index
    %118 = vector.load %arg11[%c0_51, %c0_52, %c0_53] : memref<1x8x32xbf16, #tpu.memory_space<vmem>>, vector<1x8x32xbf16>
    %119 = vector.shape_cast %118 : vector<1x8x32xbf16> to vector<8x32xbf16>
    %120 = vector.shape_cast %117 : vector<8x32xbf16> to vector<1x8x32xbf16>
    tpu.vector_store %arg11[%c0_51, %c0_52, %c0_53], %120 {strides = array<i32>} : memref<1x8x32xbf16, #tpu.memory_space<vmem>>, vector<1x8x32xbf16>,
    return
  }
  func.func @transform_0(%arg0: i32) -> (i32, i32, i32) {
    %c0_i32 = arith.constant 0 : i32
    %c0_i32_0 = arith.constant 0 : i32
    %c0_i32_1 = arith.constant 0 : i32
    return %arg0, %c0_i32, %c0_i32_0 : i32, i32, i32
  }
  func.func @transform_1(%arg0: i32) -> (i32, i32, i32) {
    %c0_i32 = arith.constant 0 : i32
    %c0_i32_0 = arith.constant 0 : i32
    %c0_i32_1 = arith.constant 0 : i32
    return %arg0, %c0_i32, %c0_i32_0 : i32, i32, i32
  }
  func.func @transform_2(%arg0: i32) -> (i32, i32) {
    %c0_i32 = arith.constant 0 : i32
    %c0_i32_0 = arith.constant 0 : i32
    %c0_i32_1 = arith.constant 0 : i32
    return %c0_i32, %c0_i32_0 : i32, i32
  }
  func.func @transform_3(%arg0: i32) -> (i32, i32) {
    %c0_i32 = arith.constant 0 : i32
    %c0_i32_0 = arith.constant 0 : i32
    %c0_i32_1 = arith.constant 0 : i32
    return %c0_i32, %c0_i32_0 : i32, i32
  }
  func.func @transform_4(%arg0: i32) -> (i32, i32) {
    %c0_i32 = arith.constant 0 : i32
    %c0_i32_0 = arith.constant 0 : i32
    %c0_i32_1 = arith.constant 0 : i32
    return %c0_i32, %c0_i32_0 : i32, i32
  }
  func.func @transform_5(%arg0: i32) -> (i32, i32) {
    %c0_i32 = arith.constant 0 : i32
    %c0_i32_0 = arith.constant 0 : i32
    %c0_i32_1 = arith.constant 0 : i32
    return %c0_i32, %c0_i32_0 : i32, i32
  }
  func.func @transform_6(%arg0: i32) -> (i32, i32) {
    %c0_i32 = arith.constant 0 : i32
    %c0_i32_0 = arith.constant 0 : i32
    %c0_i32_1 = arith.constant 0 : i32
    return %c0_i32, %c0_i32_0 : i32, i32
  }
  func.func @transform_7(%arg0: i32) -> (i32, i32) {
    %c0_i32 = arith.constant 0 : i32
    %c0_i32_0 = arith.constant 0 : i32
    %c0_i32_1 = arith.constant 0 : i32
    return %c0_i32, %c0_i32_0 : i32, i32
  }
  func.func @transform_8(%arg0: i32) -> (i32, i32) {
    %c0_i32 = arith.constant 0 : i32
    %c0_i32_0 = arith.constant 0 : i32
    %c0_i32_1 = arith.constant 0 : i32
    return %c0_i32, %c0_i32_0 : i32, i32
  }
  func.func @transform_9(%arg0: i32) -> (i32, i32) {
    %c0_i32 = arith.constant 0 : i32
    %c0_i32_0 = arith.constant 0 : i32
    %c0_i32_1 = arith.constant 0 : i32
    return %c0_i32, %c0_i32_0 : i32, i32
  }
  func.func @transform_10(%arg0: i32) -> (i32, i32, i32) {
    %c0_i32 = arith.constant 0 : i32
    %c0_i32_0 = arith.constant 0 : i32
    %c0_i32_1 = arith.constant 0 : i32
    return %arg0, %c0_i32, %c0_i32_0 : i32, i32, i32
  }
}

module attributes {stable_mosaic.version = 11 : i64} {
  func.func @_layernorm_kernel(%arg0: i32, %arg1: memref<16x32xbf16, #tpu.memory_space<vmem>>, %arg2: memref<1x32xf32, #tpu.memory_space<vmem>>, %arg3: memref<1x32xf32, #tpu.memory_space<vmem>>, %arg4: memref<16x32xbf16, #tpu.memory_space<vmem>>) attributes {dimension_semantics = [#tpu.dimension_semantics<parallel>], iteration_bounds = array<i64: 1>, scalar_prefetch = 0 : i64, scratch_operands = 0 : i64, tpu.core_type = #tpu.core_type<tc>, window_params = [{transform_indices = @transform_0, window_bounds = array<i64: 16, 32>}, {pipeline_mode = #tpu.pipeline_mode<synchronous>, transform_indices = @transform_1, window_bounds = array<i64: 1, 32>}, {pipeline_mode = #tpu.pipeline_mode<synchronous>, transform_indices = @transform_2, window_bounds = array<i64: 1, 32>}, {transform_indices = @transform_3, window_bounds = array<i64: 16, 32>}]} {
    %c0 = arith.constant 0 : index
    %c0_0 = arith.constant 0 : index
    %0 = vector.load %arg1[%c0, %c0_0] : memref<16x32xbf16, #tpu.memory_space<vmem>>, vector<16x32xbf16>
    %1 = arith.extf %0 : vector<16x32xbf16> to vector<16x32xf32>
    %c0_1 = arith.constant 0 : index
    %c0_2 = arith.constant 0 : index
    %2 = vector.load %arg2[%c0_1, %c0_2] : memref<1x32xf32, #tpu.memory_space<vmem>>, vector<1x32xf32>
    %c0_3 = arith.constant 0 : index
    %c0_4 = arith.constant 0 : index
    %3 = vector.load %arg3[%c0_3, %c0_4] : memref<1x32xf32, #tpu.memory_space<vmem>>, vector<1x32xf32>
    %cst = arith.constant dense<0.000000e+00> : vector<16xf32>
    %4 = vector.multi_reduction <add>, %1, %cst [1] : vector<16x32xf32> to vector<16xf32>
    %5 = vector.shape_cast %4 : vector<16xf32> to vector<16x1xf32>
    %cst_5 = arith.constant 3.200000e+01 : f32
    %6 = vector.broadcast %cst_5 : f32 to vector<16x1xf32>
    %7 = arith.divf %5, %6 : vector<16x1xf32>
    %8 = vector.broadcast %7 : vector<16x1xf32> to vector<16x32xf32>
    %9 = arith.subf %1, %8 : vector<16x32xf32>
    %10 = arith.mulf %9, %9 : vector<16x32xf32>
    %cst_6 = arith.constant dense<0.000000e+00> : vector<16xf32>
    %11 = vector.multi_reduction <add>, %10, %cst_6 [1] : vector<16x32xf32> to vector<16xf32>
    %12 = vector.shape_cast %11 : vector<16xf32> to vector<16x1xf32>
    %cst_7 = arith.constant 3.200000e+01 : f32
    %13 = vector.broadcast %cst_7 : f32 to vector<16x1xf32>
    %14 = arith.divf %12, %13 : vector<16x1xf32>
    %15 = vector.broadcast %7 : vector<16x1xf32> to vector<16x32xf32>
    %16 = arith.subf %1, %15 : vector<16x32xf32>
    %cst_8 = arith.constant 9.99999974E-6 : f32
    %17 = vector.broadcast %cst_8 : f32 to vector<16x1xf32>
    %18 = arith.addf %14, %17 : vector<16x1xf32>
    %19 = math.rsqrt %18 : vector<16x1xf32>
    %20 = vector.broadcast %19 : vector<16x1xf32> to vector<16x32xf32>
    %21 = arith.mulf %16, %20 : vector<16x32xf32>
    %22 = vector.broadcast %2 : vector<1x32xf32> to vector<16x32xf32>
    %23 = arith.mulf %21, %22 : vector<16x32xf32>
    %24 = vector.broadcast %3 : vector<1x32xf32> to vector<16x32xf32>
    %25 = arith.addf %23, %24 : vector<16x32xf32>
    %26 = arith.truncf %25 : vector<16x32xf32> to vector<16x32xbf16>
    %c0_9 = arith.constant 0 : index
    %c0_10 = arith.constant 0 : index
    %27 = vector.load %arg4[%c0_9, %c0_10] : memref<16x32xbf16, #tpu.memory_space<vmem>>, vector<16x32xbf16>
    tpu.vector_store %arg4[%c0_9, %c0_10], %26 {strides = array<i32>} : memref<16x32xbf16, #tpu.memory_space<vmem>>, vector<16x32xbf16>,
    return
  }
  func.func @transform_0(%arg0: i32) -> (i32, i32) {
    %c0_i32 = arith.constant 0 : i32
    %c0_i32_0 = arith.constant 0 : i32
    return %arg0, %c0_i32 : i32, i32
  }
  func.func @transform_1(%arg0: i32) -> (i32, i32) {
    %c0_i32 = arith.constant 0 : i32
    %c0_i32_0 = arith.constant 0 : i32
    %c0_i32_1 = arith.constant 0 : i32
    return %c0_i32, %c0_i32_0 : i32, i32
  }
  func.func @transform_2(%arg0: i32) -> (i32, i32) {
    %c0_i32 = arith.constant 0 : i32
    %c0_i32_0 = arith.constant 0 : i32
    %c0_i32_1 = arith.constant 0 : i32
    return %c0_i32, %c0_i32_0 : i32, i32
  }
  func.func @transform_3(%arg0: i32) -> (i32, i32) {
    %c0_i32 = arith.constant 0 : i32
    %c0_i32_0 = arith.constant 0 : i32
    return %arg0, %c0_i32 : i32, i32
  }
}

module attributes {stable_mosaic.version = 11 : i64} {
  func.func @_mlp_head_kernel(%arg0: i32, %arg1: memref<16x32xbf16, #tpu.memory_space<vmem>>, %arg2: memref<32x32xbf16, #tpu.memory_space<vmem>>, %arg3: memref<1x32xf32, #tpu.memory_space<vmem>>, %arg4: memref<32x32xbf16, #tpu.memory_space<vmem>>, %arg5: memref<1x32xf32, #tpu.memory_space<vmem>>, %arg6: memref<32x4xbf16, #tpu.memory_space<vmem>>, %arg7: memref<1x4xf32, #tpu.memory_space<vmem>>, %arg8: memref<16x4xf32, #tpu.memory_space<vmem>>) attributes {dimension_semantics = [#tpu.dimension_semantics<parallel>], iteration_bounds = array<i64: 1>, scalar_prefetch = 0 : i64, scratch_operands = 0 : i64, tpu.core_type = #tpu.core_type<tc>, window_params = [{transform_indices = @transform_0, window_bounds = array<i64: 16, 32>}, {pipeline_mode = #tpu.pipeline_mode<synchronous>, transform_indices = @transform_1, window_bounds = array<i64: 32, 32>}, {pipeline_mode = #tpu.pipeline_mode<synchronous>, transform_indices = @transform_2, window_bounds = array<i64: 1, 32>}, {pipeline_mode = #tpu.pipeline_mode<synchronous>, transform_indices = @transform_3, window_bounds = array<i64: 32, 32>}, {pipeline_mode = #tpu.pipeline_mode<synchronous>, transform_indices = @transform_4, window_bounds = array<i64: 1, 32>}, {pipeline_mode = #tpu.pipeline_mode<synchronous>, transform_indices = @transform_5, window_bounds = array<i64: 32, 4>}, {pipeline_mode = #tpu.pipeline_mode<synchronous>, transform_indices = @transform_6, window_bounds = array<i64: 1, 4>}, {transform_indices = @transform_7, window_bounds = array<i64: 16, 4>}]} {
    %c0 = arith.constant 0 : index
    %c0_0 = arith.constant 0 : index
    %0 = vector.load %arg1[%c0, %c0_0] : memref<16x32xbf16, #tpu.memory_space<vmem>>, vector<16x32xbf16>
    %c0_1 = arith.constant 0 : index
    %c0_2 = arith.constant 0 : index
    %1 = vector.load %arg2[%c0_1, %c0_2] : memref<32x32xbf16, #tpu.memory_space<vmem>>, vector<32x32xbf16>
    %cst = arith.constant dense<0.000000e+00> : vector<16x32xf32>
    %2 = tpu.matmul %0, %1, %cst {dimension_numbers = #tpu.dot_dimension_numbers<[1], [0], [0], [1], [0, 0, 1, 1], [], []>} : vector<16x32xbf16>, vector<32x32xbf16>, vector<16x32xf32> -> vector<16x32xf32>
    %c0_3 = arith.constant 0 : index
    %c0_4 = arith.constant 0 : index
    %3 = vector.load %arg3[%c0_3, %c0_4] : memref<1x32xf32, #tpu.memory_space<vmem>>, vector<1x32xf32>
    %4 = vector.broadcast %3 : vector<1x32xf32> to vector<16x32xf32>
    %5 = arith.addf %2, %4 : vector<16x32xf32>
    %cst_5 = arith.constant 0.000000e+00 : f32
    %6 = vector.broadcast %cst_5 : f32 to vector<16x32xf32>
    %7 = arith.maximumf %5, %6 : vector<16x32xf32>
    %8 = arith.truncf %7 : vector<16x32xf32> to vector<16x32xbf16>
    %c0_6 = arith.constant 0 : index
    %c0_7 = arith.constant 0 : index
    %9 = vector.load %arg4[%c0_6, %c0_7] : memref<32x32xbf16, #tpu.memory_space<vmem>>, vector<32x32xbf16>
    %cst_8 = arith.constant dense<0.000000e+00> : vector<16x32xf32>
    %10 = tpu.matmul %8, %9, %cst_8 {dimension_numbers = #tpu.dot_dimension_numbers<[1], [0], [0], [1], [0, 0, 1, 1], [], []>} : vector<16x32xbf16>, vector<32x32xbf16>, vector<16x32xf32> -> vector<16x32xf32>
    %c0_9 = arith.constant 0 : index
    %c0_10 = arith.constant 0 : index
    %11 = vector.load %arg5[%c0_9, %c0_10] : memref<1x32xf32, #tpu.memory_space<vmem>>, vector<1x32xf32>
    %12 = vector.broadcast %11 : vector<1x32xf32> to vector<16x32xf32>
    %13 = arith.addf %10, %12 : vector<16x32xf32>
    %cst_11 = arith.constant 0.000000e+00 : f32
    %14 = vector.broadcast %cst_11 : f32 to vector<16x32xf32>
    %15 = arith.maximumf %13, %14 : vector<16x32xf32>
    %16 = arith.truncf %15 : vector<16x32xf32> to vector<16x32xbf16>
    %c0_12 = arith.constant 0 : index
    %c0_13 = arith.constant 0 : index
    %17 = vector.load %arg6[%c0_12, %c0_13] : memref<32x4xbf16, #tpu.memory_space<vmem>>, vector<32x4xbf16>
    %cst_14 = arith.constant dense<0.000000e+00> : vector<16x4xf32>
    %18 = tpu.matmul %16, %17, %cst_14 {dimension_numbers = #tpu.dot_dimension_numbers<[1], [0], [0], [1], [0, 0, 1, 1], [], []>} : vector<16x32xbf16>, vector<32x4xbf16>, vector<16x4xf32> -> vector<16x4xf32>
    %c0_15 = arith.constant 0 : index
    %c0_16 = arith.constant 0 : index
    %19 = vector.load %arg7[%c0_15, %c0_16] : memref<1x4xf32, #tpu.memory_space<vmem>>, vector<1x4xf32>
    %20 = vector.broadcast %19 : vector<1x4xf32> to vector<16x4xf32>
    %21 = arith.addf %18, %20 : vector<16x4xf32>
    %c0_17 = arith.constant 0 : index
    %c0_18 = arith.constant 0 : index
    %22 = vector.load %arg8[%c0_17, %c0_18] : memref<16x4xf32, #tpu.memory_space<vmem>>, vector<16x4xf32>
    tpu.vector_store %arg8[%c0_17, %c0_18], %21 {strides = array<i32>} : memref<16x4xf32, #tpu.memory_space<vmem>>, vector<16x4xf32>,
    return
  }
  func.func @transform_0(%arg0: i32) -> (i32, i32) {
    %c0_i32 = arith.constant 0 : i32
    %c0_i32_0 = arith.constant 0 : i32
    return %arg0, %c0_i32 : i32, i32
  }
  func.func @transform_1(%arg0: i32) -> (i32, i32) {
    %c0_i32 = arith.constant 0 : i32
    %c0_i32_0 = arith.constant 0 : i32
    %c0_i32_1 = arith.constant 0 : i32
    return %c0_i32, %c0_i32_0 : i32, i32
  }
  func.func @transform_2(%arg0: i32) -> (i32, i32) {
    %c0_i32 = arith.constant 0 : i32
    %c0_i32_0 = arith.constant 0 : i32
    %c0_i32_1 = arith.constant 0 : i32
    return %c0_i32, %c0_i32_0 : i32, i32
  }
  func.func @transform_3(%arg0: i32) -> (i32, i32) {
    %c0_i32 = arith.constant 0 : i32
    %c0_i32_0 = arith.constant 0 : i32
    %c0_i32_1 = arith.constant 0 : i32
    return %c0_i32, %c0_i32_0 : i32, i32
  }
  func.func @transform_4(%arg0: i32) -> (i32, i32) {
    %c0_i32 = arith.constant 0 : i32
    %c0_i32_0 = arith.constant 0 : i32
    %c0_i32_1 = arith.constant 0 : i32
    return %c0_i32, %c0_i32_0 : i32, i32
  }
  func.func @transform_5(%arg0: i32) -> (i32, i32) {
    %c0_i32 = arith.constant 0 : i32
    %c0_i32_0 = arith.constant 0 : i32
    %c0_i32_1 = arith.constant 0 : i32
    return %c0_i32, %c0_i32_0 : i32, i32
  }
  func.func @transform_6(%arg0: i32) -> (i32, i32) {
    %c0_i32 = arith.constant 0 : i32
    %c0_i32_0 = arith.constant 0 : i32
    %c0_i32_1 = arith.constant 0 : i32
    return %c0_i32, %c0_i32_0 : i32, i32
  }
  func.func @transform_7(%arg0: i32) -> (i32, i32) {
    %c0_i32 = arith.constant 0 : i32
    %c0_i32_0 = arith.constant 0 : i32
    return %arg0, %c0_i32 : i32, i32
  }
}

</mosaic_0001>

<llo_original>
// kernel: event_painter_forward.17
$region0: #{event_painter_forward.17}
  #allocation0 [shape = 'u32[]', space=smem, size = 0x4, offset = 0x4, fixed_abs, tag = 'smem constant byte address 0x4 - core index']
  #allocation1 [shape = 'u32[144,128]{1,0:T(1,128)}', space=vmem, size = 0x12000, scoped, tag = 'internal scratch']
  %s0 = inlined_call_operand.vmem [shape: bf16[32,32], index: 0, kind: input, shape index: {}]
  %s1 = inlined_call_operand.vmem [shape: f32[1,32], index: 1, kind: input, shape index: {}]
  %s2 = inlined_call_operand.vmem [shape: f32[1,32], index: 2, kind: input, shape index: {}]
  %s3 = inlined_call_operand.vmem [shape: bf16[32,32], index: 3, kind: output, shape index: {}]
  %s4 = sld [smem:[#allocation0]]
  $region22: #{event_painter_forward.17} parent=0
    _
  %s6 = ssub.s32 1, %s4
  %s7 = scalar_select 0, %s6, %s4
  // Predicated region
  $region2: #{event_painter_forward.17} parent=0 // pred_check
    _
  $region3: #{event_painter_forward.17} parent=0 // pred_check_branch
    %9 = sbr.rel (0) target = $region5
  $region4: #{event_painter_forward.17} parent=0 // pred_region
    _
  $region5: #{event_painter_forward.17} parent=0 // pred_fallthru
    _
  // Predicated region
  $region6: #{event_painter_forward.17} parent=0 // pred_check
    _
  $region7: #{event_painter_forward.17} parent=0 // pred_check_branch
    %11 = sbr.rel (0) target = $region9
  $region8: #{event_painter_forward.17} parent=0 // pred_region
    _
  $region9: #{event_painter_forward.17} parent=0 // pred_fallthru
    _
  // Predicated region
  $region10: #{event_painter_forward.17} parent=0 // pred_check
    _
  $region11: #{event_painter_forward.17} parent=0 // pred_check_branch
    %13 = sbr.rel (0) target = $region13
  $region12: #{event_painter_forward.17} parent=0 // pred_region
    _
  $region13: #{event_painter_forward.17} parent=0 // pred_fallthru
    _
  %v14 = vld [vmem:[%s0] sm:$0xf]
  %v15 = vld [vmem:[%s0 + $0x4] sm:$0xf]
  %v16 = vld [vmem:[%s0 + $0x8] sm:$0xf]
  %v17 = vld [vmem:[%s0 + $0xc] sm:$0xf]
  %v18 = vunpack.c.l.bf16 %v14
  %v19 = vunpack.c.l.bf16 %v15
  %v20 = vunpack.c.l.bf16 %v16
  %v21 = vunpack.c.l.bf16 %v17
  %v22 = vld [vmem:[%s1] sm:$0x1]
  %v23 = vld [vmem:[%s2] sm:$0x1]
  %vm24 = vcmask 261120
  %v25 = vsel %vm24, %v18, 0.0
  %26 = vadd.xlane.f32.xlu0 %v25
  %v27 = vpop.xlane.xlu0 %26
  %v28 = vsel %vm24, %v19, 0.0
  %29 = vadd.xlane.f32.xlu0 %v28
  %v30 = vpop.xlane.xlu0 %29
  %v31 = vsel %vm24, %v20, 0.0
  %32 = vadd.xlane.f32.xlu0 %v31
  %v33 = vpop.xlane.xlu0 %32
  %v34 = vsel %vm24, %v21, 0.0
  %35 = vadd.xlane.f32.xlu0 %v34
  %v36 = vpop.xlane.xlu0 %35
  %v37 = vrcp.pop 32.0
  %v38 = vmul.f32 %v27, %v37
  %v39 = vmul.f32 %v30, %v37
  %v40 = vmul.f32 %v33, %v37
  %v41 = vmul.f32 %v36, %v37
  %v42 = vsub.f32 %v18, %v38
  %v43 = vsub.f32 %v19, %v39
  %v44 = vsub.f32 %v20, %v40
  %v45 = vsub.f32 %v21, %v41
  %v46 = vmul.f32 %v42, %v42
  %v47 = vmul.f32 %v43, %v43
  %v48 = vmul.f32 %v44, %v44
  %v49 = vmul.f32 %v45, %v45
  %v50 = vsel %vm24, %v46, 0.0
  %51 = vadd.xlane.f32.xlu0 %v50
  %v52 = vpop.xlane.xlu0 %51
  %v53 = vsel %vm24, %v47, 0.0
  %54 = vadd.xlane.f32.xlu0 %v53
  %v55 = vpop.xlane.xlu0 %54
  %v56 = vsel %vm24, %v48, 0.0
  %57 = vadd.xlane.f32.xlu0 %v56
  %v58 = vpop.xlane.xlu0 %57
  %v59 = vsel %vm24, %v49, 0.0
  %60 = vadd.xlane.f32.xlu0 %v59
  %v61 = vpop.xlane.xlu0 %60
  %v62 = vmul.f32 %v52, %v37
  %v63 = vmul.f32 %v55, %v37
  %v64 = vmul.f32 %v58, %v37
  %v65 = vmul.f32 %v61, %v37
  %v66 = vadd.f32 %v62, 1e-05
  %v67 = vadd.f32 %v63, 1e-05
  %v68 = vadd.f32 %v64, 1e-05
  %v69 = vadd.f32 %v65, 1e-05
  %v70 = vrsqrt.pop %v66
  %v71 = vrsqrt.pop %v67
  %v72 = vrsqrt.pop %v68
  %v73 = vrsqrt.pop %v69
  %v74 = vmul.f32 %v42, %v70
  %v75 = vmul.f32 %v43, %v71
  %v76 = vmul.f32 %v44, %v72
  %v77 = vmul.f32 %v45, %v73
  %v79 = vlaneseq
  %v80 = vshrl.u32 %v79, 7
  %v81 = vsub.s32 0, %v80
  %v82 = vrot.slane %v22, %v81
  %v84 = vmul.f32 %v74, %v82
  %v85 = vmul.f32 %v75, %v82
  %v86 = vmul.f32 %v76, %v82
  %v87 = vmul.f32 %v77, %v82
  %v89 = vlaneseq
  %v90 = vshrl.u32 %v89, 7
  %v91 = vsub.s32 0, %v90
  %v92 = vrot.slane %v23, %v91
  %v94 = vadd.f32 %v84, %v92
  %v95 = vadd.f32 %v85, %v92
  %v96 = vadd.f32 %v86, %v92
  %v97 = vadd.f32 %v87, %v92
  %v98 = vpack.c.bf16 %v95, %v94
  %v99 = vpack.c.bf16 %v97, %v96
  %v102 = vunpack.c.l.b16 %v98
  %v103 = vunpack.c.h.b16 %v98
  %v104 = vunpack.c.l.b16 %v99
  %v105 = vunpack.c.h.b16 %v99
  %v106 = vpack.c.b16 %v102, %v102
  %v107 = vpack.c.b16 %v103, %v103
  %v108 = vpack.c.b16 %v104, %v104
  %v109 = vpack.c.b16 %v105, %v105
  %vm114 = vcmask 257024
  %115 = vst.msk [vmem:[%s3] sm:$0xf] %vm114, %v106
  %116 = vst.msk [vmem:[%s3 + $0x4] sm:$0xf] %vm114, %v107
  %117 = vst.msk [vmem:[%s3 + $0x8] sm:$0xf] %vm114, %v108
  %118 = vst.msk [vmem:[%s3 + $0xc] sm:$0xf] %vm114, %v109
  // Predicated region
  $region14: #{event_painter_forward.17} parent=0 // pred_check
    _
  $region15: #{event_painter_forward.17} parent=0 // pred_check_branch
    %120 = sbr.rel (0) target = $region17
  $region16: #{event_painter_forward.17} parent=0 // pred_region
    _
  $region17: #{event_painter_forward.17} parent=0 // pred_fallthru
    _
  // Predicated region
  $region18: #{event_painter_forward.17} parent=0 // pred_check
    _
  $region19: #{event_painter_forward.17} parent=0 // pred_check_branch
    %122 = sbr.rel (0) target = $region21
  $region20: #{event_painter_forward.17} parent=0 // pred_region
    _
  $region21: #{event_painter_forward.17} parent=0 // pred_fallthru
    _

// kernel: event_painter_forward.14
$region0: #{event_painter_forward.14}
  #allocation0 [shape = 'u32[]', space=smem, size = 0x4, offset = 0x4, fixed_abs, tag = 'smem constant byte address 0x4 - core index']
  #allocation1 [shape = 'u32[144,128]{1,0:T(1,128)}', space=vmem, size = 0x12000, scoped, tag = 'internal scratch']
  %s0 = inlined_call_operand.vmem [shape: bf16[32,32], index: 0, kind: input, shape index: {}]
  %s1 = inlined_call_operand.vmem [shape: bf16[32,64], index: 1, kind: input, shape index: {}]
  %s2 = inlined_call_operand.vmem [shape: f32[1,64], index: 2, kind: input, shape index: {}]
  %s3 = inlined_call_operand.vmem [shape: bf16[64,32], index: 3, kind: input, shape index: {}]
  %s4 = inlined_call_operand.vmem [shape: f32[1,32], index: 4, kind: input, shape index: {}]
  %s5 = inlined_call_operand.vmem [shape: f32[1,32], index: 5, kind: input, shape index: {}]
  %s6 = inlined_call_operand.vmem [shape: f32[1,32], index: 6, kind: input, shape index: {}]
  %s7 = inlined_call_operand.vmem [shape: bf16[32,32], index: 7, kind: output, shape index: {}]
  %s8 = sld [smem:[#allocation0]]
  $region38: #{event_painter_forward.14} parent=0
    _
  %s10 = ssub.s32 1, %s8
  %s11 = scalar_select 0, %s10, %s8
  // Predicated region
  $region2: #{event_painter_forward.14} parent=0 // pred_check
    _
  $region3: #{event_painter_forward.14} parent=0 // pred_check_branch
    %13 = sbr.rel (0) target = $region5
  $region4: #{event_painter_forward.14} parent=0 // pred_region
    _
  $region5: #{event_painter_forward.14} parent=0 // pred_fallthru
    _
  // Predicated region
  $region6: #{event_painter_forward.14} parent=0 // pred_check
    _
  $region7: #{event_painter_forward.14} parent=0 // pred_check_branch
    %15 = sbr.rel (0) target = $region9
  $region8: #{event_painter_forward.14} parent=0 // pred_region
    _
  $region9: #{event_painter_forward.14} parent=0 // pred_fallthru
    _
  // Predicated region
  $region10: #{event_painter_forward.14} parent=0 // pred_check
    _
  $region11: #{event_painter_forward.14} parent=0 // pred_check_branch
    %17 = sbr.rel (0) target = $region13
  $region12: #{event_painter_forward.14} parent=0 // pred_region
    _
  $region13: #{event_painter_forward.14} parent=0 // pred_fallthru
    _
  // Predicated region
  $region14: #{event_painter_forward.14} parent=0 // pred_check
    _
  $region15: #{event_painter_forward.14} parent=0 // pred_check_branch
    %19 = sbr.rel (0) target = $region17
  $region16: #{event_painter_forward.14} parent=0 // pred_region
    _
  $region17: #{event_painter_forward.14} parent=0 // pred_fallthru
    _
  // Predicated region
  $region18: #{event_painter_forward.14} parent=0 // pred_check
    _
  $region19: #{event_painter_forward.14} parent=0 // pred_check_branch
    %21 = sbr.rel (0) target = $region21
  $region20: #{event_painter_forward.14} parent=0 // pred_region
    _
  $region21: #{event_painter_forward.14} parent=0 // pred_fallthru
    _
  // Predicated region
  $region22: #{event_painter_forward.14} parent=0 // pred_check
    _
  $region23: #{event_painter_forward.14} parent=0 // pred_check_branch
    %23 = sbr.rel (0) target = $region25
  $region24: #{event_painter_forward.14} parent=0 // pred_region
    _
  $region25: #{event_painter_forward.14} parent=0 // pred_fallthru
    _
  // Predicated region
  $region26: #{event_painter_forward.14} parent=0 // pred_check
    _
  $region27: #{event_painter_forward.14} parent=0 // pred_check_branch
    %25 = sbr.rel (0) target = $region29
  $region28: #{event_painter_forward.14} parent=0 // pred_region
    _
  $region29: #{event_painter_forward.14} parent=0 // pred_fallthru
    _
  %v27 = vld [vmem:[%s0] sm:$0xf]
  %v28 = vld [vmem:[%s0 + $0x4] sm:$0xf]
  %v29 = vld [vmem:[%s0 + $0x8] sm:$0xf]
  %v30 = vld [vmem:[%s0 + $0xc] sm:$0xf]
  %v31 = vld [vmem:[%s1] sm:$0xf]
  %v32 = vld [vmem:[%s1 + $0x4] sm:$0xf]
  %v33 = vld [vmem:[%s1 + $0x8] sm:$0xf]
  %v34 = vld [vmem:[%s1 + $0xc] sm:$0xf]
  %v35 = vld [vmem:[%s2] sm:$0x1]
  %v37 = vlaneseq
  %v38 = vshrl.u32 %v37, 7
  %v39 = vsub.s32 0, %v38
  %v40 = vrot.slane %v35, %v39
  %v46 = vunpack.c.l.b16 %v27
  %v47 = vunpack.c.l.b16 %v28
  %v48 = vunpack.c.l.b16 %v29
  %v49 = vunpack.c.l.b16 %v30
  %v50 = vpack.c.b16 %v47, %v46
  %v51 = vpack.c.b16 %v49, %v48
  %v56 = vunpack.c.l.b16 %v31
  %v57 = vunpack.c.l.b16 %v32
  %v58 = vunpack.c.l.b16 %v33
  %v59 = vunpack.c.l.b16 %v34
  %v60 = vpack.c.b16 %v57, %v56
  %v61 = vpack.c.b16 %v59, %v58
  %vm64 = vcmask 261120
  %v66 = vsel %vm64, %v50, 0
  %v69 = vsel %vm64, %v51, 0
  %71 = vmatprep.subr.bf16.mxu0 0
  %72 = vmatpush1.bf16.msra.mxu0 0
  %73 = vmatprep.subr.bf16.mxu0 0
  %74 = vmatpush1.bf16.msra.mxu0 0
  %75 = vmatprep.subr.bf16.mxu0 0
  %76 = vmatpush1.bf16.msra.mxu0 0
  %77 = vmatprep.subr.bf16.mxu0 0
  %78 = vmatpush1.bf16.msra.mxu0 0
  %79 = vmatprep.subr.bf16.mxu0 0
  %80 = vmatpush1.bf16.msra.mxu0 0
  %81 = vmatprep.subr.bf16.mxu0 0
  %82 = vmatpush1.bf16.msra.mxu0 0
  %83 = vmatprep.subr.bf16.mxu0 0
  %84 = vmatpush1.bf16.msra.mxu0 %v61
  %85 = vmatprep.subr.bf16.mxu0 0
  %86 = vmatpush1.bf16.msra.mxu0 %v60
  %87 = vmatprep.subr.bf16.mxu0 0
  %88 = vmatpush2.bf16.msra.mxu0 0
  %89 = vmatprep.subr.bf16.mxu0 0
  %90 = vmatpush2.bf16.msra.mxu0 0
  %91 = vmatprep.subr.bf16.mxu0 0
  %92 = vmatpush2.bf16.msra.mxu0 0
  %93 = vmatprep.subr.bf16.mxu0 0
  %94 = vmatpush2.bf16.msra.mxu0 0
  %95 = vmatprep.subr.bf16.mxu0 0
  %96 = vmatpush2.bf16.msra.mxu0 0
  %97 = vmatprep.subr.bf16.mxu0 0
  %98 = vmatpush2.bf16.msra.mxu0 0
  %99 = vmatprep.subr.bf16.mxu0 0
  %100 = vmatpush2.bf16.msra.mxu0 0
  %101 = vmatprep.subr.bf16.mxu0 0
  %102 = vmatpush2.bf16.msra.mxu0 0
  %103 = vmatprep.mubr.bf16.mxu0 0
  %104 = vmatmul.mubr.bf16.gmra.mxu0 %v66
  %v105 = vpop.f32.mrf.mxu0
  %v106 = vadd.f32 %v40, %v105
  %v107 = vpop.f32.mrf.mxu0
  %v108 = vpop.f32.mrf.mxu0
  %v109 = vadd.f32 %v40, %v108
  %v110 = vpop.f32.mrf.mxu0
  %111 = vmatprep.mubr.bf16.mxu0 0
  %112 = vmatmul.mubr.bf16.gmra.mxu0 %v69
  %v113 = vpop.f32.mrf.mxu0
  %v114 = vadd.f32 %v40, %v113
  %v115 = vpop.f32.mrf.mxu0
  %v116 = vpop.f32.mrf.mxu0
  %v117 = vadd.f32 %v40, %v116
  %v118 = vpop.f32.mrf.mxu0
  %119 = vdwg.mxu0
  %v120 = vmax.f32 %v106, 0.0
  %v121 = vmax.f32 %v109, 0.0
  %v122 = vmax.f32 %v114, 0.0
  %v123 = vmax.f32 %v117, 0.0
  %v124 = vpack.c.bf16 %v121, %v120
  %v125 = vpack.c.bf16 %v123, %v122
  %v126 = vld [vmem:[%s3] sm:$0xf]
  %v127 = vld [vmem:[%s3 + $0x4] sm:$0xf]
  %v128 = vld [vmem:[%s3 + $0x8] sm:$0xf]
  %v129 = vld [vmem:[%s3 + $0xc] sm:$0xf]
  %v130 = vld [vmem:[%s3 + $0x10] sm:$0xf]
  %v131 = vld [vmem:[%s3 + $0x14] sm:$0xf]
  %v132 = vld [vmem:[%s3 + $0x18] sm:$0xf]
  %v133 = vld [vmem:[%s3 + $0x1c] sm:$0xf]
  %v134 = vld [vmem:[%s4] sm:$0x1]
  %v136 = vlaneseq
  %v137 = vshrl.u32 %v136, 7
  %v138 = vsub.s32 0, %v137
  %v139 = vrot.slane %v134, %v138
  %v149 = vunpack.c.l.b16 %v126
  %v150 = vunpack.c.l.b16 %v127
  %v151 = vunpack.c.l.b16 %v128
  %v152 = vunpack.c.l.b16 %v129
  %v153 = vunpack.c.l.b16 %v130
  %v154 = vunpack.c.l.b16 %v131
  %v155 = vunpack.c.l.b16 %v132
  %v156 = vunpack.c.l.b16 %v133
  %v157 = vpack.c.b16 %v150, %v149
  %v158 = vpack.c.b16 %v152, %v151
  %v159 = vpack.c.b16 %v154, %v153
  %v160 = vpack.c.b16 %v156, %v155
  %vm165 = vcmask 523264
  %v167 = vsel %vm165, %v124, 0
  %v170 = vsel %vm165, %v125, 0
  %172 = vmatprep.subr.bf16.mxu0 0
  %173 = vmatpush1.bf16.msra.mxu0 0
  %174 = vmatprep.subr.bf16.mxu0 0
  %175 = vmatpush1.bf16.msra.mxu0 0
  %176 = vmatprep.subr.bf16.mxu0 0
  %177 = vmatpush1.bf16.msra.mxu0 0
  %178 = vmatprep.subr.bf16.mxu0 0
  %179 = vmatpush1.bf16.msra.mxu0 0
  %180 = vmatprep.subr.bf16.mxu0 0
  %181 = vmatpush1.bf16.msra.mxu0 %v160
  %182 = vmatprep.subr.bf16.mxu0 0
  %183 = vmatpush1.bf16.msra.mxu0 %v159
  %184 = vmatprep.subr.bf16.mxu0 0
  %185 = vmatpush1.bf16.msra.mxu0 %v158
  %186 = vmatprep.subr.bf16.mxu0 0
  %187 = vmatpush1.bf16.msra.mxu0 %v157
  %188 = vmatprep.subr.bf16.mxu0 0
  %189 = vmatpush2.bf16.msra.mxu0 0
  %190 = vmatprep.subr.bf16.mxu0 0
  %191 = vmatpush2.bf16.msra.mxu0 0
  %192 = vmatprep.subr.bf16.mxu0 0
  %193 = vmatpush2.bf16.msra.mxu0 0
  %194 = vmatprep.subr.bf16.mxu0 0
  %195 = vmatpush2.bf16.msra.mxu0 0
  %196 = vmatprep.subr.bf16.mxu0 0
  %197 = vmatpush2.bf16.msra.mxu0 0
  %198 = vmatprep.subr.bf16.mxu0 0
  %199 = vmatpush2.bf16.msra.mxu0 0
  %200 = vmatprep.subr.bf16.mxu0 0
  %201 = vmatpush2.bf16.msra.mxu0 0
  %202 = vmatprep.subr.bf16.mxu0 0
  %203 = vmatpush2.bf16.msra.mxu0 0
  %204 = vmatprep.mubr.bf16.mxu0 0
  %205 = vmatmul.mubr.bf16.gmra.mxu0 %v167
  %v206 = vpop.f32.mrf.mxu0
  %v207 = vadd.f32 %v139, %v206
  %v208 = vpop.f32.mrf.mxu0
  %v209 = vpop.f32.mrf.mxu0
  %v210 = vadd.f32 %v139, %v209
  %v211 = vpop.f32.mrf.mxu0
  %212 = vmatprep.mubr.bf16.mxu0 0
  %213 = vmatmul.mubr.bf16.gmra.mxu0 %v170
  %v214 = vpop.f32.mrf.mxu0
  %v215 = vadd.f32 %v139, %v214
  %v216 = vpop.f32.mrf.mxu0
  %v217 = vpop.f32.mrf.mxu0
  %v218 = vadd.f32 %v139, %v217
  %v219 = vpop.f32.mrf.mxu0
  %220 = vdwg.mxu0
  %v221 = vunpack.c.l.bf16 %v27
  %v222 = vunpack.c.l.bf16 %v28
  %v223 = vunpack.c.l.bf16 %v29
  %v224 = vunpack.c.l.bf16 %v30
  %v225 = vadd.f32 %v207, %v221
  %v226 = vadd.f32 %v210, %v222
  %v227 = vadd.f32 %v215, %v223
  %v228 = vadd.f32 %v218, %v224
  %v229 = vld [vmem:[%s5] sm:$0x1]
  %v230 = vld [vmem:[%s6] sm:$0x1]
  %v231 = vsel %vm64, %v225, 0.0
  %232 = vadd.xlane.f32.xlu0 %v231
  %v233 = vpop.xlane.xlu0 %232
  %v234 = vsel %vm64, %v226, 0.0
  %235 = vadd.xlane.f32.xlu0 %v234
  %v236 = vpop.xlane.xlu0 %235
  %v237 = vsel %vm64, %v227, 0.0
  %238 = vadd.xlane.f32.xlu0 %v237
  %v239 = vpop.xlane.xlu0 %238
  %v240 = vsel %vm64, %v228, 0.0
  %241 = vadd.xlane.f32.xlu0 %v240
  %v242 = vpop.xlane.xlu0 %241
  %v243 = vrcp.pop 32.0
  %v244 = vmul.f32 %v233, %v243
  %v245 = vmul.f32 %v236, %v243
  %v246 = vmul.f32 %v239, %v243
  %v247 = vmul.f32 %v242, %v243
  %v248 = vsub.f32 %v225, %v244
  %v249 = vsub.f32 %v226, %v245
  %v250 = vsub.f32 %v227, %v246
  %v251 = vsub.f32 %v228, %v247
  %v252 = vmul.f32 %v248, %v248
  %v253 = vmul.f32 %v249, %v249
  %v254 = vmul.f32 %v250, %v250
  %v255 = vmul.f32 %v251, %v251
  %v256 = vsel %vm64, %v252, 0.0
  %257 = vadd.xlane.f32.xlu0 %v256
  %v258 = vpop.xlane.xlu0 %257
  %v259 = vsel %vm64, %v253, 0.0
  %260 = vadd.xlane.f32.xlu0 %v259
  %v261 = vpop.xlane.xlu0 %260
  %v262 = vsel %vm64, %v254, 0.0
  %263 = vadd.xlane.f32.xlu0 %v262
  %v264 = vpop.xlane.xlu0 %263
  %v265 = vsel %vm64, %v255, 0.0
  %266 = vadd.xlane.f32.xlu0 %v265
  %v267 = vpop.xlane.xlu0 %266
  %v268 = vmul.f32 %v258, %v243
  %v269 = vmul.f32 %v261, %v243
  %v270 = vmul.f32 %v264, %v243
  %v271 = vmul.f32 %v267, %v243
  %v272 = vadd.f32 %v268, 1e-05
  %v273 = vadd.f32 %v269, 1e-05
  %v274 = vadd.f32 %v270, 1e-05
  %v275 = vadd.f32 %v271, 1e-05
  %v276 = vrsqrt.pop %v272
  %v277 = vrsqrt.pop %v273
  %v278 = vrsqrt.pop %v274
  %v279 = vrsqrt.pop %v275
  %v280 = vmul.f32 %v248, %v276
  %v281 = vmul.f32 %v249, %v277
  %v282 = vmul.f32 %v250, %v278
  %v283 = vmul.f32 %v251, %v279
  %v285 = vlaneseq
  %v286 = vshrl.u32 %v285, 7
  %v287 = vsub.s32 0, %v286
  %v288 = vrot.slane %v229, %v287
  %v290 = vmul.f32 %v280, %v288
  %v291 = vmul.f32 %v281, %v288
  %v292 = vmul.f32 %v282, %v288
  %v293 = vmul.f32 %v283, %v288
  %v295 = vlaneseq
  %v296 = vshrl.u32 %v295, 7
  %v297 = vsub.s32 0, %v296
  %v298 = vrot.slane %v230, %v297
  %v300 = vadd.f32 %v290, %v298
  %v301 = vadd.f32 %v291, %v298
  %v302 = vadd.f32 %v292, %v298
  %v303 = vadd.f32 %v293, %v298
  %v304 = vpack.c.bf16 %v301, %v300
  %v305 = vpack.c.bf16 %v303, %v302
  %v308 = vunpack.c.l.b16 %v304
  %v309 = vunpack.c.h.b16 %v304
  %v310 = vunpack.c.l.b16 %v305
  %v311 = vunpack.c.h.b16 %v305
  %v312 = vpack.c.b16 %v308, %v308
  %v313 = vpack.c.b16 %v309, %v309
  %v314 = vpack.c.b16 %v310, %v310
  %v315 = vpack.c.b16 %v311, %v311
  %vm320 = vcmask 257024
  %321 = vst.msk [vmem:[%s7] sm:$0xf] %vm320, %v312
  %322 = vst.msk [vmem:[%s7 + $0x4] sm:$0xf] %vm320, %v313
  %323 = vst.msk [vmem:[%s7 + $0x8] sm:$0xf] %vm320, %v314
  %324 = vst.msk [vmem:[%s7 + $0xc] sm:$0xf] %vm320, %v315
  // Predicated region
  $region30: #{event_painter_forward.14} parent=0 // pred_check
    _
  $region31: #{event_painter_forward.14} parent=0 // pred_check_branch
    %326 = sbr.rel (0) target = $region33
  $region32: #{event_painter_forward.14} parent=0 // pred_region
    _
  $region33: #{event_painter_forward.14} parent=0 // pred_fallthru
    _
  // Predicated region
  $region34: #{event_painter_forward.14} parent=0 // pred_check
    _
  $region35: #{event_painter_forward.14} parent=0 // pred_check_branch
    %328 = sbr.rel (0) target = $region37
  $region36: #{event_painter_forward.14} parent=0 // pred_region
    _
  $region37: #{event_painter_forward.14} parent=0 // pred_fallthru
    _

// kernel: event_painter_forward.13
$region0: #{event_painter_forward.13}
  #allocation0 [shape = 'u32[]', space=smem, size = 0x4, offset = 0x4, fixed_abs, tag = 'smem constant byte address 0x4 - core index']
  #allocation1 [shape = 'u32[144,128]{1,0:T(1,128)}', space=vmem, size = 0x12000, scoped, tag = 'internal scratch']
  #allocation2 [shape = 'f32[16,32]{1,0:T(8,128)}', space=vmem, size = 0x2000, scoped, tag = 'scratch operand']
  %s0 = inlined_call_operand.vmem [shape: bf16[2,16,32], index: 0, kind: input, shape index: {}]
  %s1 = inlined_call_operand.vmem [shape: bf16[32,96], index: 1, kind: input, shape index: {}]
  %s2 = inlined_call_operand.vmem [shape: f32[1,96], index: 2, kind: input, shape index: {}]
  %s3 = inlined_call_operand.vmem [shape: bf16[32,32], index: 3, kind: input, shape index: {}]
  %s4 = inlined_call_operand.vmem [shape: f32[1,32], index: 4, kind: input, shape index: {}]
  %s5 = inlined_call_operand.vmem [shape: f32[1,32], index: 5, kind: input, shape index: {}]
  %s6 = inlined_call_operand.vmem [shape: f32[1,32], index: 6, kind: input, shape index: {}]
  %s7 = inlined_call_operand.vmem [shape: bf16[2,16,32], index: 7, kind: output, shape index: {}]
  %s8 = sld [smem:[#allocation0]]
  $region61: #{event_painter_forward.13} parent=0
    _
  %s10 = ssub.s32 1, %s8
  %s11 = scalar_select 0, %s10, %s8
  loop: start=0, step=1, limit=4
  $region2: #{event_painter_forward.13} parent=0 // loop_pre_header
    _
  $region3: #{event_painter_forward.13} parent=0 // loop_header
    %s13 = sphi 0, %s17
    %p14 = scmp.ge.s32.totalorder %s13, 4
    %s23 = sphi 0, %s25
    %s26 = sphi 0, %s23
    %s27 = sphi 0, %s26
    %s43 = sphi 0, %s27
    %s47 = sphi 0, %s47
    %s49 = sphi 0, %s47
    %s50 = sphi 0, %s49
    %s64 = sphi 0, %s50
    %s68 = sphi 0, %s68
    %s70 = sphi 0, %s68
    %s71 = sphi 0, %s70
    %s85 = sphi 0, %s71
    %s89 = sphi 0, %s89
    %s91 = sphi 0, %s89
    %s92 = sphi 0, %s91
    %s106 = sphi 0, %s92
    %s110 = sphi 0, %s110
    %s112 = sphi 0, %s110
    %s113 = sphi 0, %s112
    %s127 = sphi 0, %s113
    %s131 = sphi 0, %s131
    %s133 = sphi 0, %s131
    %s134 = sphi 0, %s133
    %s148 = sphi 0, %s134
    %s152 = sphi 0, %s152
    %s154 = sphi 0, %s152
    %s155 = sphi 0, %s154
    %s169 = sphi 0, %s155
    %s175 = sphi 0, %s177
    %s178 = sphi 0, %s175
    %s179 = sphi 0, %s178
    %s195 = sphi 0, %s179
  $region4: #{event_painter_forward.13} parent=0 // loop_header_branch
    %16 = sbr.rel (%p14) target = $region8
  $region5: #{event_painter_forward.13} parent=0 // loop_body
    %s18 = ssub.s32 %s13, 1
    %s19 = ssub.s32 %s13, 2
    %s20 = sadd.s32 %s13, 1
    %s21 = ssub.s32 %s13, %s20
    %p22 = scmp.eq.s32.totalorder %s21, 0
    %s24 = sadd.s32 %s23, 1
    %s25 = scalar_select %p22, %s23, %s24
    %p28 = pneg %p22
    %p29 = scmp.eq.s32.totalorder %s13, 1
    %p30 = por %p28, %p29
    %p31 = scmp.ne.s32.totalorder %s23, %s26
    %p32 = scmp.eq.s32.totalorder %s13, 0
    %p33 = por %p31, %p32
    %p34 = scmp.ne.s32.totalorder %s23, %s26
    %p35 = scmp.eq.s32.totalorder %s18, 1
    %p36 = por %p34, %p35
    %p37 = scmp.ne.s32.totalorder %s26, %s27
    %p38 = scmp.eq.s32.totalorder %s18, 0
    %p39 = por %p37, %p38
    %p40 = scmp.ne.s32.totalorder %s26, %s27
    %p41 = scmp.eq.s32.totalorder %s19, 1
    %p42 = por %p40, %p41
    %p44 = scmp.ne.s32.totalorder %s27, %s43
    %p45 = scmp.eq.s32.totalorder %s19, 0
    %p46 = por %p44, %p45
    %s48 = sadd.s32 %s47, 1
    %p51 = scmp.eq.s32.totalorder %s13, 1
    %p52 = scmp.ne.s32.totalorder %s47, %s49
    %p53 = scmp.eq.s32.totalorder %s13, 0
    %p54 = por %p52, %p53
    %p55 = scmp.ne.s32.totalorder %s47, %s49
    %p56 = scmp.eq.s32.totalorder %s18, 1
    %p57 = por %p55, %p56
    %p58 = scmp.ne.s32.totalorder %s49, %s50
    %p59 = scmp.eq.s32.totalorder %s18, 0
    %p60 = por %p58, %p59
    %p61 = scmp.ne.s32.totalorder %s49, %s50
    %p62 = scmp.eq.s32.totalorder %s19, 1
    %p63 = por %p61, %p62
    %p65 = scmp.ne.s32.totalorder %s50, %s64
    %p66 = scmp.eq.s32.totalorder %s19, 0
    %p67 = por %p65, %p66
    %s69 = sadd.s32 %s68, 1
    %p72 = scmp.eq.s32.totalorder %s13, 1
    %p73 = scmp.ne.s32.totalorder %s68, %s70
    %p74 = scmp.eq.s32.totalorder %s13, 0
    %p75 = por %p73, %p74
    %p76 = scmp.ne.s32.totalorder %s68, %s70
    %p77 = scmp.eq.s32.totalorder %s18, 1
    %p78 = por %p76, %p77
    %p79 = scmp.ne.s32.totalorder %s70, %s71
    %p80 = scmp.eq.s32.totalorder %s18, 0
    %p81 = por %p79, %p80
    %p82 = scmp.ne.s32.totalorder %s70, %s71
    %p83 = scmp.eq.s32.totalorder %s19, 1
    %p84 = por %p82, %p83
    %p86 = scmp.ne.s32.totalorder %s71, %s85
    %p87 = scmp.eq.s32.totalorder %s19, 0
    %p88 = por %p86, %p87
    %s90 = sadd.s32 %s89, 1
    %p93 = scmp.eq.s32.totalorder %s13, 1
    %p94 = scmp.ne.s32.totalorder %s89, %s91
    %p95 = scmp.eq.s32.totalorder %s13, 0
    %p96 = por %p94, %p95
    %p97 = scmp.ne.s32.totalorder %s89, %s91
    %p98 = scmp.eq.s32.totalorder %s18, 1
    %p99 = por %p97, %p98
    %p100 = scmp.ne.s32.totalorder %s91, %s92
    %p101 = scmp.eq.s32.totalorder %s18, 0
    %p102 = por %p100, %p101
    %p103 = scmp.ne.s32.totalorder %s91, %s92
    %p104 = scmp.eq.s32.totalorder %s19, 1
    %p105 = por %p103, %p104
    %p107 = scmp.ne.s32.totalorder %s92, %s106
    %p108 = scmp.eq.s32.totalorder %s19, 0
    %p109 = por %p107, %p108
    %s111 = sadd.s32 %s110, 1
    %p114 = scmp.eq.s32.totalorder %s13, 1
    %p115 = scmp.ne.s32.totalorder %s110, %s112
    %p116 = scmp.eq.s32.totalorder %s13, 0
    %p117 = por %p115, %p116
    %p118 = scmp.ne.s32.totalorder %s110, %s112
    %p119 = scmp.eq.s32.totalorder %s18, 1
    %p120 = por %p118, %p119
    %p121 = scmp.ne.s32.totalorder %s112, %s113
    %p122 = scmp.eq.s32.totalorder %s18, 0
    %p123 = por %p121, %p122
    %p124 = scmp.ne.s32.totalorder %s112, %s113
    %p125 = scmp.eq.s32.totalorder %s19, 1
    %p126 = por %p124, %p125
    %p128 = scmp.ne.s32.totalorder %s113, %s127
    %p129 = scmp.eq.s32.totalorder %s19, 0
    %p130 = por %p128, %p129
    %s132 = sadd.s32 %s131, 1
    %p135 = scmp.eq.s32.totalorder %s13, 1
    %p136 = scmp.ne.s32.totalorder %s131, %s133
    %p137 = scmp.eq.s32.totalorder %s13, 0
    %p138 = por %p136, %p137
    %p139 = scmp.ne.s32.totalorder %s131, %s133
    %p140 = scmp.eq.s32.totalorder %s18, 1
    %p141 = por %p139, %p140
    %p142 = scmp.ne.s32.totalorder %s133, %s134
    %p143 = scmp.eq.s32.totalorder %s18, 0
    %p144 = por %p142, %p143
    %p145 = scmp.ne.s32.totalorder %s133, %s134
    %p146 = scmp.eq.s32.totalorder %s19, 1
    %p147 = por %p145, %p146
    %p149 = scmp.ne.s32.totalorder %s134, %s148
    %p150 = scmp.eq.s32.totalorder %s19, 0
    %p151 = por %p149, %p150
    %s153 = sadd.s32 %s152, 1
    %p156 = scmp.eq.s32.totalorder %s13, 1
    %p157 = scmp.ne.s32.totalorder %s152, %s154
    %p158 = scmp.eq.s32.totalorder %s13, 0
    %p159 = por %p157, %p158
    %p160 = scmp.ne.s32.totalorder %s152, %s154
    %p161 = scmp.eq.s32.totalorder %s18, 1
    %p162 = por %p160, %p161
    %p163 = scmp.ne.s32.totalorder %s154, %s155
    %p164 = scmp.eq.s32.totalorder %s18, 0
    %p165 = por %p163, %p164
    %p166 = scmp.ne.s32.totalorder %s154, %s155
    %p167 = scmp.eq.s32.totalorder %s19, 1
    %p168 = por %p166, %p167
    %p170 = scmp.ne.s32.totalorder %s155, %s169
    %p171 = scmp.eq.s32.totalorder %s19, 0
    %p172 = por %p170, %p171
    %s173 = ssub.s32 %s13, %s20
    %p174 = scmp.eq.s32.totalorder %s173, 0
    %s176 = sadd.s32 %s175, 1
    %s177 = scalar_select %p174, %s175, %s176
    %p180 = pneg %p174
    %p181 = scmp.eq.s32.totalorder %s13, 1
    %p182 = por %p180, %p181
    %p183 = scmp.ne.s32.totalorder %s175, %s178
    %p184 = scmp.eq.s32.totalorder %s13, 0
    %p185 = por %p183, %p184
    %p186 = scmp.ne.s32.totalorder %s175, %s178
    %p187 = scmp.eq.s32.totalorder %s18, 1
    %p188 = por %p186, %p187
    %p189 = scmp.ne.s32.totalorder %s178, %s179
    %p190 = scmp.eq.s32.totalorder %s18, 0
    %p191 = por %p189, %p190
    %p192 = scmp.ne.s32.totalorder %s178, %s179
    %p193 = scmp.eq.s32.totalorder %s19, 1
    %p194 = por %p192, %p193
    %p196 = scmp.ne.s32.totalorder %s179, %s195
    %p197 = scmp.eq.s32.totalorder %s19, 0
    %p198 = por %p196, %p197
    %p199 = scmp.le.s32.totalorder 1, %s13
    %p200 = scmp.lt.s32.totalorder %s13, 3
    %p201 = pnand %p199, %p200
    %p202 = pneg %p201
    // Predicated region
    $region9: #{event_painter_forward.13} parent=5 // pred_check
      _
    $region10: #{event_painter_forward.13} parent=5 // pred_check_branch
      %204 = sbr.rel (%p201) target = $region12
    $region11: #{event_painter_forward.13} parent=5 // pred_region
      %s205 = ssub.s32 %s13, 1
      // Predicated region
      $region13: #{event_painter_forward.13} parent=11 // pred_check
        %p206 = pneg %p60
      $region14: #{event_painter_forward.13} parent=11 // pred_check_branch
        %208 = sbr.rel (%p206) target = $region16
      $region15: #{event_painter_forward.13} parent=11 // pred_region
        _
      $region16: #{event_painter_forward.13} parent=11 // pred_fallthru
        _
      // Predicated region
      $region17: #{event_painter_forward.13} parent=11 // pred_check
        %p209 = pneg %p81
      $region18: #{event_painter_forward.13} parent=11 // pred_check_branch
        %211 = sbr.rel (%p209) target = $region20
      $region19: #{event_painter_forward.13} parent=11 // pred_region
        _
      $region20: #{event_painter_forward.13} parent=11 // pred_fallthru
        _
      // Predicated region
      $region21: #{event_painter_forward.13} parent=11 // pred_check
        %p212 = pneg %p102
      $region22: #{event_painter_forward.13} parent=11 // pred_check_branch
        %214 = sbr.rel (%p212) target = $region24
      $region23: #{event_painter_forward.13} parent=11 // pred_region
        _
      $region24: #{event_painter_forward.13} parent=11 // pred_fallthru
        _
      // Predicated region
      $region25: #{event_painter_forward.13} parent=11 // pred_check
        %p215 = pneg %p123
      $region26: #{event_painter_forward.13} parent=11 // pred_check_branch
        %217 = sbr.rel (%p215) target = $region28
      $region27: #{event_painter_forward.13} parent=11 // pred_region
        _
      $region28: #{event_painter_forward.13} parent=11 // pred_fallthru
        _
      // Predicated region
      $region29: #{event_painter_forward.13} parent=11 // pred_check
        %p218 = pneg %p144
      $region30: #{event_painter_forward.13} parent=11 // pred_check_branch
        %220 = sbr.rel (%p218) target = $region32
      $region31: #{event_painter_forward.13} parent=11 // pred_region
        _
      $region32: #{event_painter_forward.13} parent=11 // pred_fallthru
        _
      // Predicated region
      $region33: #{event_painter_forward.13} parent=11 // pred_check
        %p221 = pneg %p165
      $region34: #{event_painter_forward.13} parent=11 // pred_check_branch
        %223 = sbr.rel (%p221) target = $region36
      $region35: #{event_painter_forward.13} parent=11 // pred_region
        _
      $region36: #{event_painter_forward.13} parent=11 // pred_fallthru
        _
    $region12: #{event_painter_forward.13} parent=5 // pred_fallthru
      _
    %p224 = scmp.lt.s32.totalorder %s13, 2
    // Predicated region
    $region37: #{event_painter_forward.13} parent=5 // pred_check
      %p225 = pneg %p224
    $region38: #{event_painter_forward.13} parent=5 // pred_check_branch
      %227 = sbr.rel (%p225) target = $region40
    $region39: #{event_painter_forward.13} parent=5 // pred_region
      // Predicated region
      $region41: #{event_painter_forward.13} parent=39 // pred_check
        %p228 = pneg %p33
      $region42: #{event_painter_forward.13} parent=39 // pred_check_branch
        %230 = sbr.rel (%p228) target = $region44
      $region43: #{event_painter_forward.13} parent=39 // pred_region
        %p231 = scmp.lt.s32.totalorder %s13, 1
        %s232 = scalar_select %p231, %s13, 1
        %s233 = smul.addr %s232, 2
        %s234 = smul.addr %s233, 4
        %s235 = scalar_lea.vmem %s0, %s234
      $region44: #{event_painter_forward.13} parent=39 // pred_fallthru
        _
    $region40: #{event_painter_forward.13} parent=5 // pred_fallthru
      _
    %p236 = scmp.le.s32.totalorder 1, %s13
    %p237 = scmp.lt.s32.totalorder %s13, 3
    %p238 = pnand %p236, %p237
    %p239 = pneg %p238
    // Predicated region
    $region45: #{event_painter_forward.13} parent=5 // pred_check
      _
    $region46: #{event_painter_forward.13} parent=5 // pred_check_branch
      %241 = sbr.rel (%p238) target = $region48
    $region47: #{event_painter_forward.13} parent=5 // pred_region
      %s242 = ssub.s32 %s13, 1
      %p243 = scmp.lt.s32.totalorder %s18, 1
      %s244 = scalar_select %p243, %s18, 1
      %s245 = smul.addr %s244, 2
      %s246 = smul.addr %s245, 4
      %s247 = scalar_lea.vmem %s0, %s246
      %p248 = pneg %p39
      %p249 = pneg %p36
      %p250 = pneg %p60
      %p251 = pneg %p57
      %p252 = pneg %p81
      %p253 = pneg %p78
      %p254 = pneg %p102
      %p255 = pneg %p99
      %p256 = pneg %p123
      %p257 = pneg %p120
      %p258 = pneg %p144
      %p259 = pneg %p141
      %p260 = pneg %p165
      %p261 = pneg %p162
      %p262 = pneg %p191
      %p263 = pneg %p188
      %p264 = scmp.lt.s32.totalorder %s18, 1
      %s265 = scalar_select %p264, %s18, 1
      %s266 = smul.addr %s265, 2
      %s267 = smul.addr %s266, 4
      %s268 = scalar_lea.vmem %s7, %s267
      %p269 = scmp.lt.s32.totalorder %s18, 1
      %s270 = scalar_select %p269, %s18, 1
      %s271 = smul.addr %s270, 2
      %s272 = smul.addr %s271, 4
      %s273 = scalar_lea.vmem %s0, %s272
      %p274 = scmp.lt.s32.totalorder %s18, 1
      %s275 = scalar_select %p274, %s18, 1
      %s276 = smul.addr %s275, 2
      %s277 = smul.addr %s276, 4
      %s278 = scalar_lea.vmem %s7, %s277
      %v280 = vld [vmem:[%s273] sm:$0xf]
      %v281 = vld [vmem:[%s273 + $0x4] sm:$0xf]
      %v282 = vld [vmem:[%s1] sm:$0xf]
      %v283 = vld [vmem:[%s1 + $0x4] sm:$0xf]
      %v284 = vld [vmem:[%s1 + $0x8] sm:$0xf]
      %v285 = vld [vmem:[%s1 + $0xc] sm:$0xf]
      %v286 = vld [vmem:[%s2] sm:$0x1]
      %v288 = vlaneseq
      %v289 = vshrl.u32 %v288, 7
      %v290 = vsub.s32 0, %v289
      %v291 = vrot.slane %v286, %v290
      %v295 = vunpack.c.l.b16 %v280
      %v296 = vunpack.c.l.b16 %v281
      %v297 = vpack.c.b16 %v296, %v295
      %v302 = vunpack.c.l.b16 %v282
      %v303 = vunpack.c.l.b16 %v283
      %v304 = vunpack.c.l.b16 %v284
      %v305 = vunpack.c.l.b16 %v285
      %v306 = vpack.c.b16 %v303, %v302
      %v307 = vpack.c.b16 %v305, %v304
      %vm310 = vcmask 261120
      %v312 = vsel %vm310, %v297, 0
      %314 = vmatprep.subr.bf16.mxu0 0
      %315 = vmatpush1.bf16.msra.mxu0 0
      %316 = vmatprep.subr.bf16.mxu0 0
      %317 = vmatpush1.bf16.msra.mxu0 0
      %318 = vmatprep.subr.bf16.mxu0 0
      %319 = vmatpush1.bf16.msra.mxu0 0
      %320 = vmatprep.subr.bf16.mxu0 0
      %321 = vmatpush1.bf16.msra.mxu0 0
      %322 = vmatprep.subr.bf16.mxu0 0
      %323 = vmatpush1.bf16.msra.mxu0 0
      %324 = vmatprep.subr.bf16.mxu0 0
      %325 = vmatpush1.bf16.msra.mxu0 0
      %326 = vmatprep.subr.bf16.mxu0 0
      %327 = vmatpush1.bf16.msra.mxu0 %v307
      %328 = vmatprep.subr.bf16.mxu0 0
      %329 = vmatpush1.bf16.msra.mxu0 %v306
      %330 = vmatprep.subr.bf16.mxu0 0
      %331 = vmatpush2.bf16.msra.mxu0 0
      %332 = vmatprep.subr.bf16.mxu0 0
      %333 = vmatpush2.bf16.msra.mxu0 0
      %334 = vmatprep.subr.bf16.mxu0 0
      %335 = vmatpush2.bf16.msra.mxu0 0
      %336 = vmatprep.subr.bf16.mxu0 0
      %337 = vmatpush2.bf16.msra.mxu0 0
      %338 = vmatprep.subr.bf16.mxu0 0
      %339 = vmatpush2.bf16.msra.mxu0 0
      %340 = vmatprep.subr.bf16.mxu0 0
      %341 = vmatpush2.bf16.msra.mxu0 0
      %342 = vmatprep.subr.bf16.mxu0 0
      %343 = vmatpush2.bf16.msra.mxu0 0
      %344 = vmatprep.subr.bf16.mxu0 0
      %345 = vmatpush2.bf16.msra.mxu0 0
      %346 = vmatprep.mubr.bf16.mxu0 0
      %347 = vmatmul.mubr.bf16.gmra.mxu0 %v312
      %v348 = vpop.f32.mrf.mxu0
      %v349 = vadd.f32 %v291, %v348
      %v350 = vpop.f32.mrf.mxu0
      %v351 = vpop.f32.mrf.mxu0
      %v352 = vadd.f32 %v291, %v351
      %v353 = vpop.f32.mrf.mxu0
      %354 = vdwg.mxu0
      %v355 = vpack.c.bf16 %v352, %v349
      %357 = vrot.lane.b32.xlu0 %v355, 96
      %v358 = vpop.permute.xlu0 %357
      %vm359 = vcmask 64512
      %v361 = vsel %vm359, %v355, 0
      %v364 = vsel %vm359, %v358, 0
      %366 = vmatprep.subr.bf16.mxu0 0
      %367 = vmatpush1.bf16.xpose.msra.mxu0 0
      %368 = vmatprep.subr.bf16.mxu0 0
      %369 = vmatpush1.bf16.xpose.msra.mxu0 0
      %370 = vmatprep.subr.bf16.mxu0 0
      %371 = vmatpush1.bf16.xpose.msra.mxu0 0
      %372 = vmatprep.subr.bf16.mxu0 0
      %373 = vmatpush1.bf16.xpose.msra.mxu0 0
      %374 = vmatprep.subr.bf16.mxu0 0
      %375 = vmatpush1.bf16.xpose.msra.mxu0 0
      %376 = vmatprep.subr.bf16.mxu0 0
      %377 = vmatpush1.bf16.xpose.msra.mxu0 0
      %378 = vmatprep.subr.bf16.mxu0 0
      %379 = vmatpush1.bf16.xpose.msra.mxu0 0
      %380 = vmatprep.subr.bf16.mxu0 0
      %381 = vmatpush1.bf16.xpose.msra.mxu0 %v364
      %382 = vmatprep.subr.bf16.mxu0 0
      %383 = vmatpush2.bf16.xpose.msra.mxu0 0
      %384 = vmatprep.subr.bf16.mxu0 0
      %385 = vmatpush2.bf16.xpose.msra.mxu0 0
      %386 = vmatprep.subr.bf16.mxu0 0
      %387 = vmatpush2.bf16.xpose.msra.mxu0 0
      %388 = vmatprep.subr.bf16.mxu0 0
      %389 = vmatpush2.bf16.xpose.msra.mxu0 0
      %390 = vmatprep.subr.bf16.mxu0 0
      %391 = vmatpush2.bf16.xpose.msra.mxu0 0
      %392 = vmatprep.subr.bf16.mxu0 0
      %393 = vmatpush2.bf16.xpose.msra.mxu0 0
      %394 = vmatprep.subr.bf16.mxu0 0
      %395 = vmatpush2.bf16.xpose.msra.mxu0 0
      %396 = vmatprep.subr.bf16.mxu0 0
      %397 = vmatpush2.bf16.xpose.msra.mxu0 0
      %398 = vmatprep.mubr.bf16.mxu0 0
      %399 = vmatmul.mubr.bf16.gmra.mxu0 %v361
      %v400 = vpop.f32.mrf.mxu0
      %v401 = vadd.f32 0.0, %v400
      %v402 = vpop.f32.mrf.mxu0
      %v403 = vpop.f32.mrf.mxu0
      %v404 = vadd.f32 0.0, %v403
      %v405 = vpop.f32.mrf.mxu0
      %406 = vdwg.mxu0
      %vm407 = vcmask 130048
      %v408 = vsel %vm407, %v401, -inf
      %409 = vmax.xlane.f32.xlu0 %v408
      %v410 = vpop.xlane.xlu0 %409
      %v411 = vsel %vm407, %v404, -inf
      %412 = vmax.xlane.f32.xlu0 %v411
      %v413 = vpop.xlane.xlu0 %412
      %v414 = vsub.f32 %v401, %v410
      %v415 = vsub.f32 %v404, %v413
      %v416 = vmul.f32 %v414, 1.442695
      %v417 = vpow.pop %v416
      %v418 = vmul.f32 %v415, 1.442695
      %v419 = vpow.pop %v418
      %v420 = vsel %vm407, %v417, 0.0
      %421 = vadd.xlane.f32.xlu0 %v420
      %v422 = vpop.xlane.xlu0 %421
      %v423 = vsel %vm407, %v419, 0.0
      %424 = vadd.xlane.f32.xlu0 %v423
      %v425 = vpop.xlane.xlu0 %424
      %v426 = vpack.c.bf16 %v419, %v417
      %427 = vrot.lane.b32.xlu0 %v355, 64
      %v428 = vpop.permute.xlu0 %427
      %v431 = vsel %vm407, %v426, 0
      %433 = vmatprep.subr.bf16.mxu0 0
      %434 = vmatpush1.bf16.msra.mxu0 0
      %435 = vmatprep.subr.bf16.mxu0 0
      %436 = vmatpush1.bf16.msra.mxu0 0
      %437 = vmatprep.subr.bf16.mxu0 0
      %438 = vmatpush1.bf16.msra.mxu0 0
      %439 = vmatprep.subr.bf16.mxu0 0
      %440 = vmatpush1.bf16.msra.mxu0 0
      %441 = vmatprep.subr.bf16.mxu0 0
      %442 = vmatpush1.bf16.msra.mxu0 0
      %443 = vmatprep.subr.bf16.mxu0 0
      %444 = vmatpush1.bf16.msra.mxu0 0
      %445 = vmatprep.subr.bf16.mxu0 0
      %446 = vmatpush1.bf16.msra.mxu0 0
      %447 = vmatprep.subr.bf16.mxu0 0
      %448 = vmatpush1.bf16.msra.mxu0 %v428
      %449 = vmatprep.subr.bf16.mxu0 0
      %450 = vmatpush2.bf16.msra.mxu0 0
      %451 = vmatprep.subr.bf16.mxu0 0
      %452 = vmatpush2.bf16.msra.mxu0 0
      %453 = vmatprep.subr.bf16.mxu0 0
      %454 = vmatpush2.bf16.msra.mxu0 0
      %455 = vmatprep.subr.bf16.mxu0 0
      %456 = vmatpush2.bf16.msra.mxu0 0
      %457 = vmatprep.subr.bf16.mxu0 0
      %458 = vmatpush2.bf16.msra.mxu0 0
      %459 = vmatprep.subr.bf16.mxu0 0
      %460 = vmatpush2.bf16.msra.mxu0 0
      %461 = vmatprep.subr.bf16.mxu0 0
      %462 = vmatpush2.bf16.msra.mxu0 0
      %463 = vmatprep.subr.bf16.mxu0 0
      %464 = vmatpush2.bf16.msra.mxu0 0
      %465 = vmatprep.mubr.bf16.mxu0 0
      %466 = vmatmul.mubr.bf16.gmra.mxu0 %v431
      %v467 = vpop.f32.mrf.mxu0
      %v468 = vadd.f32 0.0, %v467
      %v469 = vpop.f32.mrf.mxu0
      %v470 = vpop.f32.mrf.mxu0
      %v471 = vadd.f32 0.0, %v470
      %v472 = vpop.f32.mrf.mxu0
      %473 = vdwg.mxu0
      %v474 = vrcp.pop %v422
      %v475 = vrcp.pop %v425
      %v476 = vmul.f32 %v468, %v474
      %v477 = vmul.f32 %v471, %v475
      %478 = vst.msk [vmem:[#allocation2] sm:$0xff] %vm359, %v476
      %479 = vst.msk [vmem:[#allocation2 + $0x8] sm:$0xff] %vm359, %v477
      %480 = vrot.lane.b32.xlu0 %v355, 120
      %v481 = vpop.permute.xlu0 %480
      %482 = vrot.lane.b32.xlu0 %v355, 88
      %v483 = vpop.permute.xlu0 %482
      %v485 = vsel %vm359, %v481, 0
      %v488 = vsel %vm359, %v483, 0
      %490 = vmatprep.subr.bf16.mxu0 0
      %491 = vmatpush1.bf16.xpose.msra.mxu0 0
      %492 = vmatprep.subr.bf16.mxu0 0
      %493 = vmatpush1.bf16.xpose.msra.mxu0 0
      %494 = vmatprep.subr.bf16.mxu0 0
      %495 = vmatpush1.bf16.xpose.msra.mxu0 0
      %496 = vmatprep.subr.bf16.mxu0 0
      %497 = vmatpush1.bf16.xpose.msra.mxu0 0
      %498 = vmatprep.subr.bf16.mxu0 0
      %499 = vmatpush1.bf16.xpose.msra.mxu0 0
      %500 = vmatprep.subr.bf16.mxu0 0
      %501 = vmatpush1.bf16.xpose.msra.mxu0 0
      %502 = vmatprep.subr.bf16.mxu0 0
      %503 = vmatpush1.bf16.xpose.msra.mxu0 0
      %504 = vmatprep.subr.bf16.mxu0 0
      %505 = vmatpush1.bf16.xpose.msra.mxu0 %v488
      %506 = vmatprep.subr.bf16.mxu0 0
      %507 = vmatpush2.bf16.xpose.msra.mxu0 0
      %508 = vmatprep.subr.bf16.mxu0 0
      %509 = vmatpush2.bf16.xpose.msra.mxu0 0
      %510 = vmatprep.subr.bf16.mxu0 0
      %511 = vmatpush2.bf16.xpose.msra.mxu0 0
      %512 = vmatprep.subr.bf16.mxu0 0
      %513 = vmatpush2.bf16.xpose.msra.mxu0 0
      %514 = vmatprep.subr.bf16.mxu0 0
      %515 = vmatpush2.bf16.xpose.msra.mxu0 0
      %516 = vmatprep.subr.bf16.mxu0 0
      %517 = vmatpush2.bf16.xpose.msra.mxu0 0
      %518 = vmatprep.subr.bf16.mxu0 0
      %519 = vmatpush2.bf16.xpose.msra.mxu0 0
      %520 = vmatprep.subr.bf16.mxu0 0
      %521 = vmatpush2.bf16.xpose.msra.mxu0 0
      %522 = vmatprep.mubr.bf16.mxu0 0
      %523 = vmatmul.mubr.bf16.gmra.mxu0 %v485
      %v524 = vpop.f32.mrf.mxu0
      %v525 = vadd.f32 0.0, %v524
      %v526 = vpop.f32.mrf.mxu0
      %v527 = vpop.f32.mrf.mxu0
      %v528 = vadd.f32 0.0, %v527
      %v529 = vpop.f32.mrf.mxu0
      %530 = vdwg.mxu0
      %v531 = vsel %vm407, %v525, -inf
      %532 = vmax.xlane.f32.xlu0 %v531
      %v533 = vpop.xlane.xlu0 %532
      %v534 = vsel %vm407, %v528, -inf
      %535 = vmax.xlane.f32.xlu0 %v534
      %v536 = vpop.xlane.xlu0 %535
      %v537 = vsub.f32 %v525, %v533
      %v538 = vsub.f32 %v528, %v536
      %v539 = vmul.f32 %v537, 1.442695
      %v540 = vpow.pop %v539
      %v541 = vmul.f32 %v538, 1.442695
      %v542 = vpow.pop %v541
      %v543 = vsel %vm407, %v540, 0.0
      %544 = vadd.xlane.f32.xlu0 %v543
      %v545 = vpop.xlane.xlu0 %544
      %v546 = vsel %vm407, %v542, 0.0
      %547 = vadd.xlane.f32.xlu0 %v546
      %v548 = vpop.xlane.xlu0 %547
      %v549 = vpack.c.bf16 %v542, %v540
      %550 = vrot.lane.b32.xlu0 %v355, 56
      %v551 = vpop.permute.xlu0 %550
      %v554 = vsel %vm407, %v549, 0
      %556 = vmatprep.subr.bf16.mxu0 0
      %557 = vmatpush1.bf16.msra.mxu0 0
      %558 = vmatprep.subr.bf16.mxu0 0
      %559 = vmatpush1.bf16.msra.mxu0 0
      %560 = vmatprep.subr.bf16.mxu0 0
      %561 = vmatpush1.bf16.msra.mxu0 0
      %562 = vmatprep.subr.bf16.mxu0 0
      %563 = vmatpush1.bf16.msra.mxu0 0
      %564 = vmatprep.subr.bf16.mxu0 0
      %565 = vmatpush1.bf16.msra.mxu0 0
      %566 = vmatprep.subr.bf16.mxu0 0
      %567 = vmatpush1.bf16.msra.mxu0 0
      %568 = vmatprep.subr.bf16.mxu0 0
      %569 = vmatpush1.bf16.msra.mxu0 0
      %570 = vmatprep.subr.bf16.mxu0 0
      %571 = vmatpush1.bf16.msra.mxu0 %v551
      %572 = vmatprep.subr.bf16.mxu0 0
      %573 = vmatpush2.bf16.msra.mxu0 0
      %574 = vmatprep.subr.bf16.mxu0 0
      %575 = vmatpush2.bf16.msra.mxu0 0
      %576 = vmatprep.subr.bf16.mxu0 0
      %577 = vmatpush2.bf16.msra.mxu0 0
      %578 = vmatprep.subr.bf16.mxu0 0
      %579 = vmatpush2.bf16.msra.mxu0 0
      %580 = vmatprep.subr.bf16.mxu0 0
      %581 = vmatpush2.bf16.msra.mxu0 0
      %582 = vmatprep.subr.bf16.mxu0 0
      %583 = vmatpush2.bf16.msra.mxu0 0
      %584 = vmatprep.subr.bf16.mxu0 0
      %585 = vmatpush2.bf16.msra.mxu0 0
      %586 = vmatprep.subr.bf16.mxu0 0
      %587 = vmatpush2.bf16.msra.mxu0 0
      %588 = vmatprep.mubr.bf16.mxu0 0
      %589 = vmatmul.mubr.bf16.gmra.mxu0 %v554
      %v590 = vpop.f32.mrf.mxu0
      %v591 = vadd.f32 0.0, %v590
      %v592 = vpop.f32.mrf.mxu0
      %v593 = vpop.f32.mrf.mxu0
      %v594 = vadd.f32 0.0, %v593
      %v595 = vpop.f32.mrf.mxu0
      %596 = vdwg.mxu0
      %v597 = vrcp.pop %v545
      %v598 = vrcp.pop %v548
      %v599 = vmul.f32 %v591, %v597
      %v600 = vmul.f32 %v594, %v598
      %603 = vrot.lane.b32.xlu0 %v599, 8
      %v604 = vpop.permute.xlu0 %603
      %605 = vrot.lane.b32.xlu0 %v600, 8
      %v606 = vpop.permute.xlu0 %605
      %vm609 = vcmask 130112
      %610 = vst.msk [vmem:[#allocation2] sm:$0xff] %vm609, %v604
      %611 = vst.msk [vmem:[#allocation2 + $0x8] sm:$0xff] %vm609, %v606
      %612 = vrot.lane.b32.xlu0 %v355, 112
      %v613 = vpop.permute.xlu0 %612
      %614 = vrot.lane.b32.xlu0 %v355, 80
      %v615 = vpop.permute.xlu0 %614
      %v617 = vsel %vm359, %v613, 0
      %v620 = vsel %vm359, %v615, 0
      %622 = vmatprep.subr.bf16.mxu0 0
      %623 = vmatpush1.bf16.xpose.msra.mxu0 0
      %624 = vmatprep.subr.bf16.mxu0 0
      %625 = vmatpush1.bf16.xpose.msra.mxu0 0
      %626 = vmatprep.subr.bf16.mxu0 0
      %627 = vmatpush1.bf16.xpose.msra.mxu0 0
      %628 = vmatprep.subr.bf16.mxu0 0
      %629 = vmatpush1.bf16.xpose.msra.mxu0 0
      %630 = vmatprep.subr.bf16.mxu0 0
      %631 = vmatpush1.bf16.xpose.msra.mxu0 0
      %632 = vmatprep.subr.bf16.mxu0 0
      %633 = vmatpush1.bf16.xpose.msra.mxu0 0
      %634 = vmatprep.subr.bf16.mxu0 0
      %635 = vmatpush1.bf16.xpose.msra.mxu0 0
      %636 = vmatprep.subr.bf16.mxu0 0
      %637 = vmatpush1.bf16.xpose.msra.mxu0 %v620
      %638 = vmatprep.subr.bf16.mxu0 0
      %639 = vmatpush2.bf16.xpose.msra.mxu0 0
      %640 = vmatprep.subr.bf16.mxu0 0
      %641 = vmatpush2.bf16.xpose.msra.mxu0 0
      %642 = vmatprep.subr.bf16.mxu0 0
      %643 = vmatpush2.bf16.xpose.msra.mxu0 0
      %644 = vmatprep.subr.bf16.mxu0 0
      %645 = vmatpush2.bf16.xpose.msra.mxu0 0
      %646 = vmatprep.subr.bf16.mxu0 0
      %647 = vmatpush2.bf16.xpose.msra.mxu0 0
      %648 = vmatprep.subr.bf16.mxu0 0
      %649 = vmatpush2.bf16.xpose.msra.mxu0 0
      %650 = vmatprep.subr.bf16.mxu0 0
      %651 = vmatpush2.bf16.xpose.msra.mxu0 0
      %652 = vmatprep.subr.bf16.mxu0 0
      %653 = vmatpush2.bf16.xpose.msra.mxu0 0
      %654 = vmatprep.mubr.bf16.mxu0 0
      %655 = vmatmul.mubr.bf16.gmra.mxu0 %v617
      %v656 = vpop.f32.mrf.mxu0
      %v657 = vadd.f32 0.0, %v656
      %v658 = vpop.f32.mrf.mxu0
      %v659 = vpop.f32.mrf.mxu0
      %v660 = vadd.f32 0.0, %v659
      %v661 = vpop.f32.mrf.mxu0
      %662 = vdwg.mxu0
      %v663 = vsel %vm407, %v657, -inf
      %664 = vmax.xlane.f32.xlu0 %v663
      %v665 = vpop.xlane.xlu0 %664
      %v666 = vsel %vm407, %v660, -inf
      %667 = vmax.xlane.f32.xlu0 %v666
      %v668 = vpop.xlane.xlu0 %667
      %v669 = vsub.f32 %v657, %v665
      %v670 = vsub.f32 %v660, %v668
      %v671 = vmul.f32 %v669, 1.442695
      %v672 = vpow.pop %v671
      %v673 = vmul.f32 %v670, 1.442695
      %v674 = vpow.pop %v673
      %v675 = vsel %vm407, %v672, 0.0
      %676 = vadd.xlane.f32.xlu0 %v675
      %v677 = vpop.xlane.xlu0 %676
      %v678 = vsel %vm407, %v674, 0.0
      %679 = vadd.xlane.f32.xlu0 %v678
      %v680 = vpop.xlane.xlu0 %679
      %v681 = vpack.c.bf16 %v674, %v672
      %682 = vrot.lane.b32.xlu0 %v355, 48
      %v683 = vpop.permute.xlu0 %682
      %v686 = vsel %vm407, %v681, 0
      %688 = vmatprep.subr.bf16.mxu0 0
      %689 = vmatpush1.bf16.msra.mxu0 0
      %690 = vmatprep.subr.bf16.mxu0 0
      %691 = vmatpush1.bf16.msra.mxu0 0
      %692 = vmatprep.subr.bf16.mxu0 0
      %693 = vmatpush1.bf16.msra.mxu0 0
      %694 = vmatprep.subr.bf16.mxu0 0
      %695 = vmatpush1.bf16.msra.mxu0 0
      %696 = vmatprep.subr.bf16.mxu0 0
      %697 = vmatpush1.bf16.msra.mxu0 0
      %698 = vmatprep.subr.bf16.mxu0 0
      %699 = vmatpush1.bf16.msra.mxu0 0
      %700 = vmatprep.subr.bf16.mxu0 0
      %701 = vmatpush1.bf16.msra.mxu0 0
      %702 = vmatprep.subr.bf16.mxu0 0
      %703 = vmatpush1.bf16.msra.mxu0 %v683
      %704 = vmatprep.subr.bf16.mxu0 0
      %705 = vmatpush2.bf16.msra.mxu0 0
      %706 = vmatprep.subr.bf16.mxu0 0
      %707 = vmatpush2.bf16.msra.mxu0 0
      %708 = vmatprep.subr.bf16.mxu0 0
      %709 = vmatpush2.bf16.msra.mxu0 0
      %710 = vmatprep.subr.bf16.mxu0 0
      %711 = vmatpush2.bf16.msra.mxu0 0
      %712 = vmatprep.subr.bf16.mxu0 0
      %713 = vmatpush2.bf16.msra.mxu0 0
      %714 = vmatprep.subr.bf16.mxu0 0
      %715 = vmatpush2.bf16.msra.mxu0 0
      %716 = vmatprep.subr.bf16.mxu0 0
      %717 = vmatpush2.bf16.msra.mxu0 0
      %718 = vmatprep.subr.bf16.mxu0 0
      %719 = vmatpush2.bf16.msra.mxu0 0
      %720 = vmatprep.mubr.bf16.mxu0 0
      %721 = vmatmul.mubr.bf16.gmra.mxu0 %v686
      %v722 = vpop.f32.mrf.mxu0
      %v723 = vadd.f32 0.0, %v722
      %v724 = vpop.f32.mrf.mxu0
      %v725 = vpop.f32.mrf.mxu0
      %v726 = vadd.f32 0.0, %v725
      %v727 = vpop.f32.mrf.mxu0
      %728 = vdwg.mxu0
      %v729 = vrcp.pop %v677
      %v730 = vrcp.pop %v680
      %v731 = vmul.f32 %v723, %v729
      %v732 = vmul.f32 %v726, %v730
      %735 = vrot.lane.b32.xlu0 %v731, 16
      %v736 = vpop.permute.xlu0 %735
      %737 = vrot.lane.b32.xlu0 %v732, 16
      %v738 = vpop.permute.xlu0 %737
      %vm741 = vcmask 195712
      %742 = vst.msk [vmem:[#allocation2] sm:$0xff] %vm741, %v736
      %743 = vst.msk [vmem:[#allocation2 + $0x8] sm:$0xff] %vm741, %v738
      %744 = vrot.lane.b32.xlu0 %v355, 104
      %v745 = vpop.permute.xlu0 %744
      %746 = vrot.lane.b32.xlu0 %v355, 72
      %v747 = vpop.permute.xlu0 %746
      %v749 = vsel %vm359, %v745, 0
      %v752 = vsel %vm359, %v747, 0
      %754 = vmatprep.subr.bf16.mxu0 0
      %755 = vmatpush1.bf16.xpose.msra.mxu0 0
      %756 = vmatprep.subr.bf16.mxu0 0
      %757 = vmatpush1.bf16.xpose.msra.mxu0 0
      %758 = vmatprep.subr.bf16.mxu0 0
      %759 = vmatpush1.bf16.xpose.msra.mxu0 0
      %760 = vmatprep.subr.bf16.mxu0 0
      %761 = vmatpush1.bf16.xpose.msra.mxu0 0
      %762 = vmatprep.subr.bf16.mxu0 0
      %763 = vmatpush1.bf16.xpose.msra.mxu0 0
      %764 = vmatprep.subr.bf16.mxu0 0
      %765 = vmatpush1.bf16.xpose.msra.mxu0 0
      %766 = vmatprep.subr.bf16.mxu0 0
      %767 = vmatpush1.bf16.xpose.msra.mxu0 0
      %768 = vmatprep.subr.bf16.mxu0 0
      %769 = vmatpush1.bf16.xpose.msra.mxu0 %v752
      %770 = vmatprep.subr.bf16.mxu0 0
      %771 = vmatpush2.bf16.xpose.msra.mxu0 0
      %772 = vmatprep.subr.bf16.mxu0 0
      %773 = vmatpush2.bf16.xpose.msra.mxu0 0
      %774 = vmatprep.subr.bf16.mxu0 0
      %775 = vmatpush2.bf16.xpose.msra.mxu0 0
      %776 = vmatprep.subr.bf16.mxu0 0
      %777 = vmatpush2.bf16.xpose.msra.mxu0 0
      %778 = vmatprep.subr.bf16.mxu0 0
      %779 = vmatpush2.bf16.xpose.msra.mxu0 0
      %780 = vmatprep.subr.bf16.mxu0 0
      %781 = vmatpush2.bf16.xpose.msra.mxu0 0
      %782 = vmatprep.subr.bf16.mxu0 0
      %783 = vmatpush2.bf16.xpose.msra.mxu0 0
      %784 = vmatprep.subr.bf16.mxu0 0
      %785 = vmatpush2.bf16.xpose.msra.mxu0 0
      %786 = vmatprep.mubr.bf16.mxu0 0
      %787 = vmatmul.mubr.bf16.gmra.mxu0 %v749
      %v788 = vpop.f32.mrf.mxu0
      %v789 = vadd.f32 0.0, %v788
      %v790 = vpop.f32.mrf.mxu0
      %v791 = vpop.f32.mrf.mxu0
      %v792 = vadd.f32 0.0, %v791
      %v793 = vpop.f32.mrf.mxu0
      %794 = vdwg.mxu0
      %v795 = vsel %vm407, %v789, -inf
      %796 = vmax.xlane.f32.xlu0 %v795
      %v797 = vpop.xlane.xlu0 %796
      %v798 = vsel %vm407, %v792, -inf
      %799 = vmax.xlane.f32.xlu0 %v798
      %v800 = vpop.xlane.xlu0 %799
      %v801 = vsub.f32 %v789, %v797
      %v802 = vsub.f32 %v792, %v800
      %v803 = vmul.f32 %v801, 1.442695
      %v804 = vpow.pop %v803
      %v805 = vmul.f32 %v802, 1.442695
      %v806 = vpow.pop %v805
      %v807 = vsel %vm407, %v804, 0.0
      %808 = vadd.xlane.f32.xlu0 %v807
      %v809 = vpop.xlane.xlu0 %808
      %v810 = vsel %vm407, %v806, 0.0
      %811 = vadd.xlane.f32.xlu0 %v810
      %v812 = vpop.xlane.xlu0 %811
      %v813 = vpack.c.bf16 %v806, %v804
      %814 = vrot.lane.b32.xlu0 %v355, 40
      %v815 = vpop.permute.xlu0 %814
      %v818 = vsel %vm407, %v813, 0
      %820 = vmatprep.subr.bf16.mxu0 0
      %821 = vmatpush1.bf16.msra.mxu0 0
      %822 = vmatprep.subr.bf16.mxu0 0
      %823 = vmatpush1.bf16.msra.mxu0 0
      %824 = vmatprep.subr.bf16.mxu0 0
      %825 = vmatpush1.bf16.msra.mxu0 0
      %826 = vmatprep.subr.bf16.mxu0 0
      %827 = vmatpush1.bf16.msra.mxu0 0
      %828 = vmatprep.subr.bf16.mxu0 0
      %829 = vmatpush1.bf16.msra.mxu0 0
      %830 = vmatprep.subr.bf16.mxu0 0
      %831 = vmatpush1.bf16.msra.mxu0 0
      %832 = vmatprep.subr.bf16.mxu0 0
      %833 = vmatpush1.bf16.msra.mxu0 0
      %834 = vmatprep.subr.bf16.mxu0 0
      %835 = vmatpush1.bf16.msra.mxu0 %v815
      %836 = vmatprep.subr.bf16.mxu0 0
      %837 = vmatpush2.bf16.msra.mxu0 0
      %838 = vmatprep.subr.bf16.mxu0 0
      %839 = vmatpush2.bf16.msra.mxu0 0
      %840 = vmatprep.subr.bf16.mxu0 0
      %841 = vmatpush2.bf16.msra.mxu0 0
      %842 = vmatprep.subr.bf16.mxu0 0
      %843 = vmatpush2.bf16.msra.mxu0 0
      %844 = vmatprep.subr.bf16.mxu0 0
      %845 = vmatpush2.bf16.msra.mxu0 0
      %846 = vmatprep.subr.bf16.mxu0 0
      %847 = vmatpush2.bf16.msra.mxu0 0
      %848 = vmatprep.subr.bf16.mxu0 0
      %849 = vmatpush2.bf16.msra.mxu0 0
      %850 = vmatprep.subr.bf16.mxu0 0
      %851 = vmatpush2.bf16.msra.mxu0 0
      %852 = vmatprep.mubr.bf16.mxu0 0
      %853 = vmatmul.mubr.bf16.gmra.mxu0 %v818
      %v854 = vpop.f32.mrf.mxu0
      %v855 = vadd.f32 0.0, %v854
      %v856 = vpop.f32.mrf.mxu0
      %v857 = vpop.f32.mrf.mxu0
      %v858 = vadd.f32 0.0, %v857
      %v859 = vpop.f32.mrf.mxu0
      %860 = vdwg.mxu0
      %v861 = vrcp.pop %v809
      %v862 = vrcp.pop %v812
      %v863 = vmul.f32 %v855, %v861
      %v864 = vmul.f32 %v858, %v862
      %867 = vrot.lane.b32.xlu0 %v863, 24
      %v868 = vpop.permute.xlu0 %867
      %869 = vrot.lane.b32.xlu0 %v864, 24
      %v870 = vpop.permute.xlu0 %869
      %vm873 = vcmask 261312
      %874 = vst.msk [vmem:[#allocation2] sm:$0xff] %vm873, %v868
      %875 = vst.msk [vmem:[#allocation2 + $0x8] sm:$0xff] %vm873, %v870
      %v876 = vld [vmem:[#allocation2] sm:$0xff]
      %v877 = vld [vmem:[#allocation2 + $0x8] sm:$0xff]
      %v878 = vpack.c.bf16 %v877, %v876
      %v879 = vld [vmem:[%s3] sm:$0xf]
      %v880 = vld [vmem:[%s3 + $0x4] sm:$0xf]
      %v881 = vld [vmem:[%s3 + $0x8] sm:$0xf]
      %v882 = vld [vmem:[%s3 + $0xc] sm:$0xf]
      %v883 = vld [vmem:[%s4] sm:$0x1]
      %v885 = vlaneseq
      %v886 = vshrl.u32 %v885, 7
      %v887 = vsub.s32 0, %v886
      %v888 = vrot.slane %v883, %v887
      %v894 = vunpack.c.l.b16 %v879
      %v895 = vunpack.c.l.b16 %v880
      %v896 = vunpack.c.l.b16 %v881
      %v897 = vunpack.c.l.b16 %v882
      %v898 = vpack.c.b16 %v895, %v894
      %v899 = vpack.c.b16 %v897, %v896
      %v903 = vsel %vm310, %v878, 0
      %905 = vmatprep.subr.bf16.mxu0 0
      %906 = vmatpush1.bf16.msra.mxu0 0
      %907 = vmatprep.subr.bf16.mxu0 0
      %908 = vmatpush1.bf16.msra.mxu0 0
      %909 = vmatprep.subr.bf16.mxu0 0
      %910 = vmatpush1.bf16.msra.mxu0 0
      %911 = vmatprep.subr.bf16.mxu0 0
      %912 = vmatpush1.bf16.msra.mxu0 0
      %913 = vmatprep.subr.bf16.mxu0 0
      %914 = vmatpush1.bf16.msra.mxu0 0
      %915 = vmatprep.subr.bf16.mxu0 0
      %916 = vmatpush1.bf16.msra.mxu0 0
      %917 = vmatprep.subr.bf16.mxu0 0
      %918 = vmatpush1.bf16.msra.mxu0 %v899
      %919 = vmatprep.subr.bf16.mxu0 0
      %920 = vmatpush1.bf16.msra.mxu0 %v898
      %921 = vmatprep.subr.bf16.mxu0 0
      %922 = vmatpush2.bf16.msra.mxu0 0
      %923 = vmatprep.subr.bf16.mxu0 0
      %924 = vmatpush2.bf16.msra.mxu0 0
      %925 = vmatprep.subr.bf16.mxu0 0
      %926 = vmatpush2.bf16.msra.mxu0 0
      %927 = vmatprep.subr.bf16.mxu0 0
      %928 = vmatpush2.bf16.msra.mxu0 0
      %929 = vmatprep.subr.bf16.mxu0 0
      %930 = vmatpush2.bf16.msra.mxu0 0
      %931 = vmatprep.subr.bf16.mxu0 0
      %932 = vmatpush2.bf16.msra.mxu0 0
      %933 = vmatprep.subr.bf16.mxu0 0
      %934 = vmatpush2.bf16.msra.mxu0 0
      %935 = vmatprep.subr.bf16.mxu0 0
      %936 = vmatpush2.bf16.msra.mxu0 0
      %937 = vmatprep.mubr.bf16.mxu0 0
      %938 = vmatmul.mubr.bf16.gmra.mxu0 %v903
      %v939 = vpop.f32.mrf.mxu0
      %v940 = vadd.f32 %v888, %v939
      %v941 = vpop.f32.mrf.mxu0
      %v942 = vpop.f32.mrf.mxu0
      %v943 = vadd.f32 %v888, %v942
      %v944 = vpop.f32.mrf.mxu0
      %945 = vdwg.mxu0
      %v946 = vunpack.c.l.bf16 %v280
      %v947 = vunpack.c.l.bf16 %v281
      %v948 = vadd.f32 %v940, %v946
      %v949 = vadd.f32 %v943, %v947
      %v950 = vld [vmem:[%s5] sm:$0x1]
      %v951 = vld [vmem:[%s6] sm:$0x1]
      %v952 = vsel %vm310, %v948, 0.0
      %953 = vadd.xlane.f32.xlu0 %v952
      %v954 = vpop.xlane.xlu0 %953
      %v955 = vsel %vm310, %v949, 0.0
      %956 = vadd.xlane.f32.xlu0 %v955
      %v957 = vpop.xlane.xlu0 %956
      %v958 = vrcp.pop 32.0
      %v959 = vmul.f32 %v954, %v958
      %v960 = vmul.f32 %v957, %v958
      %v961 = vsub.f32 %v948, %v959
      %v962 = vsub.f32 %v949, %v960
      %v963 = vmul.f32 %v961, %v961
      %v964 = vmul.f32 %v962, %v962
      %v965 = vsel %vm310, %v963, 0.0
      %966 = vadd.xlane.f32.xlu0 %v965
      %v967 = vpop.xlane.xlu0 %966
      %v968 = vsel %vm310, %v964, 0.0
      %969 = vadd.xlane.f32.xlu0 %v968
      %v970 = vpop.xlane.xlu0 %969
      %v971 = vmul.f32 %v967, %v958
      %v972 = vmul.f32 %v970, %v958
      %v973 = vadd.f32 %v971, 1e-05
      %v974 = vadd.f32 %v972, 1e-05
      %v975 = vrsqrt.pop %v973
      %v976 = vrsqrt.pop %v974
      %v977 = vmul.f32 %v961, %v975
      %v978 = vmul.f32 %v962, %v976
      %v980 = vlaneseq
      %v981 = vshrl.u32 %v980, 7
      %v982 = vsub.s32 0, %v981
      %v983 = vrot.slane %v950, %v982
      %v985 = vmul.f32 %v977, %v983
      %v986 = vmul.f32 %v978, %v983
      %v988 = vlaneseq
      %v989 = vshrl.u32 %v988, 7
      %v990 = vsub.s32 0, %v989
      %v991 = vrot.slane %v951, %v990
      %v993 = vadd.f32 %v985, %v991
      %v994 = vadd.f32 %v986, %v991
      %v995 = vpack.c.bf16 %v994, %v993
      %v997 = vunpack.c.l.b16 %v995
      %v998 = vunpack.c.h.b16 %v995
      %v999 = vpack.c.b16 %v997, %v997
      %v1000 = vpack.c.b16 %v998, %v998
      %vm1003 = vcmask 257024
      %1004 = vst.msk [vmem:[%s278] sm:$0xf] %vm1003, %v999
      %1005 = vst.msk [vmem:[%s278 + $0x4] sm:$0xf] %vm1003, %v1000
      %p1006 = scmp.lt.s32.totalorder %s18, 1
      %s1007 = scalar_select %p1006, %s18, 1
      %s1008 = smul.addr %s1007, 2
      %s1009 = smul.addr %s1008, 4
      %s1010 = scalar_lea.vmem %s7, %s1009
      // Predicated region
      $region49: #{event_painter_forward.13} parent=47 // pred_check
        %p1011 = pneg %p188
      $region50: #{event_painter_forward.13} parent=47 // pred_check_branch
        %1013 = sbr.rel (%p1011) target = $region52
      $region51: #{event_painter_forward.13} parent=47 // pred_region
        _
      $region52: #{event_painter_forward.13} parent=47 // pred_fallthru
        _
    $region48: #{event_painter_forward.13} parent=5 // pred_fallthru
      _
    %p1014 = scmp.le.s32.totalorder 2, %s13
    // Predicated region
    $region53: #{event_painter_forward.13} parent=5 // pred_check
      %p1015 = pneg %p1014
    $region54: #{event_painter_forward.13} parent=5 // pred_check_branch
      %1017 = sbr.rel (%p1015) target = $region56
    $region55: #{event_painter_forward.13} parent=5 // pred_region
      %s1018 = ssub.s32 %s13, 2
      // Predicated region
      $region57: #{event_painter_forward.13} parent=55 // pred_check
        %p1019 = pneg %p194
      $region58: #{event_painter_forward.13} parent=55 // pred_check_branch
        %1021 = sbr.rel (%p1019) target = $region60
      $region59: #{event_painter_forward.13} parent=55 // pred_region
        %p1022 = scmp.lt.s32.totalorder %s19, 1
        %s1023 = scalar_select %p1022, %s19, 1
        %s1024 = smul.addr %s1023, 2
        %s1025 = smul.addr %s1024, 4
        %s1026 = scalar_lea.vmem %s7, %s1025
      $region60: #{event_painter_forward.13} parent=55 // pred_fallthru
        _
    $region56: #{event_painter_forward.13} parent=5 // pred_fallthru
      _
  $region6: #{event_painter_forward.13} parent=0 // loop_footer
    %s17 = sadd.s32 1, %s13
  $region7: #{event_painter_forward.13} parent=0 // loop_footer_branch
    %12 = sbr.rel target = $region3
  $region8: #{event_painter_forward.13} parent=0 // loop_exit
    _

// kernel: event_painter_forward.18
$region0: #{event_painter_forward.18}
  #allocation0 [shape = 'u32[]', space=smem, size = 0x4, offset = 0x4, fixed_abs, tag = 'smem constant byte address 0x4 - core index']
  #allocation1 [shape = 'u32[144,128]{1,0:T(1,128)}', space=vmem, size = 0x12000, scoped, tag = 'internal scratch']
  #allocation2 [shape = 'f32[8,32]{1,0:T(8,128)}', space=vmem, size = 0x1000, scoped, tag = 'scratch operand']
  %s0 = inlined_call_operand.vmem [shape: bf16[2,8,32], index: 0, kind: input, shape index: {}]
  %s1 = inlined_call_operand.vmem [shape: bf16[32,96], index: 1, kind: input, shape index: {}]
  %s2 = inlined_call_operand.vmem [shape: f32[1,96], index: 2, kind: input, shape index: {}]
  %s3 = inlined_call_operand.vmem [shape: bf16[32,32], index: 3, kind: input, shape index: {}]
  %s4 = inlined_call_operand.vmem [shape: f32[1,32], index: 4, kind: input, shape index: {}]
  %s5 = inlined_call_operand.vmem [shape: f32[1,32], index: 5, kind: input, shape index: {}]
  %s6 = inlined_call_operand.vmem [shape: f32[1,32], index: 6, kind: input, shape index: {}]
  %s7 = inlined_call_operand.vmem [shape: bf16[2,8,32], index: 7, kind: output, shape index: {}]
  %s8 = sld [smem:[#allocation0]]
  $region61: #{event_painter_forward.18} parent=0
    _
  %s10 = ssub.s32 1, %s8
  %s11 = scalar_select 0, %s10, %s8
  loop: start=0, step=1, limit=4
  $region2: #{event_painter_forward.18} parent=0 // loop_pre_header
    _
  $region3: #{event_painter_forward.18} parent=0 // loop_header
    %s13 = sphi 0, %s17
    %p14 = scmp.ge.s32.totalorder %s13, 4
    %s23 = sphi 0, %s25
    %s26 = sphi 0, %s23
    %s27 = sphi 0, %s26
    %s43 = sphi 0, %s27
    %s47 = sphi 0, %s47
    %s49 = sphi 0, %s47
    %s50 = sphi 0, %s49
    %s64 = sphi 0, %s50
    %s68 = sphi 0, %s68
    %s70 = sphi 0, %s68
    %s71 = sphi 0, %s70
    %s85 = sphi 0, %s71
    %s89 = sphi 0, %s89
    %s91 = sphi 0, %s89
    %s92 = sphi 0, %s91
    %s106 = sphi 0, %s92
    %s110 = sphi 0, %s110
    %s112 = sphi 0, %s110
    %s113 = sphi 0, %s112
    %s127 = sphi 0, %s113
    %s131 = sphi 0, %s131
    %s133 = sphi 0, %s131
    %s134 = sphi 0, %s133
    %s148 = sphi 0, %s134
    %s152 = sphi 0, %s152
    %s154 = sphi 0, %s152
    %s155 = sphi 0, %s154
    %s169 = sphi 0, %s155
    %s175 = sphi 0, %s177
    %s178 = sphi 0, %s175
    %s179 = sphi 0, %s178
    %s195 = sphi 0, %s179
  $region4: #{event_painter_forward.18} parent=0 // loop_header_branch
    %16 = sbr.rel (%p14) target = $region8
  $region5: #{event_painter_forward.18} parent=0 // loop_body
    %s18 = ssub.s32 %s13, 1
    %s19 = ssub.s32 %s13, 2
    %s20 = sadd.s32 %s13, 1
    %s21 = ssub.s32 %s13, %s20
    %p22 = scmp.eq.s32.totalorder %s21, 0
    %s24 = sadd.s32 %s23, 1
    %s25 = scalar_select %p22, %s23, %s24
    %p28 = pneg %p22
    %p29 = scmp.eq.s32.totalorder %s13, 1
    %p30 = por %p28, %p29
    %p31 = scmp.ne.s32.totalorder %s23, %s26
    %p32 = scmp.eq.s32.totalorder %s13, 0
    %p33 = por %p31, %p32
    %p34 = scmp.ne.s32.totalorder %s23, %s26
    %p35 = scmp.eq.s32.totalorder %s18, 1
    %p36 = por %p34, %p35
    %p37 = scmp.ne.s32.totalorder %s26, %s27
    %p38 = scmp.eq.s32.totalorder %s18, 0
    %p39 = por %p37, %p38
    %p40 = scmp.ne.s32.totalorder %s26, %s27
    %p41 = scmp.eq.s32.totalorder %s19, 1
    %p42 = por %p40, %p41
    %p44 = scmp.ne.s32.totalorder %s27, %s43
    %p45 = scmp.eq.s32.totalorder %s19, 0
    %p46 = por %p44, %p45
    %s48 = sadd.s32 %s47, 1
    %p51 = scmp.eq.s32.totalorder %s13, 1
    %p52 = scmp.ne.s32.totalorder %s47, %s49
    %p53 = scmp.eq.s32.totalorder %s13, 0
    %p54 = por %p52, %p53
    %p55 = scmp.ne.s32.totalorder %s47, %s49
    %p56 = scmp.eq.s32.totalorder %s18, 1
    %p57 = por %p55, %p56
    %p58 = scmp.ne.s32.totalorder %s49, %s50
    %p59 = scmp.eq.s32.totalorder %s18, 0
    %p60 = por %p58, %p59
    %p61 = scmp.ne.s32.totalorder %s49, %s50
    %p62 = scmp.eq.s32.totalorder %s19, 1
    %p63 = por %p61, %p62
    %p65 = scmp.ne.s32.totalorder %s50, %s64
    %p66 = scmp.eq.s32.totalorder %s19, 0
    %p67 = por %p65, %p66
    %s69 = sadd.s32 %s68, 1
    %p72 = scmp.eq.s32.totalorder %s13, 1
    %p73 = scmp.ne.s32.totalorder %s68, %s70
    %p74 = scmp.eq.s32.totalorder %s13, 0
    %p75 = por %p73, %p74
    %p76 = scmp.ne.s32.totalorder %s68, %s70
    %p77 = scmp.eq.s32.totalorder %s18, 1
    %p78 = por %p76, %p77
    %p79 = scmp.ne.s32.totalorder %s70, %s71
    %p80 = scmp.eq.s32.totalorder %s18, 0
    %p81 = por %p79, %p80
    %p82 = scmp.ne.s32.totalorder %s70, %s71
    %p83 = scmp.eq.s32.totalorder %s19, 1
    %p84 = por %p82, %p83
    %p86 = scmp.ne.s32.totalorder %s71, %s85
    %p87 = scmp.eq.s32.totalorder %s19, 0
    %p88 = por %p86, %p87
    %s90 = sadd.s32 %s89, 1
    %p93 = scmp.eq.s32.totalorder %s13, 1
    %p94 = scmp.ne.s32.totalorder %s89, %s91
    %p95 = scmp.eq.s32.totalorder %s13, 0
    %p96 = por %p94, %p95
    %p97 = scmp.ne.s32.totalorder %s89, %s91
    %p98 = scmp.eq.s32.totalorder %s18, 1
    %p99 = por %p97, %p98
    %p100 = scmp.ne.s32.totalorder %s91, %s92
    %p101 = scmp.eq.s32.totalorder %s18, 0
    %p102 = por %p100, %p101
    %p103 = scmp.ne.s32.totalorder %s91, %s92
    %p104 = scmp.eq.s32.totalorder %s19, 1
    %p105 = por %p103, %p104
    %p107 = scmp.ne.s32.totalorder %s92, %s106
    %p108 = scmp.eq.s32.totalorder %s19, 0
    %p109 = por %p107, %p108
    %s111 = sadd.s32 %s110, 1
    %p114 = scmp.eq.s32.totalorder %s13, 1
    %p115 = scmp.ne.s32.totalorder %s110, %s112
    %p116 = scmp.eq.s32.totalorder %s13, 0
    %p117 = por %p115, %p116
    %p118 = scmp.ne.s32.totalorder %s110, %s112
    %p119 = scmp.eq.s32.totalorder %s18, 1
    %p120 = por %p118, %p119
    %p121 = scmp.ne.s32.totalorder %s112, %s113
    %p122 = scmp.eq.s32.totalorder %s18, 0
    %p123 = por %p121, %p122
    %p124 = scmp.ne.s32.totalorder %s112, %s113
    %p125 = scmp.eq.s32.totalorder %s19, 1
    %p126 = por %p124, %p125
    %p128 = scmp.ne.s32.totalorder %s113, %s127
    %p129 = scmp.eq.s32.totalorder %s19, 0
    %p130 = por %p128, %p129
    %s132 = sadd.s32 %s131, 1
    %p135 = scmp.eq.s32.totalorder %s13, 1
    %p136 = scmp.ne.s32.totalorder %s131, %s133
    %p137 = scmp.eq.s32.totalorder %s13, 0
    %p138 = por %p136, %p137
    %p139 = scmp.ne.s32.totalorder %s131, %s133
    %p140 = scmp.eq.s32.totalorder %s18, 1
    %p141 = por %p139, %p140
    %p142 = scmp.ne.s32.totalorder %s133, %s134
    %p143 = scmp.eq.s32.totalorder %s18, 0
    %p144 = por %p142, %p143
    %p145 = scmp.ne.s32.totalorder %s133, %s134
    %p146 = scmp.eq.s32.totalorder %s19, 1
    %p147 = por %p145, %p146
    %p149 = scmp.ne.s32.totalorder %s134, %s148
    %p150 = scmp.eq.s32.totalorder %s19, 0
    %p151 = por %p149, %p150
    %s153 = sadd.s32 %s152, 1
    %p156 = scmp.eq.s32.totalorder %s13, 1
    %p157 = scmp.ne.s32.totalorder %s152, %s154
    %p158 = scmp.eq.s32.totalorder %s13, 0
    %p159 = por %p157, %p158
    %p160 = scmp.ne.s32.totalorder %s152, %s154
    %p161 = scmp.eq.s32.totalorder %s18, 1
    %p162 = por %p160, %p161
    %p163 = scmp.ne.s32.totalorder %s154, %s155
    %p164 = scmp.eq.s32.totalorder %s18, 0
    %p165 = por %p163, %p164
    %p166 = scmp.ne.s32.totalorder %s154, %s155
    %p167 = scmp.eq.s32.totalorder %s19, 1
    %p168 = por %p166, %p167
    %p170 = scmp.ne.s32.totalorder %s155, %s169
    %p171 = scmp.eq.s32.totalorder %s19, 0
    %p172 = por %p170, %p171
    %s173 = ssub.s32 %s13, %s20
    %p174 = scmp.eq.s32.totalorder %s173, 0
    %s176 = sadd.s32 %s175, 1
    %s177 = scalar_select %p174, %s175, %s176
    %p180 = pneg %p174
    %p181 = scmp.eq.s32.totalorder %s13, 1
    %p182 = por %p180, %p181
    %p183 = scmp.ne.s32.totalorder %s175, %s178
    %p184 = scmp.eq.s32.totalorder %s13, 0
    %p185 = por %p183, %p184
    %p186 = scmp.ne.s32.totalorder %s175, %s178
    %p187 = scmp.eq.s32.totalorder %s18, 1
    %p188 = por %p186, %p187
    %p189 = scmp.ne.s32.totalorder %s178, %s179
    %p190 = scmp.eq.s32.totalorder %s18, 0
    %p191 = por %p189, %p190
    %p192 = scmp.ne.s32.totalorder %s178, %s179
    %p193 = scmp.eq.s32.totalorder %s19, 1
    %p194 = por %p192, %p193
    %p196 = scmp.ne.s32.totalorder %s179, %s195
    %p197 = scmp.eq.s32.totalorder %s19, 0
    %p198 = por %p196, %p197
    %p199 = scmp.le.s32.totalorder 1, %s13
    %p200 = scmp.lt.s32.totalorder %s13, 3
    %p201 = pnand %p199, %p200
    %p202 = pneg %p201
    // Predicated region
    $region9: #{event_painter_forward.18} parent=5 // pred_check
      _
    $region10: #{event_painter_forward.18} parent=5 // pred_check_branch
      %204 = sbr.rel (%p201) target = $region12
    $region11: #{event_painter_forward.18} parent=5 // pred_region
      %s205 = ssub.s32 %s13, 1
      // Predicated region
      $region13: #{event_painter_forward.18} parent=11 // pred_check
        %p206 = pneg %p60
      $region14: #{event_painter_forward.18} parent=11 // pred_check_branch
        %208 = sbr.rel (%p206) target = $region16
      $region15: #{event_painter_forward.18} parent=11 // pred_region
        _
      $region16: #{event_painter_forward.18} parent=11 // pred_fallthru
        _
      // Predicated region
      $region17: #{event_painter_forward.18} parent=11 // pred_check
        %p209 = pneg %p81
      $region18: #{event_painter_forward.18} parent=11 // pred_check_branch
        %211 = sbr.rel (%p209) target = $region20
      $region19: #{event_painter_forward.18} parent=11 // pred_region
        _
      $region20: #{event_painter_forward.18} parent=11 // pred_fallthru
        _
      // Predicated region
      $region21: #{event_painter_forward.18} parent=11 // pred_check
        %p212 = pneg %p102
      $region22: #{event_painter_forward.18} parent=11 // pred_check_branch
        %214 = sbr.rel (%p212) target = $region24
      $region23: #{event_painter_forward.18} parent=11 // pred_region
        _
      $region24: #{event_painter_forward.18} parent=11 // pred_fallthru
        _
      // Predicated region
      $region25: #{event_painter_forward.18} parent=11 // pred_check
        %p215 = pneg %p123
      $region26: #{event_painter_forward.18} parent=11 // pred_check_branch
        %217 = sbr.rel (%p215) target = $region28
      $region27: #{event_painter_forward.18} parent=11 // pred_region
        _
      $region28: #{event_painter_forward.18} parent=11 // pred_fallthru
        _
      // Predicated region
      $region29: #{event_painter_forward.18} parent=11 // pred_check
        %p218 = pneg %p144
      $region30: #{event_painter_forward.18} parent=11 // pred_check_branch
        %220 = sbr.rel (%p218) target = $region32
      $region31: #{event_painter_forward.18} parent=11 // pred_region
        _
      $region32: #{event_painter_forward.18} parent=11 // pred_fallthru
        _
      // Predicated region
      $region33: #{event_painter_forward.18} parent=11 // pred_check
        %p221 = pneg %p165
      $region34: #{event_painter_forward.18} parent=11 // pred_check_branch
        %223 = sbr.rel (%p221) target = $region36
      $region35: #{event_painter_forward.18} parent=11 // pred_region
        _
      $region36: #{event_painter_forward.18} parent=11 // pred_fallthru
        _
    $region12: #{event_painter_forward.18} parent=5 // pred_fallthru
      _
    %p224 = scmp.lt.s32.totalorder %s13, 2
    // Predicated region
    $region37: #{event_painter_forward.18} parent=5 // pred_check
      %p225 = pneg %p224
    $region38: #{event_painter_forward.18} parent=5 // pred_check_branch
      %227 = sbr.rel (%p225) target = $region40
    $region39: #{event_painter_forward.18} parent=5 // pred_region
      // Predicated region
      $region41: #{event_painter_forward.18} parent=39 // pred_check
        %p228 = pneg %p33
      $region42: #{event_painter_forward.18} parent=39 // pred_check_branch
        %230 = sbr.rel (%p228) target = $region44
      $region43: #{event_painter_forward.18} parent=39 // pred_region
        %p231 = scmp.lt.s32.totalorder %s13, 1
        %s232 = scalar_select %p231, %s13, 1
        %s233 = smul.addr %s232, 4
        %s234 = scalar_lea.vmem %s0, %s233
      $region44: #{event_painter_forward.18} parent=39 // pred_fallthru
        _
    $region40: #{event_painter_forward.18} parent=5 // pred_fallthru
      _
    %p235 = scmp.le.s32.totalorder 1, %s13
    %p236 = scmp.lt.s32.totalorder %s13, 3
    %p237 = pnand %p235, %p236
    %p238 = pneg %p237
    // Predicated region
    $region45: #{event_painter_forward.18} parent=5 // pred_check
      _
    $region46: #{event_painter_forward.18} parent=5 // pred_check_branch
      %240 = sbr.rel (%p237) target = $region48
    $region47: #{event_painter_forward.18} parent=5 // pred_region
      %s241 = ssub.s32 %s13, 1
      %p242 = scmp.lt.s32.totalorder %s18, 1
      %s243 = scalar_select %p242, %s18, 1
      %s244 = smul.addr %s243, 4
      %s245 = scalar_lea.vmem %s0, %s244
      %p246 = pneg %p39
      %p247 = pneg %p36
      %p248 = pneg %p60
      %p249 = pneg %p57
      %p250 = pneg %p81
      %p251 = pneg %p78
      %p252 = pneg %p102
      %p253 = pneg %p99
      %p254 = pneg %p123
      %p255 = pneg %p120
      %p256 = pneg %p144
      %p257 = pneg %p141
      %p258 = pneg %p165
      %p259 = pneg %p162
      %p260 = pneg %p191
      %p261 = pneg %p188
      %p262 = scmp.lt.s32.totalorder %s18, 1
      %s263 = scalar_select %p262, %s18, 1
      %s264 = smul.addr %s263, 4
      %s265 = scalar_lea.vmem %s7, %s264
      %p266 = scmp.lt.s32.totalorder %s18, 1
      %s267 = scalar_select %p266, %s18, 1
      %s268 = smul.addr %s267, 4
      %s269 = scalar_lea.vmem %s0, %s268
      %p270 = scmp.lt.s32.totalorder %s18, 1
      %s271 = scalar_select %p270, %s18, 1
      %s272 = smul.addr %s271, 4
      %s273 = scalar_lea.vmem %s7, %s272
      %v275 = vld [vmem:[%s269] sm:$0xf]
      %v276 = vld [vmem:[%s1] sm:$0xf]
      %v277 = vld [vmem:[%s1 + $0x4] sm:$0xf]
      %v278 = vld [vmem:[%s1 + $0x8] sm:$0xf]
      %v279 = vld [vmem:[%s1 + $0xc] sm:$0xf]
      %v280 = vld [vmem:[%s2] sm:$0x1]
      %v282 = vlaneseq
      %v283 = vshrl.u32 %v282, 7
      %v284 = vsub.s32 0, %v283
      %v285 = vrot.slane %v280, %v284
      %v291 = vunpack.c.l.b16 %v276
      %v292 = vunpack.c.l.b16 %v277
      %v293 = vunpack.c.l.b16 %v278
      %v294 = vunpack.c.l.b16 %v279
      %v295 = vpack.c.b16 %v292, %v291
      %v296 = vpack.c.b16 %v294, %v293
      %vm299 = vcmask 261120
      %v301 = vsel %vm299, %v275, 0
      %303 = vmatprep.subr.bf16.mxu0 0
      %304 = vmatpush1.bf16.msra.mxu0 0
      %305 = vmatprep.subr.bf16.mxu0 0
      %306 = vmatpush1.bf16.msra.mxu0 0
      %307 = vmatprep.subr.bf16.mxu0 0
      %308 = vmatpush1.bf16.msra.mxu0 0
      %309 = vmatprep.subr.bf16.mxu0 0
      %310 = vmatpush1.bf16.msra.mxu0 0
      %311 = vmatprep.subr.bf16.mxu0 0
      %312 = vmatpush1.bf16.msra.mxu0 0
      %313 = vmatprep.subr.bf16.mxu0 0
      %314 = vmatpush1.bf16.msra.mxu0 0
      %315 = vmatprep.subr.bf16.mxu0 0
      %316 = vmatpush1.bf16.msra.mxu0 %v296
      %317 = vmatprep.subr.bf16.mxu0 0
      %318 = vmatpush1.bf16.msra.mxu0 %v295
      %319 = vmatprep.subr.bf16.mxu0 0
      %320 = vmatpush2.bf16.msra.mxu0 0
      %321 = vmatprep.subr.bf16.mxu0 0
      %322 = vmatpush2.bf16.msra.mxu0 0
      %323 = vmatprep.subr.bf16.mxu0 0
      %324 = vmatpush2.bf16.msra.mxu0 0
      %325 = vmatprep.subr.bf16.mxu0 0
      %326 = vmatpush2.bf16.msra.mxu0 0
      %327 = vmatprep.subr.bf16.mxu0 0
      %328 = vmatpush2.bf16.msra.mxu0 0
      %329 = vmatprep.subr.bf16.mxu0 0
      %330 = vmatpush2.bf16.msra.mxu0 0
      %331 = vmatprep.subr.bf16.mxu0 0
      %332 = vmatpush2.bf16.msra.mxu0 0
      %333 = vmatprep.subr.bf16.mxu0 0
      %334 = vmatpush2.bf16.msra.mxu0 0
      %335 = vmatprep.mubr.bf16.mxu0 0
      %336 = vmatmul.mubr.bf16.gmra.mxu0 %v301
      %v337 = vpop.f32.mrf.mxu0
      %v338 = vadd.f32 %v285, %v337
      %v339 = vpop.f32.mrf.mxu0
      %v340 = vpop.f32.mrf.mxu0
      %v341 = vpop.f32.mrf.mxu0
      %342 = vdwg.mxu0
      %v343 = vpack.c.bf16 %v338, %v338
      %345 = vrot.lane.b32.xlu0 %v343, 96
      %v346 = vpop.permute.xlu0 %345
      %vm347 = vcmask 64512
      %v349 = vsel %vm347, %v343, 0
      %v352 = vsel %vm347, %v346, 0
      %354 = vmatprep.subr.bf16.mxu0 0
      %355 = vmatpush1.bf16.xpose.msra.mxu0 0
      %356 = vmatprep.subr.bf16.mxu0 0
      %357 = vmatpush1.bf16.xpose.msra.mxu0 0
      %358 = vmatprep.subr.bf16.mxu0 0
      %359 = vmatpush1.bf16.xpose.msra.mxu0 0
      %360 = vmatprep.subr.bf16.mxu0 0
      %361 = vmatpush1.bf16.xpose.msra.mxu0 0
      %362 = vmatprep.subr.bf16.mxu0 0
      %363 = vmatpush1.bf16.xpose.msra.mxu0 0
      %364 = vmatprep.subr.bf16.mxu0 0
      %365 = vmatpush1.bf16.xpose.msra.mxu0 0
      %366 = vmatprep.subr.bf16.mxu0 0
      %367 = vmatpush1.bf16.xpose.msra.mxu0 0
      %368 = vmatprep.subr.bf16.mxu0 0
      %369 = vmatpush1.bf16.xpose.msra.mxu0 %v352
      %370 = vmatprep.subr.bf16.mxu0 0
      %371 = vmatpush2.bf16.xpose.msra.mxu0 0
      %372 = vmatprep.subr.bf16.mxu0 0
      %373 = vmatpush2.bf16.xpose.msra.mxu0 0
      %374 = vmatprep.subr.bf16.mxu0 0
      %375 = vmatpush2.bf16.xpose.msra.mxu0 0
      %376 = vmatprep.subr.bf16.mxu0 0
      %377 = vmatpush2.bf16.xpose.msra.mxu0 0
      %378 = vmatprep.subr.bf16.mxu0 0
      %379 = vmatpush2.bf16.xpose.msra.mxu0 0
      %380 = vmatprep.subr.bf16.mxu0 0
      %381 = vmatpush2.bf16.xpose.msra.mxu0 0
      %382 = vmatprep.subr.bf16.mxu0 0
      %383 = vmatpush2.bf16.xpose.msra.mxu0 0
      %384 = vmatprep.subr.bf16.mxu0 0
      %385 = vmatpush2.bf16.xpose.msra.mxu0 0
      %386 = vmatprep.mubr.bf16.mxu0 0
      %387 = vmatmul.mubr.bf16.gmra.mxu0 %v349
      %v388 = vpop.f32.mrf.mxu0
      %v389 = vadd.f32 0.0, %v388
      %v390 = vpop.f32.mrf.mxu0
      %v391 = vpop.f32.mrf.mxu0
      %v392 = vpop.f32.mrf.mxu0
      %393 = vdwg.mxu0
      %v394 = vsel %vm347, %v389, -inf
      %395 = vmax.xlane.f32.xlu0 %v394
      %v396 = vpop.xlane.xlu0 %395
      %v397 = vsub.f32 %v389, %v396
      %v398 = vmul.f32 %v397, 1.442695
      %v399 = vpow.pop %v398
      %v400 = vsel %vm347, %v399, 0.0
      %401 = vadd.xlane.f32.xlu0 %v400
      %v402 = vpop.xlane.xlu0 %401
      %v403 = vpack.c.bf16 %v399, %v399
      %404 = vrot.lane.b32.xlu0 %v343, 64
      %v405 = vpop.permute.xlu0 %404
      %v407 = vsel %vm347, %v403, 0
      %vm409 = vcmask 1043456
      %v411 = vsel %vm409, %v405, 0
      %413 = vmatprep.subr.bf16.mxu0 0
      %414 = vmatpush1.bf16.msra.mxu0 0
      %415 = vmatprep.subr.bf16.mxu0 0
      %416 = vmatpush1.bf16.msra.mxu0 0
      %417 = vmatprep.subr.bf16.mxu0 0
      %418 = vmatpush1.bf16.msra.mxu0 0
      %419 = vmatprep.subr.bf16.mxu0 0
      %420 = vmatpush1.bf16.msra.mxu0 0
      %421 = vmatprep.subr.bf16.mxu0 0
      %422 = vmatpush1.bf16.msra.mxu0 0
      %423 = vmatprep.subr.bf16.mxu0 0
      %424 = vmatpush1.bf16.msra.mxu0 0
      %425 = vmatprep.subr.bf16.mxu0 0
      %426 = vmatpush1.bf16.msra.mxu0 0
      %427 = vmatprep.subr.bf16.mxu0 0
      %428 = vmatpush1.bf16.msra.mxu0 %v411
      %429 = vmatprep.subr.bf16.mxu0 0
      %430 = vmatpush2.bf16.msra.mxu0 0
      %431 = vmatprep.subr.bf16.mxu0 0
      %432 = vmatpush2.bf16.msra.mxu0 0
      %433 = vmatprep.subr.bf16.mxu0 0
      %434 = vmatpush2.bf16.msra.mxu0 0
      %435 = vmatprep.subr.bf16.mxu0 0
      %436 = vmatpush2.bf16.msra.mxu0 0
      %437 = vmatprep.subr.bf16.mxu0 0
      %438 = vmatpush2.bf16.msra.mxu0 0
      %439 = vmatprep.subr.bf16.mxu0 0
      %440 = vmatpush2.bf16.msra.mxu0 0
      %441 = vmatprep.subr.bf16.mxu0 0
      %442 = vmatpush2.bf16.msra.mxu0 0
      %443 = vmatprep.subr.bf16.mxu0 0
      %444 = vmatpush2.bf16.msra.mxu0 0
      %445 = vmatprep.mubr.bf16.mxu0 0
      %446 = vmatmul.mubr.bf16.gmra.mxu0 %v407
      %v447 = vpop.f32.mrf.mxu0
      %v448 = vadd.f32 0.0, %v447
      %v449 = vpop.f32.mrf.mxu0
      %v450 = vpop.f32.mrf.mxu0
      %v451 = vpop.f32.mrf.mxu0
      %452 = vdwg.mxu0
      %v453 = vrcp.pop %v402
      %v454 = vmul.f32 %v448, %v453
      %455 = vst.msk [vmem:[#allocation2] sm:$0xff] %vm347, %v454
      %456 = vrot.lane.b32.xlu0 %v343, 120
      %v457 = vpop.permute.xlu0 %456
      %458 = vrot.lane.b32.xlu0 %v343, 88
      %v459 = vpop.permute.xlu0 %458
      %v461 = vsel %vm347, %v457, 0
      %v464 = vsel %vm347, %v459, 0
      %466 = vmatprep.subr.bf16.mxu0 0
      %467 = vmatpush1.bf16.xpose.msra.mxu0 0
      %468 = vmatprep.subr.bf16.mxu0 0
      %469 = vmatpush1.bf16.xpose.msra.mxu0 0
      %470 = vmatprep.subr.bf16.mxu0 0
      %471 = vmatpush1.bf16.xpose.msra.mxu0 0
      %472 = vmatprep.subr.bf16.mxu0 0
      %473 = vmatpush1.bf16.xpose.msra.mxu0 0
      %474 = vmatprep.subr.bf16.mxu0 0
      %475 = vmatpush1.bf16.xpose.msra.mxu0 0
      %476 = vmatprep.subr.bf16.mxu0 0
      %477 = vmatpush1.bf16.xpose.msra.mxu0 0
      %478 = vmatprep.subr.bf16.mxu0 0
      %479 = vmatpush1.bf16.xpose.msra.mxu0 0
      %480 = vmatprep.subr.bf16.mxu0 0
      %481 = vmatpush1.bf16.xpose.msra.mxu0 %v464
      %482 = vmatprep.subr.bf16.mxu0 0
      %483 = vmatpush2.bf16.xpose.msra.mxu0 0
      %484 = vmatprep.subr.bf16.mxu0 0
      %485 = vmatpush2.bf16.xpose.msra.mxu0 0
      %486 = vmatprep.subr.bf16.mxu0 0
      %487 = vmatpush2.bf16.xpose.msra.mxu0 0
      %488 = vmatprep.subr.bf16.mxu0 0
      %489 = vmatpush2.bf16.xpose.msra.mxu0 0
      %490 = vmatprep.subr.bf16.mxu0 0
      %491 = vmatpush2.bf16.xpose.msra.mxu0 0
      %492 = vmatprep.subr.bf16.mxu0 0
      %493 = vmatpush2.bf16.xpose.msra.mxu0 0
      %494 = vmatprep.subr.bf16.mxu0 0
      %495 = vmatpush2.bf16.xpose.msra.mxu0 0
      %496 = vmatprep.subr.bf16.mxu0 0
      %497 = vmatpush2.bf16.xpose.msra.mxu0 0
      %498 = vmatprep.mubr.bf16.mxu0 0
      %499 = vmatmul.mubr.bf16.gmra.mxu0 %v461
      %v500 = vpop.f32.mrf.mxu0
      %v501 = vadd.f32 0.0, %v500
      %v502 = vpop.f32.mrf.mxu0
      %v503 = vpop.f32.mrf.mxu0
      %v504 = vpop.f32.mrf.mxu0
      %505 = vdwg.mxu0
      %v506 = vsel %vm347, %v501, -inf
      %507 = vmax.xlane.f32.xlu0 %v506
      %v508 = vpop.xlane.xlu0 %507
      %v509 = vsub.f32 %v501, %v508
      %v510 = vmul.f32 %v509, 1.442695
      %v511 = vpow.pop %v510
      %v512 = vsel %vm347, %v511, 0.0
      %513 = vadd.xlane.f32.xlu0 %v512
      %v514 = vpop.xlane.xlu0 %513
      %v515 = vpack.c.bf16 %v511, %v511
      %516 = vrot.lane.b32.xlu0 %v343, 56
      %v517 = vpop.permute.xlu0 %516
      %v519 = vsel %vm347, %v515, 0
      %v522 = vsel %vm409, %v517, 0
      %524 = vmatprep.subr.bf16.mxu0 0
      %525 = vmatpush1.bf16.msra.mxu0 0
      %526 = vmatprep.subr.bf16.mxu0 0
      %527 = vmatpush1.bf16.msra.mxu0 0
      %528 = vmatprep.subr.bf16.mxu0 0
      %529 = vmatpush1.bf16.msra.mxu0 0
      %530 = vmatprep.subr.bf16.mxu0 0
      %531 = vmatpush1.bf16.msra.mxu0 0
      %532 = vmatprep.subr.bf16.mxu0 0
      %533 = vmatpush1.bf16.msra.mxu0 0
      %534 = vmatprep.subr.bf16.mxu0 0
      %535 = vmatpush1.bf16.msra.mxu0 0
      %536 = vmatprep.subr.bf16.mxu0 0
      %537 = vmatpush1.bf16.msra.mxu0 0
      %538 = vmatprep.subr.bf16.mxu0 0
      %539 = vmatpush1.bf16.msra.mxu0 %v522
      %540 = vmatprep.subr.bf16.mxu0 0
      %541 = vmatpush2.bf16.msra.mxu0 0
      %542 = vmatprep.subr.bf16.mxu0 0
      %543 = vmatpush2.bf16.msra.mxu0 0
      %544 = vmatprep.subr.bf16.mxu0 0
      %545 = vmatpush2.bf16.msra.mxu0 0
      %546 = vmatprep.subr.bf16.mxu0 0
      %547 = vmatpush2.bf16.msra.mxu0 0
      %548 = vmatprep.subr.bf16.mxu0 0
      %549 = vmatpush2.bf16.msra.mxu0 0
      %550 = vmatprep.subr.bf16.mxu0 0
      %551 = vmatpush2.bf16.msra.mxu0 0
      %552 = vmatprep.subr.bf16.mxu0 0
      %553 = vmatpush2.bf16.msra.mxu0 0
      %554 = vmatprep.subr.bf16.mxu0 0
      %555 = vmatpush2.bf16.msra.mxu0 0
      %556 = vmatprep.mubr.bf16.mxu0 0
      %557 = vmatmul.mubr.bf16.gmra.mxu0 %v519
      %v558 = vpop.f32.mrf.mxu0
      %v559 = vadd.f32 0.0, %v558
      %v560 = vpop.f32.mrf.mxu0
      %v561 = vpop.f32.mrf.mxu0
      %v562 = vpop.f32.mrf.mxu0
      %563 = vdwg.mxu0
      %v564 = vrcp.pop %v514
      %v565 = vmul.f32 %v559, %v564
      %567 = vrot.lane.b32.xlu0 %v565, 8
      %v568 = vpop.permute.xlu0 %567
      %vm570 = vcmask 130112
      %571 = vst.msk [vmem:[#allocation2] sm:$0xff] %vm570, %v568
      %572 = vrot.lane.b32.xlu0 %v343, 112
      %v573 = vpop.permute.xlu0 %572
      %574 = vrot.lane.b32.xlu0 %v343, 80
      %v575 = vpop.permute.xlu0 %574
      %v577 = vsel %vm347, %v573, 0
      %v580 = vsel %vm347, %v575, 0
      %582 = vmatprep.subr.bf16.mxu0 0
      %583 = vmatpush1.bf16.xpose.msra.mxu0 0
      %584 = vmatprep.subr.bf16.mxu0 0
      %585 = vmatpush1.bf16.xpose.msra.mxu0 0
      %586 = vmatprep.subr.bf16.mxu0 0
      %587 = vmatpush1.bf16.xpose.msra.mxu0 0
      %588 = vmatprep.subr.bf16.mxu0 0
      %589 = vmatpush1.bf16.xpose.msra.mxu0 0
      %590 = vmatprep.subr.bf16.mxu0 0
      %591 = vmatpush1.bf16.xpose.msra.mxu0 0
      %592 = vmatprep.subr.bf16.mxu0 0
      %593 = vmatpush1.bf16.xpose.msra.mxu0 0
      %594 = vmatprep.subr.bf16.mxu0 0
      %595 = vmatpush1.bf16.xpose.msra.mxu0 0
      %596 = vmatprep.subr.bf16.mxu0 0
      %597 = vmatpush1.bf16.xpose.msra.mxu0 %v580
      %598 = vmatprep.subr.bf16.mxu0 0
      %599 = vmatpush2.bf16.xpose.msra.mxu0 0
      %600 = vmatprep.subr.bf16.mxu0 0
      %601 = vmatpush2.bf16.xpose.msra.mxu0 0
      %602 = vmatprep.subr.bf16.mxu0 0
      %603 = vmatpush2.bf16.xpose.msra.mxu0 0
      %604 = vmatprep.subr.bf16.mxu0 0
      %605 = vmatpush2.bf16.xpose.msra.mxu0 0
      %606 = vmatprep.subr.bf16.mxu0 0
      %607 = vmatpush2.bf16.xpose.msra.mxu0 0
      %608 = vmatprep.subr.bf16.mxu0 0
      %609 = vmatpush2.bf16.xpose.msra.mxu0 0
      %610 = vmatprep.subr.bf16.mxu0 0
      %611 = vmatpush2.bf16.xpose.msra.mxu0 0
      %612 = vmatprep.subr.bf16.mxu0 0
      %613 = vmatpush2.bf16.xpose.msra.mxu0 0
      %614 = vmatprep.mubr.bf16.mxu0 0
      %615 = vmatmul.mubr.bf16.gmra.mxu0 %v577
      %v616 = vpop.f32.mrf.mxu0
      %v617 = vadd.f32 0.0, %v616
      %v618 = vpop.f32.mrf.mxu0
      %v619 = vpop.f32.mrf.mxu0
      %v620 = vpop.f32.mrf.mxu0
      %621 = vdwg.mxu0
      %v622 = vsel %vm347, %v617, -inf
      %623 = vmax.xlane.f32.xlu0 %v622
      %v624 = vpop.xlane.xlu0 %623
      %v625 = vsub.f32 %v617, %v624
      %v626 = vmul.f32 %v625, 1.442695
      %v627 = vpow.pop %v626
      %v628 = vsel %vm347, %v627, 0.0
      %629 = vadd.xlane.f32.xlu0 %v628
      %v630 = vpop.xlane.xlu0 %629
      %v631 = vpack.c.bf16 %v627, %v627
      %632 = vrot.lane.b32.xlu0 %v343, 48
      %v633 = vpop.permute.xlu0 %632
      %v635 = vsel %vm347, %v631, 0
      %v638 = vsel %vm409, %v633, 0
      %640 = vmatprep.subr.bf16.mxu0 0
      %641 = vmatpush1.bf16.msra.mxu0 0
      %642 = vmatprep.subr.bf16.mxu0 0
      %643 = vmatpush1.bf16.msra.mxu0 0
      %644 = vmatprep.subr.bf16.mxu0 0
      %645 = vmatpush1.bf16.msra.mxu0 0
      %646 = vmatprep.subr.bf16.mxu0 0
      %647 = vmatpush1.bf16.msra.mxu0 0
      %648 = vmatprep.subr.bf16.mxu0 0
      %649 = vmatpush1.bf16.msra.mxu0 0
      %650 = vmatprep.subr.bf16.mxu0 0
      %651 = vmatpush1.bf16.msra.mxu0 0
      %652 = vmatprep.subr.bf16.mxu0 0
      %653 = vmatpush1.bf16.msra.mxu0 0
      %654 = vmatprep.subr.bf16.mxu0 0
      %655 = vmatpush1.bf16.msra.mxu0 %v638
      %656 = vmatprep.subr.bf16.mxu0 0
      %657 = vmatpush2.bf16.msra.mxu0 0
      %658 = vmatprep.subr.bf16.mxu0 0
      %659 = vmatpush2.bf16.msra.mxu0 0
      %660 = vmatprep.subr.bf16.mxu0 0
      %661 = vmatpush2.bf16.msra.mxu0 0
      %662 = vmatprep.subr.bf16.mxu0 0
      %663 = vmatpush2.bf16.msra.mxu0 0
      %664 = vmatprep.subr.bf16.mxu0 0
      %665 = vmatpush2.bf16.msra.mxu0 0
      %666 = vmatprep.subr.bf16.mxu0 0
      %667 = vmatpush2.bf16.msra.mxu0 0
      %668 = vmatprep.subr.bf16.mxu0 0
      %669 = vmatpush2.bf16.msra.mxu0 0
      %670 = vmatprep.subr.bf16.mxu0 0
      %671 = vmatpush2.bf16.msra.mxu0 0
      %672 = vmatprep.mubr.bf16.mxu0 0
      %673 = vmatmul.mubr.bf16.gmra.mxu0 %v635
      %v674 = vpop.f32.mrf.mxu0
      %v675 = vadd.f32 0.0, %v674
      %v676 = vpop.f32.mrf.mxu0
      %v677 = vpop.f32.mrf.mxu0
      %v678 = vpop.f32.mrf.mxu0
      %679 = vdwg.mxu0
      %v680 = vrcp.pop %v630
      %v681 = vmul.f32 %v675, %v680
      %683 = vrot.lane.b32.xlu0 %v681, 16
      %v684 = vpop.permute.xlu0 %683
      %vm686 = vcmask 195712
      %687 = vst.msk [vmem:[#allocation2] sm:$0xff] %vm686, %v684
      %688 = vrot.lane.b32.xlu0 %v343, 104
      %v689 = vpop.permute.xlu0 %688
      %690 = vrot.lane.b32.xlu0 %v343, 72
      %v691 = vpop.permute.xlu0 %690
      %v693 = vsel %vm347, %v689, 0
      %v696 = vsel %vm347, %v691, 0
      %698 = vmatprep.subr.bf16.mxu0 0
      %699 = vmatpush1.bf16.xpose.msra.mxu0 0
      %700 = vmatprep.subr.bf16.mxu0 0
      %701 = vmatpush1.bf16.xpose.msra.mxu0 0
      %702 = vmatprep.subr.bf16.mxu0 0
      %703 = vmatpush1.bf16.xpose.msra.mxu0 0
      %704 = vmatprep.subr.bf16.mxu0 0
      %705 = vmatpush1.bf16.xpose.msra.mxu0 0
      %706 = vmatprep.subr.bf16.mxu0 0
      %707 = vmatpush1.bf16.xpose.msra.mxu0 0
      %708 = vmatprep.subr.bf16.mxu0 0
      %709 = vmatpush1.bf16.xpose.msra.mxu0 0
      %710 = vmatprep.subr.bf16.mxu0 0
      %711 = vmatpush1.bf16.xpose.msra.mxu0 0
      %712 = vmatprep.subr.bf16.mxu0 0
      %713 = vmatpush1.bf16.xpose.msra.mxu0 %v696
      %714 = vmatprep.subr.bf16.mxu0 0
      %715 = vmatpush2.bf16.xpose.msra.mxu0 0
      %716 = vmatprep.subr.bf16.mxu0 0
      %717 = vmatpush2.bf16.xpose.msra.mxu0 0
      %718 = vmatprep.subr.bf16.mxu0 0
      %719 = vmatpush2.bf16.xpose.msra.mxu0 0
      %720 = vmatprep.subr.bf16.mxu0 0
      %721 = vmatpush2.bf16.xpose.msra.mxu0 0
      %722 = vmatprep.subr.bf16.mxu0 0
      %723 = vmatpush2.bf16.xpose.msra.mxu0 0
      %724 = vmatprep.subr.bf16.mxu0 0
      %725 = vmatpush2.bf16.xpose.msra.mxu0 0
      %726 = vmatprep.subr.bf16.mxu0 0
      %727 = vmatpush2.bf16.xpose.msra.mxu0 0
      %728 = vmatprep.subr.bf16.mxu0 0
      %729 = vmatpush2.bf16.xpose.msra.mxu0 0
      %730 = vmatprep.mubr.bf16.mxu0 0
      %731 = vmatmul.mubr.bf16.gmra.mxu0 %v693
      %v732 = vpop.f32.mrf.mxu0
      %v733 = vadd.f32 0.0, %v732
      %v734 = vpop.f32.mrf.mxu0
      %v735 = vpop.f32.mrf.mxu0
      %v736 = vpop.f32.mrf.mxu0
      %737 = vdwg.mxu0
      %v738 = vsel %vm347, %v733, -inf
      %739 = vmax.xlane.f32.xlu0 %v738
      %v740 = vpop.xlane.xlu0 %739
      %v741 = vsub.f32 %v733, %v740
      %v742 = vmul.f32 %v741, 1.442695
      %v743 = vpow.pop %v742
      %v744 = vsel %vm347, %v743, 0.0
      %745 = vadd.xlane.f32.xlu0 %v744
      %v746 = vpop.xlane.xlu0 %745
      %v747 = vpack.c.bf16 %v743, %v743
      %748 = vrot.lane.b32.xlu0 %v343, 40
      %v749 = vpop.permute.xlu0 %748
      %v751 = vsel %vm347, %v747, 0
      %v754 = vsel %vm409, %v749, 0
      %756 = vmatprep.subr.bf16.mxu0 0
      %757 = vmatpush1.bf16.msra.mxu0 0
      %758 = vmatprep.subr.bf16.mxu0 0
      %759 = vmatpush1.bf16.msra.mxu0 0
      %760 = vmatprep.subr.bf16.mxu0 0
      %761 = vmatpush1.bf16.msra.mxu0 0
      %762 = vmatprep.subr.bf16.mxu0 0
      %763 = vmatpush1.bf16.msra.mxu0 0
      %764 = vmatprep.subr.bf16.mxu0 0
      %765 = vmatpush1.bf16.msra.mxu0 0
      %766 = vmatprep.subr.bf16.mxu0 0
      %767 = vmatpush1.bf16.msra.mxu0 0
      %768 = vmatprep.subr.bf16.mxu0 0
      %769 = vmatpush1.bf16.msra.mxu0 0
      %770 = vmatprep.subr.bf16.mxu0 0
      %771 = vmatpush1.bf16.msra.mxu0 %v754
      %772 = vmatprep.subr.bf16.mxu0 0
      %773 = vmatpush2.bf16.msra.mxu0 0
      %774 = vmatprep.subr.bf16.mxu0 0
      %775 = vmatpush2.bf16.msra.mxu0 0
      %776 = vmatprep.subr.bf16.mxu0 0
      %777 = vmatpush2.bf16.msra.mxu0 0
      %778 = vmatprep.subr.bf16.mxu0 0
      %779 = vmatpush2.bf16.msra.mxu0 0
      %780 = vmatprep.subr.bf16.mxu0 0
      %781 = vmatpush2.bf16.msra.mxu0 0
      %782 = vmatprep.subr.bf16.mxu0 0
      %783 = vmatpush2.bf16.msra.mxu0 0
      %784 = vmatprep.subr.bf16.mxu0 0
      %785 = vmatpush2.bf16.msra.mxu0 0
      %786 = vmatprep.subr.bf16.mxu0 0
      %787 = vmatpush2.bf16.msra.mxu0 0
      %788 = vmatprep.mubr.bf16.mxu0 0
      %789 = vmatmul.mubr.bf16.gmra.mxu0 %v751
      %v790 = vpop.f32.mrf.mxu0
      %v791 = vadd.f32 0.0, %v790
      %v792 = vpop.f32.mrf.mxu0
      %v793 = vpop.f32.mrf.mxu0
      %v794 = vpop.f32.mrf.mxu0
      %795 = vdwg.mxu0
      %v796 = vrcp.pop %v746
      %v797 = vmul.f32 %v791, %v796
      %799 = vrot.lane.b32.xlu0 %v797, 24
      %v800 = vpop.permute.xlu0 %799
      %vm802 = vcmask 261312
      %803 = vst.msk [vmem:[#allocation2] sm:$0xff] %vm802, %v800
      %v804 = vld [vmem:[#allocation2] sm:$0xff]
      %v805 = vpack.c.bf16 %v804, %v804
      %v806 = vld [vmem:[%s3] sm:$0xf]
      %v807 = vld [vmem:[%s3 + $0x4] sm:$0xf]
      %v808 = vld [vmem:[%s3 + $0x8] sm:$0xf]
      %v809 = vld [vmem:[%s3 + $0xc] sm:$0xf]
      %v810 = vld [vmem:[%s4] sm:$0x1]
      %v812 = vlaneseq
      %v813 = vshrl.u32 %v812, 7
      %v814 = vsub.s32 0, %v813
      %v815 = vrot.slane %v810, %v814
      %v821 = vunpack.c.l.b16 %v806
      %v822 = vunpack.c.l.b16 %v807
      %v823 = vunpack.c.l.b16 %v808
      %v824 = vunpack.c.l.b16 %v809
      %v825 = vpack.c.b16 %v822, %v821
      %v826 = vpack.c.b16 %v824, %v823
      %v830 = vsel %vm299, %v805, 0
      %832 = vmatprep.subr.bf16.mxu0 0
      %833 = vmatpush1.bf16.msra.mxu0 0
      %834 = vmatprep.subr.bf16.mxu0 0
      %835 = vmatpush1.bf16.msra.mxu0 0
      %836 = vmatprep.subr.bf16.mxu0 0
      %837 = vmatpush1.bf16.msra.mxu0 0
      %838 = vmatprep.subr.bf16.mxu0 0
      %839 = vmatpush1.bf16.msra.mxu0 0
      %840 = vmatprep.subr.bf16.mxu0 0
      %841 = vmatpush1.bf16.msra.mxu0 0
      %842 = vmatprep.subr.bf16.mxu0 0
      %843 = vmatpush1.bf16.msra.mxu0 0
      %844 = vmatprep.subr.bf16.mxu0 0
      %845 = vmatpush1.bf16.msra.mxu0 %v826
      %846 = vmatprep.subr.bf16.mxu0 0
      %847 = vmatpush1.bf16.msra.mxu0 %v825
      %848 = vmatprep.subr.bf16.mxu0 0
      %849 = vmatpush2.bf16.msra.mxu0 0
      %850 = vmatprep.subr.bf16.mxu0 0
      %851 = vmatpush2.bf16.msra.mxu0 0
      %852 = vmatprep.subr.bf16.mxu0 0
      %853 = vmatpush2.bf16.msra.mxu0 0
      %854 = vmatprep.subr.bf16.mxu0 0
      %855 = vmatpush2.bf16.msra.mxu0 0
      %856 = vmatprep.subr.bf16.mxu0 0
      %857 = vmatpush2.bf16.msra.mxu0 0
      %858 = vmatprep.subr.bf16.mxu0 0
      %859 = vmatpush2.bf16.msra.mxu0 0
      %860 = vmatprep.subr.bf16.mxu0 0
      %861 = vmatpush2.bf16.msra.mxu0 0
      %862 = vmatprep.subr.bf16.mxu0 0
      %863 = vmatpush2.bf16.msra.mxu0 0
      %864 = vmatprep.mubr.bf16.mxu0 0
      %865 = vmatmul.mubr.bf16.gmra.mxu0 %v830
      %v866 = vpop.f32.mrf.mxu0
      %v867 = vadd.f32 %v815, %v866
      %v868 = vpop.f32.mrf.mxu0
      %v869 = vpop.f32.mrf.mxu0
      %v870 = vpop.f32.mrf.mxu0
      %871 = vdwg.mxu0
      %v872 = vunpack.c.l.bf16 %v275
      %v873 = vadd.f32 %v867, %v872
      %v874 = vld [vmem:[%s5] sm:$0x1]
      %v875 = vld [vmem:[%s6] sm:$0x1]
      %v876 = vsel %vm299, %v873, 0.0
      %877 = vadd.xlane.f32.xlu0 %v876
      %v878 = vpop.xlane.xlu0 %877
      %v879 = vrcp.pop 32.0
      %v880 = vmul.f32 %v878, %v879
      %v881 = vsub.f32 %v873, %v880
      %v882 = vmul.f32 %v881, %v881
      %v883 = vsel %vm299, %v882, 0.0
      %884 = vadd.xlane.f32.xlu0 %v883
      %v885 = vpop.xlane.xlu0 %884
      %v886 = vmul.f32 %v885, %v879
      %v887 = vadd.f32 %v886, 1e-05
      %v888 = vrsqrt.pop %v887
      %v889 = vmul.f32 %v881, %v888
      %v891 = vlaneseq
      %v892 = vshrl.u32 %v891, 7
      %v893 = vsub.s32 0, %v892
      %v894 = vrot.slane %v874, %v893
      %v896 = vmul.f32 %v889, %v894
      %v898 = vlaneseq
      %v899 = vshrl.u32 %v898, 7
      %v900 = vsub.s32 0, %v899
      %v901 = vrot.slane %v875, %v900
      %v903 = vadd.f32 %v896, %v901
      %v904 = vpack.c.bf16 %v903, %v903
      %vm905 = vcmask 257024
      %906 = vst.msk [vmem:[%s273] sm:$0xf] %vm905, %v904
      %p907 = scmp.lt.s32.totalorder %s18, 1
      %s908 = scalar_select %p907, %s18, 1
      %s909 = smul.addr %s908, 4
      %s910 = scalar_lea.vmem %s7, %s909
      // Predicated region
      $region49: #{event_painter_forward.18} parent=47 // pred_check
        %p911 = pneg %p188
      $region50: #{event_painter_forward.18} parent=47 // pred_check_branch
        %913 = sbr.rel (%p911) target = $region52
      $region51: #{event_painter_forward.18} parent=47 // pred_region
        _
      $region52: #{event_painter_forward.18} parent=47 // pred_fallthru
        _
    $region48: #{event_painter_forward.18} parent=5 // pred_fallthru
      _
    %p914 = scmp.le.s32.totalorder 2, %s13
    // Predicated region
    $region53: #{event_painter_forward.18} parent=5 // pred_check
      %p915 = pneg %p914
    $region54: #{event_painter_forward.18} parent=5 // pred_check_branch
      %917 = sbr.rel (%p915) target = $region56
    $region55: #{event_painter_forward.18} parent=5 // pred_region
      %s918 = ssub.s32 %s13, 2
      // Predicated region
      $region57: #{event_painter_forward.18} parent=55 // pred_check
        %p919 = pneg %p194
      $region58: #{event_painter_forward.18} parent=55 // pred_check_branch
        %921 = sbr.rel (%p919) target = $region60
      $region59: #{event_painter_forward.18} parent=55 // pred_region
        %p922 = scmp.lt.s32.totalorder %s19, 1
        %s923 = scalar_select %p922, %s19, 1
        %s924 = smul.addr %s923, 4
        %s925 = scalar_lea.vmem %s7, %s924
      $region60: #{event_painter_forward.18} parent=55 // pred_fallthru
        _
    $region56: #{event_painter_forward.18} parent=5 // pred_fallthru
      _
  $region6: #{event_painter_forward.18} parent=0 // loop_footer
    %s17 = sadd.s32 1, %s13
  $region7: #{event_painter_forward.18} parent=0 // loop_footer_branch
    %12 = sbr.rel target = $region3
  $region8: #{event_painter_forward.18} parent=0 // loop_exit
    _

// kernel: event_painter_forward.20
$region0: #{event_painter_forward.20}
  #allocation0 [shape = 'u32[]', space=smem, size = 0x4, offset = 0x4, fixed_abs, tag = 'smem constant byte address 0x4 - core index']
  #allocation1 [shape = 'u32[144,128]{1,0:T(1,128)}', space=vmem, size = 0x12000, scoped, tag = 'internal scratch']
  %s0 = inlined_call_operand.vmem [shape: bf16[16,32], index: 0, kind: input, shape index: {}]
  %s1 = inlined_call_operand.vmem [shape: bf16[32,64], index: 1, kind: input, shape index: {}]
  %s2 = inlined_call_operand.vmem [shape: f32[1,64], index: 2, kind: input, shape index: {}]
  %s3 = inlined_call_operand.vmem [shape: bf16[64,32], index: 3, kind: input, shape index: {}]
  %s4 = inlined_call_operand.vmem [shape: f32[1,32], index: 4, kind: input, shape index: {}]
  %s5 = inlined_call_operand.vmem [shape: f32[1,32], index: 5, kind: input, shape index: {}]
  %s6 = inlined_call_operand.vmem [shape: f32[1,32], index: 6, kind: input, shape index: {}]
  %s7 = inlined_call_operand.vmem [shape: bf16[16,32], index: 7, kind: output, shape index: {}]
  %s8 = sld [smem:[#allocation0]]
  $region38: #{event_painter_forward.20} parent=0
    _
  %s10 = ssub.s32 1, %s8
  %s11 = scalar_select 0, %s10, %s8
  // Predicated region
  $region2: #{event_painter_forward.20} parent=0 // pred_check
    _
  $region3: #{event_painter_forward.20} parent=0 // pred_check_branch
    %13 = sbr.rel (0) target = $region5
  $region4: #{event_painter_forward.20} parent=0 // pred_region
    _
  $region5: #{event_painter_forward.20} parent=0 // pred_fallthru
    _
  // Predicated region
  $region6: #{event_painter_forward.20} parent=0 // pred_check
    _
  $region7: #{event_painter_forward.20} parent=0 // pred_check_branch
    %15 = sbr.rel (0) target = $region9
  $region8: #{event_painter_forward.20} parent=0 // pred_region
    _
  $region9: #{event_painter_forward.20} parent=0 // pred_fallthru
    _
  // Predicated region
  $region10: #{event_painter_forward.20} parent=0 // pred_check
    _
  $region11: #{event_painter_forward.20} parent=0 // pred_check_branch
    %17 = sbr.rel (0) target = $region13
  $region12: #{event_painter_forward.20} parent=0 // pred_region
    _
  $region13: #{event_painter_forward.20} parent=0 // pred_fallthru
    _
  // Predicated region
  $region14: #{event_painter_forward.20} parent=0 // pred_check
    _
  $region15: #{event_painter_forward.20} parent=0 // pred_check_branch
    %19 = sbr.rel (0) target = $region17
  $region16: #{event_painter_forward.20} parent=0 // pred_region
    _
  $region17: #{event_painter_forward.20} parent=0 // pred_fallthru
    _
  // Predicated region
  $region18: #{event_painter_forward.20} parent=0 // pred_check
    _
  $region19: #{event_painter_forward.20} parent=0 // pred_check_branch
    %21 = sbr.rel (0) target = $region21
  $region20: #{event_painter_forward.20} parent=0 // pred_region
    _
  $region21: #{event_painter_forward.20} parent=0 // pred_fallthru
    _
  // Predicated region
  $region22: #{event_painter_forward.20} parent=0 // pred_check
    _
  $region23: #{event_painter_forward.20} parent=0 // pred_check_branch
    %23 = sbr.rel (0) target = $region25
  $region24: #{event_painter_forward.20} parent=0 // pred_region
    _
  $region25: #{event_painter_forward.20} parent=0 // pred_fallthru
    _
  // Predicated region
  $region26: #{event_painter_forward.20} parent=0 // pred_check
    _
  $region27: #{event_painter_forward.20} parent=0 // pred_check_branch
    %25 = sbr.rel (0) target = $region29
  $region28: #{event_painter_forward.20} parent=0 // pred_region
    _
  $region29: #{event_painter_forward.20} parent=0 // pred_fallthru
    _
  %v27 = vld [vmem:[%s0] sm:$0xf]
  %v28 = vld [vmem:[%s0 + $0x4] sm:$0xf]
  %v29 = vld [vmem:[%s1] sm:$0xf]
  %v30 = vld [vmem:[%s1 + $0x4] sm:$0xf]
  %v31 = vld [vmem:[%s1 + $0x8] sm:$0xf]
  %v32 = vld [vmem:[%s1 + $0xc] sm:$0xf]
  %v33 = vld [vmem:[%s2] sm:$0x1]
  %v35 = vlaneseq
  %v36 = vshrl.u32 %v35, 7
  %v37 = vsub.s32 0, %v36
  %v38 = vrot.slane %v33, %v37
  %v42 = vunpack.c.l.b16 %v27
  %v43 = vunpack.c.l.b16 %v28
  %v44 = vpack.c.b16 %v43, %v42
  %v49 = vunpack.c.l.b16 %v29
  %v50 = vunpack.c.l.b16 %v30
  %v51 = vunpack.c.l.b16 %v31
  %v52 = vunpack.c.l.b16 %v32
  %v53 = vpack.c.b16 %v50, %v49
  %v54 = vpack.c.b16 %v52, %v51
  %vm57 = vcmask 261120
  %v59 = vsel %vm57, %v44, 0
  %61 = vmatprep.subr.bf16.mxu0 0
  %62 = vmatpush1.bf16.msra.mxu0 0
  %63 = vmatprep.subr.bf16.mxu0 0
  %64 = vmatpush1.bf16.msra.mxu0 0
  %65 = vmatprep.subr.bf16.mxu0 0
  %66 = vmatpush1.bf16.msra.mxu0 0
  %67 = vmatprep.subr.bf16.mxu0 0
  %68 = vmatpush1.bf16.msra.mxu0 0
  %69 = vmatprep.subr.bf16.mxu0 0
  %70 = vmatpush1.bf16.msra.mxu0 0
  %71 = vmatprep.subr.bf16.mxu0 0
  %72 = vmatpush1.bf16.msra.mxu0 0
  %73 = vmatprep.subr.bf16.mxu0 0
  %74 = vmatpush1.bf16.msra.mxu0 %v54
  %75 = vmatprep.subr.bf16.mxu0 0
  %76 = vmatpush1.bf16.msra.mxu0 %v53
  %77 = vmatprep.subr.bf16.mxu0 0
  %78 = vmatpush2.bf16.msra.mxu0 0
  %79 = vmatprep.subr.bf16.mxu0 0
  %80 = vmatpush2.bf16.msra.mxu0 0
  %81 = vmatprep.subr.bf16.mxu0 0
  %82 = vmatpush2.bf16.msra.mxu0 0
  %83 = vmatprep.subr.bf16.mxu0 0
  %84 = vmatpush2.bf16.msra.mxu0 0
  %85 = vmatprep.subr.bf16.mxu0 0
  %86 = vmatpush2.bf16.msra.mxu0 0
  %87 = vmatprep.subr.bf16.mxu0 0
  %88 = vmatpush2.bf16.msra.mxu0 0
  %89 = vmatprep.subr.bf16.mxu0 0
  %90 = vmatpush2.bf16.msra.mxu0 0
  %91 = vmatprep.subr.bf16.mxu0 0
  %92 = vmatpush2.bf16.msra.mxu0 0
  %93 = vmatprep.mubr.bf16.mxu0 0
  %94 = vmatmul.mubr.bf16.gmra.mxu0 %v59
  %v95 = vpop.f32.mrf.mxu0
  %v96 = vadd.f32 %v38, %v95
  %v97 = vpop.f32.mrf.mxu0
  %v98 = vpop.f32.mrf.mxu0
  %v99 = vadd.f32 %v38, %v98
  %v100 = vpop.f32.mrf.mxu0
  %101 = vdwg.mxu0
  %v102 = vmax.f32 %v96, 0.0
  %v103 = vmax.f32 %v99, 0.0
  %v104 = vpack.c.bf16 %v103, %v102
  %v105 = vld [vmem:[%s3] sm:$0xf]
  %v106 = vld [vmem:[%s3 + $0x4] sm:$0xf]
  %v107 = vld [vmem:[%s3 + $0x8] sm:$0xf]
  %v108 = vld [vmem:[%s3 + $0xc] sm:$0xf]
  %v109 = vld [vmem:[%s3 + $0x10] sm:$0xf]
  %v110 = vld [vmem:[%s3 + $0x14] sm:$0xf]
  %v111 = vld [vmem:[%s3 + $0x18] sm:$0xf]
  %v112 = vld [vmem:[%s3 + $0x1c] sm:$0xf]
  %v113 = vld [vmem:[%s4] sm:$0x1]
  %v115 = vlaneseq
  %v116 = vshrl.u32 %v115, 7
  %v117 = vsub.s32 0, %v116
  %v118 = vrot.slane %v113, %v117
  %v128 = vunpack.c.l.b16 %v105
  %v129 = vunpack.c.l.b16 %v106
  %v130 = vunpack.c.l.b16 %v107
  %v131 = vunpack.c.l.b16 %v108
  %v132 = vunpack.c.l.b16 %v109
  %v133 = vunpack.c.l.b16 %v110
  %v134 = vunpack.c.l.b16 %v111
  %v135 = vunpack.c.l.b16 %v112
  %v136 = vpack.c.b16 %v129, %v128
  %v137 = vpack.c.b16 %v131, %v130
  %v138 = vpack.c.b16 %v133, %v132
  %v139 = vpack.c.b16 %v135, %v134
  %vm144 = vcmask 523264
  %v146 = vsel %vm144, %v104, 0
  %148 = vmatprep.subr.bf16.mxu0 0
  %149 = vmatpush1.bf16.msra.mxu0 0
  %150 = vmatprep.subr.bf16.mxu0 0
  %151 = vmatpush1.bf16.msra.mxu0 0
  %152 = vmatprep.subr.bf16.mxu0 0
  %153 = vmatpush1.bf16.msra.mxu0 0
  %154 = vmatprep.subr.bf16.mxu0 0
  %155 = vmatpush1.bf16.msra.mxu0 0
  %156 = vmatprep.subr.bf16.mxu0 0
  %157 = vmatpush1.bf16.msra.mxu0 %v139
  %158 = vmatprep.subr.bf16.mxu0 0
  %159 = vmatpush1.bf16.msra.mxu0 %v138
  %160 = vmatprep.subr.bf16.mxu0 0
  %161 = vmatpush1.bf16.msra.mxu0 %v137
  %162 = vmatprep.subr.bf16.mxu0 0
  %163 = vmatpush1.bf16.msra.mxu0 %v136
  %164 = vmatprep.subr.bf16.mxu0 0
  %165 = vmatpush2.bf16.msra.mxu0 0
  %166 = vmatprep.subr.bf16.mxu0 0
  %167 = vmatpush2.bf16.msra.mxu0 0
  %168 = vmatprep.subr.bf16.mxu0 0
  %169 = vmatpush2.bf16.msra.mxu0 0
  %170 = vmatprep.subr.bf16.mxu0 0
  %171 = vmatpush2.bf16.msra.mxu0 0
  %172 = vmatprep.subr.bf16.mxu0 0
  %173 = vmatpush2.bf16.msra.mxu0 0
  %174 = vmatprep.subr.bf16.mxu0 0
  %175 = vmatpush2.bf16.msra.mxu0 0
  %176 = vmatprep.subr.bf16.mxu0 0
  %177 = vmatpush2.bf16.msra.mxu0 0
  %178 = vmatprep.subr.bf16.mxu0 0
  %179 = vmatpush2.bf16.msra.mxu0 0
  %180 = vmatprep.mubr.bf16.mxu0 0
  %181 = vmatmul.mubr.bf16.gmra.mxu0 %v146
  %v182 = vpop.f32.mrf.mxu0
  %v183 = vadd.f32 %v118, %v182
  %v184 = vpop.f32.mrf.mxu0
  %v185 = vpop.f32.mrf.mxu0
  %v186 = vadd.f32 %v118, %v185
  %v187 = vpop.f32.mrf.mxu0
  %188 = vdwg.mxu0
  %v189 = vunpack.c.l.bf16 %v27
  %v190 = vunpack.c.l.bf16 %v28
  %v191 = vadd.f32 %v183, %v189
  %v192 = vadd.f32 %v186, %v190
  %v193 = vld [vmem:[%s5] sm:$0x1]
  %v194 = vld [vmem:[%s6] sm:$0x1]
  %v195 = vsel %vm57, %v191, 0.0
  %196 = vadd.xlane.f32.xlu0 %v195
  %v197 = vpop.xlane.xlu0 %196
  %v198 = vsel %vm57, %v192, 0.0
  %199 = vadd.xlane.f32.xlu0 %v198
  %v200 = vpop.xlane.xlu0 %199
  %v201 = vrcp.pop 32.0
  %v202 = vmul.f32 %v197, %v201
  %v203 = vmul.f32 %v200, %v201
  %v204 = vsub.f32 %v191, %v202
  %v205 = vsub.f32 %v192, %v203
  %v206 = vmul.f32 %v204, %v204
  %v207 = vmul.f32 %v205, %v205
  %v208 = vsel %vm57, %v206, 0.0
  %209 = vadd.xlane.f32.xlu0 %v208
  %v210 = vpop.xlane.xlu0 %209
  %v211 = vsel %vm57, %v207, 0.0
  %212 = vadd.xlane.f32.xlu0 %v211
  %v213 = vpop.xlane.xlu0 %212
  %v214 = vmul.f32 %v210, %v201
  %v215 = vmul.f32 %v213, %v201
  %v216 = vadd.f32 %v214, 1e-05
  %v217 = vadd.f32 %v215, 1e-05
  %v218 = vrsqrt.pop %v216
  %v219 = vrsqrt.pop %v217
  %v220 = vmul.f32 %v204, %v218
  %v221 = vmul.f32 %v205, %v219
  %v223 = vlaneseq
  %v224 = vshrl.u32 %v223, 7
  %v225 = vsub.s32 0, %v224
  %v226 = vrot.slane %v193, %v225
  %v228 = vmul.f32 %v220, %v226
  %v229 = vmul.f32 %v221, %v226
  %v231 = vlaneseq
  %v232 = vshrl.u32 %v231, 7
  %v233 = vsub.s32 0, %v232
  %v234 = vrot.slane %v194, %v233
  %v236 = vadd.f32 %v228, %v234
  %v237 = vadd.f32 %v229, %v234
  %v238 = vpack.c.bf16 %v237, %v236
  %v240 = vunpack.c.l.b16 %v238
  %v241 = vunpack.c.h.b16 %v238
  %v242 = vpack.c.b16 %v240, %v240
  %v243 = vpack.c.b16 %v241, %v241
  %vm246 = vcmask 257024
  %247 = vst.msk [vmem:[%s7] sm:$0xf] %vm246, %v242
  %248 = vst.msk [vmem:[%s7 + $0x4] sm:$0xf] %vm246, %v243
  // Predicated region
  $region30: #{event_painter_forward.20} parent=0 // pred_check
    _
  $region31: #{event_painter_forward.20} parent=0 // pred_check_branch
    %250 = sbr.rel (0) target = $region33
  $region32: #{event_painter_forward.20} parent=0 // pred_region
    _
  $region33: #{event_painter_forward.20} parent=0 // pred_fallthru
    _
  // Predicated region
  $region34: #{event_painter_forward.20} parent=0 // pred_check
    _
  $region35: #{event_painter_forward.20} parent=0 // pred_check_branch
    %252 = sbr.rel (0) target = $region37
  $region36: #{event_painter_forward.20} parent=0 // pred_region
    _
  $region37: #{event_painter_forward.20} parent=0 // pred_fallthru
    _

// kernel: event_painter_forward.24
$region0: #{event_painter_forward.24}
  #allocation0 [shape = 'u32[]', space=smem, size = 0x4, offset = 0x4, fixed_abs, tag = 'smem constant byte address 0x4 - core index']
  #allocation1 [shape = 'u32[144,128]{1,0:T(1,128)}', space=vmem, size = 0x12000, scoped, tag = 'internal scratch']
  %s0 = inlined_call_operand.vmem [shape: bf16[16,32], index: 0, kind: input, shape index: {}]
  %s1 = inlined_call_operand.vmem [shape: f32[1,32], index: 1, kind: input, shape index: {}]
  %s2 = inlined_call_operand.vmem [shape: f32[1,32], index: 2, kind: input, shape index: {}]
  %s3 = inlined_call_operand.vmem [shape: bf16[16,32], index: 3, kind: output, shape index: {}]
  %s4 = sld [smem:[#allocation0]]
  $region22: #{event_painter_forward.24} parent=0
    _
  %s6 = ssub.s32 1, %s4
  %s7 = scalar_select 0, %s6, %s4
  // Predicated region
  $region2: #{event_painter_forward.24} parent=0 // pred_check
    _
  $region3: #{event_painter_forward.24} parent=0 // pred_check_branch
    %9 = sbr.rel (0) target = $region5
  $region4: #{event_painter_forward.24} parent=0 // pred_region
    _
  $region5: #{event_painter_forward.24} parent=0 // pred_fallthru
    _
  // Predicated region
  $region6: #{event_painter_forward.24} parent=0 // pred_check
    _
  $region7: #{event_painter_forward.24} parent=0 // pred_check_branch
    %11 = sbr.rel (0) target = $region9
  $region8: #{event_painter_forward.24} parent=0 // pred_region
    _
  $region9: #{event_painter_forward.24} parent=0 // pred_fallthru
    _
  // Predicated region
  $region10: #{event_painter_forward.24} parent=0 // pred_check
    _
  $region11: #{event_painter_forward.24} parent=0 // pred_check_branch
    %13 = sbr.rel (0) target = $region13
  $region12: #{event_painter_forward.24} parent=0 // pred_region
    _
  $region13: #{event_painter_forward.24} parent=0 // pred_fallthru
    _
  %v14 = vld [vmem:[%s0] sm:$0xf]
  %v15 = vld [vmem:[%s0 + $0x4] sm:$0xf]
  %v16 = vunpack.c.l.bf16 %v14
  %v17 = vunpack.c.l.bf16 %v15
  %v18 = vld [vmem:[%s1] sm:$0x1]
  %v19 = vld [vmem:[%s2] sm:$0x1]
  %vm20 = vcmask 261120
  %v21 = vsel %vm20, %v16, 0.0
  %22 = vadd.xlane.f32.xlu0 %v21
  %v23 = vpop.xlane.xlu0 %22
  %v24 = vsel %vm20, %v17, 0.0
  %25 = vadd.xlane.f32.xlu0 %v24
  %v26 = vpop.xlane.xlu0 %25
  %v27 = vrcp.pop 32.0
  %v28 = vmul.f32 %v23, %v27
  %v29 = vmul.f32 %v26, %v27
  %v30 = vsub.f32 %v16, %v28
  %v31 = vsub.f32 %v17, %v29
  %v32 = vmul.f32 %v30, %v30
  %v33 = vmul.f32 %v31, %v31
  %v34 = vsel %vm20, %v32, 0.0
  %35 = vadd.xlane.f32.xlu0 %v34
  %v36 = vpop.xlane.xlu0 %35
  %v37 = vsel %vm20, %v33, 0.0
  %38 = vadd.xlane.f32.xlu0 %v37
  %v39 = vpop.xlane.xlu0 %38
  %v40 = vmul.f32 %v36, %v27
  %v41 = vmul.f32 %v39, %v27
  %v42 = vadd.f32 %v40, 1e-05
  %v43 = vadd.f32 %v41, 1e-05
  %v44 = vrsqrt.pop %v42
  %v45 = vrsqrt.pop %v43
  %v46 = vmul.f32 %v30, %v44
  %v47 = vmul.f32 %v31, %v45
  %v49 = vlaneseq
  %v50 = vshrl.u32 %v49, 7
  %v51 = vsub.s32 0, %v50
  %v52 = vrot.slane %v18, %v51
  %v54 = vmul.f32 %v46, %v52
  %v55 = vmul.f32 %v47, %v52
  %v57 = vlaneseq
  %v58 = vshrl.u32 %v57, 7
  %v59 = vsub.s32 0, %v58
  %v60 = vrot.slane %v19, %v59
  %v62 = vadd.f32 %v54, %v60
  %v63 = vadd.f32 %v55, %v60
  %v64 = vpack.c.bf16 %v63, %v62
  %v66 = vunpack.c.l.b16 %v64
  %v67 = vunpack.c.h.b16 %v64
  %v68 = vpack.c.b16 %v66, %v66
  %v69 = vpack.c.b16 %v67, %v67
  %vm72 = vcmask 257024
  %73 = vst.msk [vmem:[%s3] sm:$0xf] %vm72, %v68
  %74 = vst.msk [vmem:[%s3 + $0x4] sm:$0xf] %vm72, %v69
  // Predicated region
  $region14: #{event_painter_forward.24} parent=0 // pred_check
    _
  $region15: #{event_painter_forward.24} parent=0 // pred_check_branch
    %76 = sbr.rel (0) target = $region17
  $region16: #{event_painter_forward.24} parent=0 // pred_region
    _
  $region17: #{event_painter_forward.24} parent=0 // pred_fallthru
    _
  // Predicated region
  $region18: #{event_painter_forward.24} parent=0 // pred_check
    _
  $region19: #{event_painter_forward.24} parent=0 // pred_check_branch
    %78 = sbr.rel (0) target = $region21
  $region20: #{event_painter_forward.24} parent=0 // pred_region
    _
  $region21: #{event_painter_forward.24} parent=0 // pred_fallthru
    _

// kernel: event_painter_forward.19
$region0: #{event_painter_forward.19}
  #allocation0 [shape = 'u32[]', space=smem, size = 0x4, offset = 0x4, fixed_abs, tag = 'smem constant byte address 0x4 - core index']
  #allocation1 [shape = 'u32[144,128]{1,0:T(1,128)}', space=vmem, size = 0x12000, scoped, tag = 'internal scratch']
  #allocation2 [shape = 'f32[8,32]{1,0:T(8,128)}', space=vmem, size = 0x1000, scoped, tag = 'scratch operand']
  %s0 = inlined_call_operand.vmem [shape: bf16[2,8,32], index: 0, kind: input, shape index: {}]
  %s1 = inlined_call_operand.vmem [shape: bf16[2,16,32], index: 1, kind: input, shape index: {}]
  %s2 = inlined_call_operand.vmem [shape: bf16[32,32], index: 2, kind: input, shape index: {}]
  %s3 = inlined_call_operand.vmem [shape: f32[1,32], index: 3, kind: input, shape index: {}]
  %s4 = inlined_call_operand.vmem [shape: bf16[32,64], index: 4, kind: input, shape index: {}]
  %s5 = inlined_call_operand.vmem [shape: f32[1,64], index: 5, kind: input, shape index: {}]
  %s6 = inlined_call_operand.vmem [shape: bf16[32,32], index: 6, kind: input, shape index: {}]
  %s7 = inlined_call_operand.vmem [shape: f32[1,32], index: 7, kind: input, shape index: {}]
  %s8 = inlined_call_operand.vmem [shape: f32[1,32], index: 8, kind: input, shape index: {}]
  %s9 = inlined_call_operand.vmem [shape: f32[1,32], index: 9, kind: input, shape index: {}]
  %s10 = inlined_call_operand.vmem [shape: bf16[2,8,32], index: 10, kind: output, shape index: {}]
  %s11 = sld [smem:[#allocation0]]
  $region73: #{event_painter_forward.19} parent=0
    _
  %s13 = ssub.s32 1, %s11
  %s14 = scalar_select 0, %s13, %s11
  loop: start=0, step=1, limit=4
  $region2: #{event_painter_forward.19} parent=0 // loop_pre_header
    _
  $region3: #{event_painter_forward.19} parent=0 // loop_header
    %s16 = sphi 0, %s20
    %p17 = scmp.ge.s32.totalorder %s16, 4
    %s26 = sphi 0, %s28
    %s29 = sphi 0, %s26
    %s30 = sphi 0, %s29
    %s46 = sphi 0, %s30
    %s52 = sphi 0, %s54
    %s55 = sphi 0, %s52
    %s56 = sphi 0, %s55
    %s72 = sphi 0, %s56
    %s76 = sphi 0, %s76
    %s78 = sphi 0, %s76
    %s79 = sphi 0, %s78
    %s93 = sphi 0, %s79
    %s97 = sphi 0, %s97
    %s99 = sphi 0, %s97
    %s100 = sphi 0, %s99
    %s114 = sphi 0, %s100
    %s118 = sphi 0, %s118
    %s120 = sphi 0, %s118
    %s121 = sphi 0, %s120
    %s135 = sphi 0, %s121
    %s139 = sphi 0, %s139
    %s141 = sphi 0, %s139
    %s142 = sphi 0, %s141
    %s156 = sphi 0, %s142
    %s160 = sphi 0, %s160
    %s162 = sphi 0, %s160
    %s163 = sphi 0, %s162
    %s177 = sphi 0, %s163
    %s181 = sphi 0, %s181
    %s183 = sphi 0, %s181
    %s184 = sphi 0, %s183
    %s198 = sphi 0, %s184
    %s202 = sphi 0, %s202
    %s204 = sphi 0, %s202
    %s205 = sphi 0, %s204
    %s219 = sphi 0, %s205
    %s223 = sphi 0, %s223
    %s225 = sphi 0, %s223
    %s226 = sphi 0, %s225
    %s240 = sphi 0, %s226
    %s246 = sphi 0, %s248
    %s249 = sphi 0, %s246
    %s250 = sphi 0, %s249
    %s266 = sphi 0, %s250
  $region4: #{event_painter_forward.19} parent=0 // loop_header_branch
    %19 = sbr.rel (%p17) target = $region8
  $region5: #{event_painter_forward.19} parent=0 // loop_body
    %s21 = ssub.s32 %s16, 1
    %s22 = ssub.s32 %s16, 2
    %s23 = sadd.s32 %s16, 1
    %s24 = ssub.s32 %s16, %s23
    %p25 = scmp.eq.s32.totalorder %s24, 0
    %s27 = sadd.s32 %s26, 1
    %s28 = scalar_select %p25, %s26, %s27
    %p31 = pneg %p25
    %p32 = scmp.eq.s32.totalorder %s16, 1
    %p33 = por %p31, %p32
    %p34 = scmp.ne.s32.totalorder %s26, %s29
    %p35 = scmp.eq.s32.totalorder %s16, 0
    %p36 = por %p34, %p35
    %p37 = scmp.ne.s32.totalorder %s26, %s29
    %p38 = scmp.eq.s32.totalorder %s21, 1
    %p39 = por %p37, %p38
    %p40 = scmp.ne.s32.totalorder %s29, %s30
    %p41 = scmp.eq.s32.totalorder %s21, 0
    %p42 = por %p40, %p41
    %p43 = scmp.ne.s32.totalorder %s29, %s30
    %p44 = scmp.eq.s32.totalorder %s22, 1
    %p45 = por %p43, %p44
    %p47 = scmp.ne.s32.totalorder %s30, %s46
    %p48 = scmp.eq.s32.totalorder %s22, 0
    %p49 = por %p47, %p48
    %s50 = ssub.s32 %s16, %s23
    %p51 = scmp.eq.s32.totalorder %s50, 0
    %s53 = sadd.s32 %s52, 1
    %s54 = scalar_select %p51, %s52, %s53
    %p57 = pneg %p51
    %p58 = scmp.eq.s32.totalorder %s16, 1
    %p59 = por %p57, %p58
    %p60 = scmp.ne.s32.totalorder %s52, %s55
    %p61 = scmp.eq.s32.totalorder %s16, 0
    %p62 = por %p60, %p61
    %p63 = scmp.ne.s32.totalorder %s52, %s55
    %p64 = scmp.eq.s32.totalorder %s21, 1
    %p65 = por %p63, %p64
    %p66 = scmp.ne.s32.totalorder %s55, %s56
    %p67 = scmp.eq.s32.totalorder %s21, 0
    %p68 = por %p66, %p67
    %p69 = scmp.ne.s32.totalorder %s55, %s56
    %p70 = scmp.eq.s32.totalorder %s22, 1
    %p71 = por %p69, %p70
    %p73 = scmp.ne.s32.totalorder %s56, %s72
    %p74 = scmp.eq.s32.totalorder %s22, 0
    %p75 = por %p73, %p74
    %s77 = sadd.s32 %s76, 1
    %p80 = scmp.eq.s32.totalorder %s16, 1
    %p81 = scmp.ne.s32.totalorder %s76, %s78
    %p82 = scmp.eq.s32.totalorder %s16, 0
    %p83 = por %p81, %p82
    %p84 = scmp.ne.s32.totalorder %s76, %s78
    %p85 = scmp.eq.s32.totalorder %s21, 1
    %p86 = por %p84, %p85
    %p87 = scmp.ne.s32.totalorder %s78, %s79
    %p88 = scmp.eq.s32.totalorder %s21, 0
    %p89 = por %p87, %p88
    %p90 = scmp.ne.s32.totalorder %s78, %s79
    %p91 = scmp.eq.s32.totalorder %s22, 1
    %p92 = por %p90, %p91
    %p94 = scmp.ne.s32.totalorder %s79, %s93
    %p95 = scmp.eq.s32.totalorder %s22, 0
    %p96 = por %p94, %p95
    %s98 = sadd.s32 %s97, 1
    %p101 = scmp.eq.s32.totalorder %s16, 1
    %p102 = scmp.ne.s32.totalorder %s97, %s99
    %p103 = scmp.eq.s32.totalorder %s16, 0
    %p104 = por %p102, %p103
    %p105 = scmp.ne.s32.totalorder %s97, %s99
    %p106 = scmp.eq.s32.totalorder %s21, 1
    %p107 = por %p105, %p106
    %p108 = scmp.ne.s32.totalorder %s99, %s100
    %p109 = scmp.eq.s32.totalorder %s21, 0
    %p110 = por %p108, %p109
    %p111 = scmp.ne.s32.totalorder %s99, %s100
    %p112 = scmp.eq.s32.totalorder %s22, 1
    %p113 = por %p111, %p112
    %p115 = scmp.ne.s32.totalorder %s100, %s114
    %p116 = scmp.eq.s32.totalorder %s22, 0
    %p117 = por %p115, %p116
    %s119 = sadd.s32 %s118, 1
    %p122 = scmp.eq.s32.totalorder %s16, 1
    %p123 = scmp.ne.s32.totalorder %s118, %s120
    %p124 = scmp.eq.s32.totalorder %s16, 0
    %p125 = por %p123, %p124
    %p126 = scmp.ne.s32.totalorder %s118, %s120
    %p127 = scmp.eq.s32.totalorder %s21, 1
    %p128 = por %p126, %p127
    %p129 = scmp.ne.s32.totalorder %s120, %s121
    %p130 = scmp.eq.s32.totalorder %s21, 0
    %p131 = por %p129, %p130
    %p132 = scmp.ne.s32.totalorder %s120, %s121
    %p133 = scmp.eq.s32.totalorder %s22, 1
    %p134 = por %p132, %p133
    %p136 = scmp.ne.s32.totalorder %s121, %s135
    %p137 = scmp.eq.s32.totalorder %s22, 0
    %p138 = por %p136, %p137
    %s140 = sadd.s32 %s139, 1
    %p143 = scmp.eq.s32.totalorder %s16, 1
    %p144 = scmp.ne.s32.totalorder %s139, %s141
    %p145 = scmp.eq.s32.totalorder %s16, 0
    %p146 = por %p144, %p145
    %p147 = scmp.ne.s32.totalorder %s139, %s141
    %p148 = scmp.eq.s32.totalorder %s21, 1
    %p149 = por %p147, %p148
    %p150 = scmp.ne.s32.totalorder %s141, %s142
    %p151 = scmp.eq.s32.totalorder %s21, 0
    %p152 = por %p150, %p151
    %p153 = scmp.ne.s32.totalorder %s141, %s142
    %p154 = scmp.eq.s32.totalorder %s22, 1
    %p155 = por %p153, %p154
    %p157 = scmp.ne.s32.totalorder %s142, %s156
    %p158 = scmp.eq.s32.totalorder %s22, 0
    %p159 = por %p157, %p158
    %s161 = sadd.s32 %s160, 1
    %p164 = scmp.eq.s32.totalorder %s16, 1
    %p165 = scmp.ne.s32.totalorder %s160, %s162
    %p166 = scmp.eq.s32.totalorder %s16, 0
    %p167 = por %p165, %p166
    %p168 = scmp.ne.s32.totalorder %s160, %s162
    %p169 = scmp.eq.s32.totalorder %s21, 1
    %p170 = por %p168, %p169
    %p171 = scmp.ne.s32.totalorder %s162, %s163
    %p172 = scmp.eq.s32.totalorder %s21, 0
    %p173 = por %p171, %p172
    %p174 = scmp.ne.s32.totalorder %s162, %s163
    %p175 = scmp.eq.s32.totalorder %s22, 1
    %p176 = por %p174, %p175
    %p178 = scmp.ne.s32.totalorder %s163, %s177
    %p179 = scmp.eq.s32.totalorder %s22, 0
    %p180 = por %p178, %p179
    %s182 = sadd.s32 %s181, 1
    %p185 = scmp.eq.s32.totalorder %s16, 1
    %p186 = scmp.ne.s32.totalorder %s181, %s183
    %p187 = scmp.eq.s32.totalorder %s16, 0
    %p188 = por %p186, %p187
    %p189 = scmp.ne.s32.totalorder %s181, %s183
    %p190 = scmp.eq.s32.totalorder %s21, 1
    %p191 = por %p189, %p190
    %p192 = scmp.ne.s32.totalorder %s183, %s184
    %p193 = scmp.eq.s32.totalorder %s21, 0
    %p194 = por %p192, %p193
    %p195 = scmp.ne.s32.totalorder %s183, %s184
    %p196 = scmp.eq.s32.totalorder %s22, 1
    %p197 = por %p195, %p196
    %p199 = scmp.ne.s32.totalorder %s184, %s198
    %p200 = scmp.eq.s32.totalorder %s22, 0
    %p201 = por %p199, %p200
    %s203 = sadd.s32 %s202, 1
    %p206 = scmp.eq.s32.totalorder %s16, 1
    %p207 = scmp.ne.s32.totalorder %s202, %s204
    %p208 = scmp.eq.s32.totalorder %s16, 0
    %p209 = por %p207, %p208
    %p210 = scmp.ne.s32.totalorder %s202, %s204
    %p211 = scmp.eq.s32.totalorder %s21, 1
    %p212 = por %p210, %p211
    %p213 = scmp.ne.s32.totalorder %s204, %s205
    %p214 = scmp.eq.s32.totalorder %s21, 0
    %p215 = por %p213, %p214
    %p216 = scmp.ne.s32.totalorder %s204, %s205
    %p217 = scmp.eq.s32.totalorder %s22, 1
    %p218 = por %p216, %p217
    %p220 = scmp.ne.s32.totalorder %s205, %s219
    %p221 = scmp.eq.s32.totalorder %s22, 0
    %p222 = por %p220, %p221
    %s224 = sadd.s32 %s223, 1
    %p227 = scmp.eq.s32.totalorder %s16, 1
    %p228 = scmp.ne.s32.totalorder %s223, %s225
    %p229 = scmp.eq.s32.totalorder %s16, 0
    %p230 = por %p228, %p229
    %p231 = scmp.ne.s32.totalorder %s223, %s225
    %p232 = scmp.eq.s32.totalorder %s21, 1
    %p233 = por %p231, %p232
    %p234 = scmp.ne.s32.totalorder %s225, %s226
    %p235 = scmp.eq.s32.totalorder %s21, 0
    %p236 = por %p234, %p235
    %p237 = scmp.ne.s32.totalorder %s225, %s226
    %p238 = scmp.eq.s32.totalorder %s22, 1
    %p239 = por %p237, %p238
    %p241 = scmp.ne.s32.totalorder %s226, %s240
    %p242 = scmp.eq.s32.totalorder %s22, 0
    %p243 = por %p241, %p242
    %s244 = ssub.s32 %s16, %s23
    %p245 = scmp.eq.s32.totalorder %s244, 0
    %s247 = sadd.s32 %s246, 1
    %s248 = scalar_select %p245, %s246, %s247
    %p251 = pneg %p245
    %p252 = scmp.eq.s32.totalorder %s16, 1
    %p253 = por %p251, %p252
    %p254 = scmp.ne.s32.totalorder %s246, %s249
    %p255 = scmp.eq.s32.totalorder %s16, 0
    %p256 = por %p254, %p255
    %p257 = scmp.ne.s32.totalorder %s246, %s249
    %p258 = scmp.eq.s32.totalorder %s21, 1
    %p259 = por %p257, %p258
    %p260 = scmp.ne.s32.totalorder %s249, %s250
    %p261 = scmp.eq.s32.totalorder %s21, 0
    %p262 = por %p260, %p261
    %p263 = scmp.ne.s32.totalorder %s249, %s250
    %p264 = scmp.eq.s32.totalorder %s22, 1
    %p265 = por %p263, %p264
    %p267 = scmp.ne.s32.totalorder %s250, %s266
    %p268 = scmp.eq.s32.totalorder %s22, 0
    %p269 = por %p267, %p268
    %p270 = scmp.le.s32.totalorder 1, %s16
    %p271 = scmp.lt.s32.totalorder %s16, 3
    %p272 = pnand %p270, %p271
    %p273 = pneg %p272
    // Predicated region
    $region9: #{event_painter_forward.19} parent=5 // pred_check
      _
    $region10: #{event_painter_forward.19} parent=5 // pred_check_branch
      %275 = sbr.rel (%p272) target = $region12
    $region11: #{event_painter_forward.19} parent=5 // pred_region
      %s276 = ssub.s32 %s16, 1
      // Predicated region
      $region13: #{event_painter_forward.19} parent=11 // pred_check
        %p277 = pneg %p89
      $region14: #{event_painter_forward.19} parent=11 // pred_check_branch
        %279 = sbr.rel (%p277) target = $region16
      $region15: #{event_painter_forward.19} parent=11 // pred_region
        _
      $region16: #{event_painter_forward.19} parent=11 // pred_fallthru
        _
      // Predicated region
      $region17: #{event_painter_forward.19} parent=11 // pred_check
        %p280 = pneg %p110
      $region18: #{event_painter_forward.19} parent=11 // pred_check_branch
        %282 = sbr.rel (%p280) target = $region20
      $region19: #{event_painter_forward.19} parent=11 // pred_region
        _
      $region20: #{event_painter_forward.19} parent=11 // pred_fallthru
        _
      // Predicated region
      $region21: #{event_painter_forward.19} parent=11 // pred_check
        %p283 = pneg %p131
      $region22: #{event_painter_forward.19} parent=11 // pred_check_branch
        %285 = sbr.rel (%p283) target = $region24
      $region23: #{event_painter_forward.19} parent=11 // pred_region
        _
      $region24: #{event_painter_forward.19} parent=11 // pred_fallthru
        _
      // Predicated region
      $region25: #{event_painter_forward.19} parent=11 // pred_check
        %p286 = pneg %p152
      $region26: #{event_painter_forward.19} parent=11 // pred_check_branch
        %288 = sbr.rel (%p286) target = $region28
      $region27: #{event_painter_forward.19} parent=11 // pred_region
        _
      $region28: #{event_painter_forward.19} parent=11 // pred_fallthru
        _
      // Predicated region
      $region29: #{event_painter_forward.19} parent=11 // pred_check
        %p289 = pneg %p173
      $region30: #{event_painter_forward.19} parent=11 // pred_check_branch
        %291 = sbr.rel (%p289) target = $region32
      $region31: #{event_painter_forward.19} parent=11 // pred_region
        _
      $region32: #{event_painter_forward.19} parent=11 // pred_fallthru
        _
      // Predicated region
      $region33: #{event_painter_forward.19} parent=11 // pred_check
        %p292 = pneg %p194
      $region34: #{event_painter_forward.19} parent=11 // pred_check_branch
        %294 = sbr.rel (%p292) target = $region36
      $region35: #{event_painter_forward.19} parent=11 // pred_region
        _
      $region36: #{event_painter_forward.19} parent=11 // pred_fallthru
        _
      // Predicated region
      $region37: #{event_painter_forward.19} parent=11 // pred_check
        %p295 = pneg %p215
      $region38: #{event_painter_forward.19} parent=11 // pred_check_branch
        %297 = sbr.rel (%p295) target = $region40
      $region39: #{event_painter_forward.19} parent=11 // pred_region
        _
      $region40: #{event_painter_forward.19} parent=11 // pred_fallthru
        _
      // Predicated region
      $region41: #{event_painter_forward.19} parent=11 // pred_check
        %p298 = pneg %p236
      $region42: #{event_painter_forward.19} parent=11 // pred_check_branch
        %300 = sbr.rel (%p298) target = $region44
      $region43: #{event_painter_forward.19} parent=11 // pred_region
        _
      $region44: #{event_painter_forward.19} parent=11 // pred_fallthru
        _
    $region12: #{event_painter_forward.19} parent=5 // pred_fallthru
      _
    %p301 = scmp.lt.s32.totalorder %s16, 2
    // Predicated region
    $region45: #{event_painter_forward.19} parent=5 // pred_check
      %p302 = pneg %p301
    $region46: #{event_painter_forward.19} parent=5 // pred_check_branch
      %304 = sbr.rel (%p302) target = $region48
    $region47: #{event_painter_forward.19} parent=5 // pred_region
      // Predicated region
      $region49: #{event_painter_forward.19} parent=47 // pred_check
        %p305 = pneg %p36
      $region50: #{event_painter_forward.19} parent=47 // pred_check_branch
        %307 = sbr.rel (%p305) target = $region52
      $region51: #{event_painter_forward.19} parent=47 // pred_region
        %p308 = scmp.lt.s32.totalorder %s16, 1
        %s309 = scalar_select %p308, %s16, 1
        %s310 = smul.addr %s309, 4
        %s311 = scalar_lea.vmem %s0, %s310
      $region52: #{event_painter_forward.19} parent=47 // pred_fallthru
        _
      // Predicated region
      $region53: #{event_painter_forward.19} parent=47 // pred_check
        %p312 = pneg %p62
      $region54: #{event_painter_forward.19} parent=47 // pred_check_branch
        %314 = sbr.rel (%p312) target = $region56
      $region55: #{event_painter_forward.19} parent=47 // pred_region
        %p315 = scmp.lt.s32.totalorder %s16, 1
        %s316 = scalar_select %p315, %s16, 1
        %s317 = smul.addr %s316, 2
        %s318 = smul.addr %s317, 4
        %s319 = scalar_lea.vmem %s1, %s318
      $region56: #{event_painter_forward.19} parent=47 // pred_fallthru
        _
    $region48: #{event_painter_forward.19} parent=5 // pred_fallthru
      _
    %p320 = scmp.le.s32.totalorder 1, %s16
    %p321 = scmp.lt.s32.totalorder %s16, 3
    %p322 = pnand %p320, %p321
    %p323 = pneg %p322
    // Predicated region
    $region57: #{event_painter_forward.19} parent=5 // pred_check
      _
    $region58: #{event_painter_forward.19} parent=5 // pred_check_branch
      %325 = sbr.rel (%p322) target = $region60
    $region59: #{event_painter_forward.19} parent=5 // pred_region
      %s326 = ssub.s32 %s16, 1
      %p327 = scmp.lt.s32.totalorder %s21, 1
      %s328 = scalar_select %p327, %s21, 1
      %s329 = smul.addr %s328, 4
      %s330 = scalar_lea.vmem %s0, %s329
      %p331 = pneg %p42
      %p332 = pneg %p39
      %p333 = scmp.lt.s32.totalorder %s21, 1
      %s334 = scalar_select %p333, %s21, 1
      %s335 = smul.addr %s334, 2
      %s336 = smul.addr %s335, 4
      %s337 = scalar_lea.vmem %s1, %s336
      %p338 = pneg %p68
      %p339 = pneg %p65
      %p340 = pneg %p89
      %p341 = pneg %p86
      %p342 = pneg %p110
      %p343 = pneg %p107
      %p344 = pneg %p131
      %p345 = pneg %p128
      %p346 = pneg %p152
      %p347 = pneg %p149
      %p348 = pneg %p173
      %p349 = pneg %p170
      %p350 = pneg %p194
      %p351 = pneg %p191
      %p352 = pneg %p215
      %p353 = pneg %p212
      %p354 = pneg %p236
      %p355 = pneg %p233
      %p356 = pneg %p262
      %p357 = pneg %p259
      %p358 = scmp.lt.s32.totalorder %s21, 1
      %s359 = scalar_select %p358, %s21, 1
      %s360 = smul.addr %s359, 4
      %s361 = scalar_lea.vmem %s10, %s360
      %p362 = scmp.lt.s32.totalorder %s21, 1
      %s363 = scalar_select %p362, %s21, 1
      %s364 = smul.addr %s363, 4
      %s365 = scalar_lea.vmem %s0, %s364
      %p366 = scmp.lt.s32.totalorder %s21, 1
      %s367 = scalar_select %p366, %s21, 1
      %s368 = smul.addr %s367, 2
      %s369 = smul.addr %s368, 4
      %s370 = scalar_lea.vmem %s1, %s369
      %p371 = scmp.lt.s32.totalorder %s21, 1
      %s372 = scalar_select %p371, %s21, 1
      %s373 = smul.addr %s372, 4
      %s374 = scalar_lea.vmem %s10, %s373
      %v376 = vld [vmem:[%s365] sm:$0xf]
      %v377 = vld [vmem:[%s370] sm:$0xf]
      %v378 = vld [vmem:[%s370 + $0x4] sm:$0xf]
      %v379 = vld [vmem:[%s2] sm:$0xf]
      %v380 = vld [vmem:[%s2 + $0x4] sm:$0xf]
      %v381 = vld [vmem:[%s2 + $0x8] sm:$0xf]
      %v382 = vld [vmem:[%s2 + $0xc] sm:$0xf]
      %v383 = vld [vmem:[%s3] sm:$0x1]
      %v385 = vlaneseq
      %v386 = vshrl.u32 %v385, 7
      %v387 = vsub.s32 0, %v386
      %v388 = vrot.slane %v383, %v387
      %v394 = vunpack.c.l.b16 %v379
      %v395 = vunpack.c.l.b16 %v380
      %v396 = vunpack.c.l.b16 %v381
      %v397 = vunpack.c.l.b16 %v382
      %v398 = vpack.c.b16 %v395, %v394
      %v399 = vpack.c.b16 %v397, %v396
      %vm402 = vcmask 261120
      %v404 = vsel %vm402, %v376, 0
      %406 = vmatprep.subr.bf16.mxu0 0
      %407 = vmatpush1.bf16.msra.mxu0 0
      %408 = vmatprep.subr.bf16.mxu0 0
      %409 = vmatpush1.bf16.msra.mxu0 0
      %410 = vmatprep.subr.bf16.mxu0 0
      %411 = vmatpush1.bf16.msra.mxu0 0
      %412 = vmatprep.subr.bf16.mxu0 0
      %413 = vmatpush1.bf16.msra.mxu0 0
      %414 = vmatprep.subr.bf16.mxu0 0
      %415 = vmatpush1.bf16.msra.mxu0 0
      %416 = vmatprep.subr.bf16.mxu0 0
      %417 = vmatpush1.bf16.msra.mxu0 0
      %418 = vmatprep.subr.bf16.mxu0 0
      %419 = vmatpush1.bf16.msra.mxu0 %v399
      %420 = vmatprep.subr.bf16.mxu0 0
      %421 = vmatpush1.bf16.msra.mxu0 %v398
      %422 = vmatprep.subr.bf16.mxu0 0
      %423 = vmatpush2.bf16.msra.mxu0 0
      %424 = vmatprep.subr.bf16.mxu0 0
      %425 = vmatpush2.bf16.msra.mxu0 0
      %426 = vmatprep.subr.bf16.mxu0 0
      %427 = vmatpush2.bf16.msra.mxu0 0
      %428 = vmatprep.subr.bf16.mxu0 0
      %429 = vmatpush2.bf16.msra.mxu0 0
      %430 = vmatprep.subr.bf16.mxu0 0
      %431 = vmatpush2.bf16.msra.mxu0 0
      %432 = vmatprep.subr.bf16.mxu0 0
      %433 = vmatpush2.bf16.msra.mxu0 0
      %434 = vmatprep.subr.bf16.mxu0 0
      %435 = vmatpush2.bf16.msra.mxu0 0
      %436 = vmatprep.subr.bf16.mxu0 0
      %437 = vmatpush2.bf16.msra.mxu0 0
      %438 = vmatprep.mubr.bf16.mxu0 0
      %439 = vmatmul.mubr.bf16.gmra.mxu0 %v404
      %v440 = vpop.f32.mrf.mxu0
      %v441 = vadd.f32 %v388, %v440
      %v442 = vpop.f32.mrf.mxu0
      %v443 = vpop.f32.mrf.mxu0
      %v444 = vpop.f32.mrf.mxu0
      %445 = vdwg.mxu0
      %v446 = vpack.c.bf16 %v441, %v441
      %v447 = vld [vmem:[%s4] sm:$0xf]
      %v448 = vld [vmem:[%s4 + $0x4] sm:$0xf]
      %v449 = vld [vmem:[%s4 + $0x8] sm:$0xf]
      %v450 = vld [vmem:[%s4 + $0xc] sm:$0xf]
      %v451 = vld [vmem:[%s5] sm:$0x1]
      %v453 = vlaneseq
      %v454 = vshrl.u32 %v453, 7
      %v455 = vsub.s32 0, %v454
      %v456 = vrot.slane %v451, %v455
      %v460 = vunpack.c.l.b16 %v377
      %v461 = vunpack.c.l.b16 %v378
      %v462 = vpack.c.b16 %v461, %v460
      %v467 = vunpack.c.l.b16 %v447
      %v468 = vunpack.c.l.b16 %v448
      %v469 = vunpack.c.l.b16 %v449
      %v470 = vunpack.c.l.b16 %v450
      %v471 = vpack.c.b16 %v468, %v467
      %v472 = vpack.c.b16 %v470, %v469
      %v476 = vsel %vm402, %v462, 0
      %478 = vmatprep.subr.bf16.mxu0 0
      %479 = vmatpush1.bf16.msra.mxu0 0
      %480 = vmatprep.subr.bf16.mxu0 0
      %481 = vmatpush1.bf16.msra.mxu0 0
      %482 = vmatprep.subr.bf16.mxu0 0
      %483 = vmatpush1.bf16.msra.mxu0 0
      %484 = vmatprep.subr.bf16.mxu0 0
      %485 = vmatpush1.bf16.msra.mxu0 0
      %486 = vmatprep.subr.bf16.mxu0 0
      %487 = vmatpush1.bf16.msra.mxu0 0
      %488 = vmatprep.subr.bf16.mxu0 0
      %489 = vmatpush1.bf16.msra.mxu0 0
      %490 = vmatprep.subr.bf16.mxu0 0
      %491 = vmatpush1.bf16.msra.mxu0 %v472
      %492 = vmatprep.subr.bf16.mxu0 0
      %493 = vmatpush1.bf16.msra.mxu0 %v471
      %494 = vmatprep.subr.bf16.mxu0 0
      %495 = vmatpush2.bf16.msra.mxu0 0
      %496 = vmatprep.subr.bf16.mxu0 0
      %497 = vmatpush2.bf16.msra.mxu0 0
      %498 = vmatprep.subr.bf16.mxu0 0
      %499 = vmatpush2.bf16.msra.mxu0 0
      %500 = vmatprep.subr.bf16.mxu0 0
      %501 = vmatpush2.bf16.msra.mxu0 0
      %502 = vmatprep.subr.bf16.mxu0 0
      %503 = vmatpush2.bf16.msra.mxu0 0
      %504 = vmatprep.subr.bf16.mxu0 0
      %505 = vmatpush2.bf16.msra.mxu0 0
      %506 = vmatprep.subr.bf16.mxu0 0
      %507 = vmatpush2.bf16.msra.mxu0 0
      %508 = vmatprep.subr.bf16.mxu0 0
      %509 = vmatpush2.bf16.msra.mxu0 0
      %510 = vmatprep.mubr.bf16.mxu0 0
      %511 = vmatmul.mubr.bf16.gmra.mxu0 %v476
      %v512 = vpop.f32.mrf.mxu0
      %v513 = vadd.f32 %v456, %v512
      %v514 = vpop.f32.mrf.mxu0
      %v515 = vpop.f32.mrf.mxu0
      %v516 = vadd.f32 %v456, %v515
      %v517 = vpop.f32.mrf.mxu0
      %518 = vdwg.mxu0
      %v519 = vpack.c.bf16 %v516, %v513
      %vm520 = vcmask 64512
      %v522 = vsel %vm520, %v446, 0
      %v525 = vsel %vm520, %v519, 0
      %527 = vmatprep.subr.bf16.mxu0 0
      %528 = vmatpush1.bf16.xpose.msra.mxu0 0
      %529 = vmatprep.subr.bf16.mxu0 0
      %530 = vmatpush1.bf16.xpose.msra.mxu0 0
      %531 = vmatprep.subr.bf16.mxu0 0
      %532 = vmatpush1.bf16.xpose.msra.mxu0 0
      %533 = vmatprep.subr.bf16.mxu0 0
      %534 = vmatpush1.bf16.xpose.msra.mxu0 0
      %535 = vmatprep.subr.bf16.mxu0 0
      %536 = vmatpush1.bf16.xpose.msra.mxu0 0
      %537 = vmatprep.subr.bf16.mxu0 0
      %538 = vmatpush1.bf16.xpose.msra.mxu0 0
      %539 = vmatprep.subr.bf16.mxu0 0
      %540 = vmatpush1.bf16.xpose.msra.mxu0 0
      %541 = vmatprep.subr.bf16.mxu0 0
      %542 = vmatpush1.bf16.xpose.msra.mxu0 %v525
      %543 = vmatprep.subr.bf16.mxu0 0
      %544 = vmatpush2.bf16.xpose.msra.mxu0 0
      %545 = vmatprep.subr.bf16.mxu0 0
      %546 = vmatpush2.bf16.xpose.msra.mxu0 0
      %547 = vmatprep.subr.bf16.mxu0 0
      %548 = vmatpush2.bf16.xpose.msra.mxu0 0
      %549 = vmatprep.subr.bf16.mxu0 0
      %550 = vmatpush2.bf16.xpose.msra.mxu0 0
      %551 = vmatprep.subr.bf16.mxu0 0
      %552 = vmatpush2.bf16.xpose.msra.mxu0 0
      %553 = vmatprep.subr.bf16.mxu0 0
      %554 = vmatpush2.bf16.xpose.msra.mxu0 0
      %555 = vmatprep.subr.bf16.mxu0 0
      %556 = vmatpush2.bf16.xpose.msra.mxu0 0
      %557 = vmatprep.subr.bf16.mxu0 0
      %558 = vmatpush2.bf16.xpose.msra.mxu0 0
      %559 = vmatprep.mubr.bf16.mxu0 0
      %560 = vmatmul.mubr.bf16.gmra.mxu0 %v522
      %v561 = vpop.f32.mrf.mxu0
      %v562 = vadd.f32 0.0, %v561
      %v563 = vpop.f32.mrf.mxu0
      %v564 = vpop.f32.mrf.mxu0
      %v565 = vpop.f32.mrf.mxu0
      %566 = vdwg.mxu0
      %vm567 = vcmask 130048
      %v568 = vsel %vm567, %v562, -inf
      %569 = vmax.xlane.f32.xlu0 %v568
      %v570 = vpop.xlane.xlu0 %569
      %v571 = vsub.f32 %v562, %v570
      %v572 = vmul.f32 %v571, 1.442695
      %v573 = vpow.pop %v572
      %v574 = vsel %vm567, %v573, 0.0
      %575 = vadd.xlane.f32.xlu0 %v574
      %v576 = vpop.xlane.xlu0 %575
      %v577 = vpack.c.bf16 %v573, %v573
      %579 = vrot.lane.b32.xlu0 %v519, 96
      %v580 = vpop.permute.xlu0 %579
      %v583 = vsel %vm567, %v577, 0
      %585 = vmatprep.subr.bf16.mxu0 0
      %586 = vmatpush1.bf16.msra.mxu0 0
      %587 = vmatprep.subr.bf16.mxu0 0
      %588 = vmatpush1.bf16.msra.mxu0 0
      %589 = vmatprep.subr.bf16.mxu0 0
      %590 = vmatpush1.bf16.msra.mxu0 0
      %591 = vmatprep.subr.bf16.mxu0 0
      %592 = vmatpush1.bf16.msra.mxu0 0
      %593 = vmatprep.subr.bf16.mxu0 0
      %594 = vmatpush1.bf16.msra.mxu0 0
      %595 = vmatprep.subr.bf16.mxu0 0
      %596 = vmatpush1.bf16.msra.mxu0 0
      %597 = vmatprep.subr.bf16.mxu0 0
      %598 = vmatpush1.bf16.msra.mxu0 0
      %599 = vmatprep.subr.bf16.mxu0 0
      %600 = vmatpush1.bf16.msra.mxu0 %v580
      %601 = vmatprep.subr.bf16.mxu0 0
      %602 = vmatpush2.bf16.msra.mxu0 0
      %603 = vmatprep.subr.bf16.mxu0 0
      %604 = vmatpush2.bf16.msra.mxu0 0
      %605 = vmatprep.subr.bf16.mxu0 0
      %606 = vmatpush2.bf16.msra.mxu0 0
      %607 = vmatprep.subr.bf16.mxu0 0
      %608 = vmatpush2.bf16.msra.mxu0 0
      %609 = vmatprep.subr.bf16.mxu0 0
      %610 = vmatpush2.bf16.msra.mxu0 0
      %611 = vmatprep.subr.bf16.mxu0 0
      %612 = vmatpush2.bf16.msra.mxu0 0
      %613 = vmatprep.subr.bf16.mxu0 0
      %614 = vmatpush2.bf16.msra.mxu0 0
      %615 = vmatprep.subr.bf16.mxu0 0
      %616 = vmatpush2.bf16.msra.mxu0 0
      %617 = vmatprep.mubr.bf16.mxu0 0
      %618 = vmatmul.mubr.bf16.gmra.mxu0 %v583
      %v619 = vpop.f32.mrf.mxu0
      %v620 = vadd.f32 0.0, %v619
      %v621 = vpop.f32.mrf.mxu0
      %v622 = vpop.f32.mrf.mxu0
      %v623 = vpop.f32.mrf.mxu0
      %624 = vdwg.mxu0
      %v625 = vrcp.pop %v576
      %v626 = vmul.f32 %v620, %v625
      %627 = vst.msk [vmem:[#allocation2] sm:$0xff] %vm520, %v626
      %629 = vrot.lane.b32.xlu0 %v446, 120
      %v630 = vpop.permute.xlu0 %629
      %631 = vrot.lane.b32.xlu0 %v519, 120
      %v632 = vpop.permute.xlu0 %631
      %v634 = vsel %vm520, %v630, 0
      %v637 = vsel %vm520, %v632, 0
      %639 = vmatprep.subr.bf16.mxu0 0
      %640 = vmatpush1.bf16.xpose.msra.mxu0 0
      %641 = vmatprep.subr.bf16.mxu0 0
      %642 = vmatpush1.bf16.xpose.msra.mxu0 0
      %643 = vmatprep.subr.bf16.mxu0 0
      %644 = vmatpush1.bf16.xpose.msra.mxu0 0
      %645 = vmatprep.subr.bf16.mxu0 0
      %646 = vmatpush1.bf16.xpose.msra.mxu0 0
      %647 = vmatprep.subr.bf16.mxu0 0
      %648 = vmatpush1.bf16.xpose.msra.mxu0 0
      %649 = vmatprep.subr.bf16.mxu0 0
      %650 = vmatpush1.bf16.xpose.msra.mxu0 0
      %651 = vmatprep.subr.bf16.mxu0 0
      %652 = vmatpush1.bf16.xpose.msra.mxu0 0
      %653 = vmatprep.subr.bf16.mxu0 0
      %654 = vmatpush1.bf16.xpose.msra.mxu0 %v637
      %655 = vmatprep.subr.bf16.mxu0 0
      %656 = vmatpush2.bf16.xpose.msra.mxu0 0
      %657 = vmatprep.subr.bf16.mxu0 0
      %658 = vmatpush2.bf16.xpose.msra.mxu0 0
      %659 = vmatprep.subr.bf16.mxu0 0
      %660 = vmatpush2.bf16.xpose.msra.mxu0 0
      %661 = vmatprep.subr.bf16.mxu0 0
      %662 = vmatpush2.bf16.xpose.msra.mxu0 0
      %663 = vmatprep.subr.bf16.mxu0 0
      %664 = vmatpush2.bf16.xpose.msra.mxu0 0
      %665 = vmatprep.subr.bf16.mxu0 0
      %666 = vmatpush2.bf16.xpose.msra.mxu0 0
      %667 = vmatprep.subr.bf16.mxu0 0
      %668 = vmatpush2.bf16.xpose.msra.mxu0 0
      %669 = vmatprep.subr.bf16.mxu0 0
      %670 = vmatpush2.bf16.xpose.msra.mxu0 0
      %671 = vmatprep.mubr.bf16.mxu0 0
      %672 = vmatmul.mubr.bf16.gmra.mxu0 %v634
      %v673 = vpop.f32.mrf.mxu0
      %v674 = vadd.f32 0.0, %v673
      %v675 = vpop.f32.mrf.mxu0
      %v676 = vpop.f32.mrf.mxu0
      %v677 = vpop.f32.mrf.mxu0
      %678 = vdwg.mxu0
      %v679 = vsel %vm567, %v674, -inf
      %680 = vmax.xlane.f32.xlu0 %v679
      %v681 = vpop.xlane.xlu0 %680
      %v682 = vsub.f32 %v674, %v681
      %v683 = vmul.f32 %v682, 1.442695
      %v684 = vpow.pop %v683
      %v685 = vsel %vm567, %v684, 0.0
      %686 = vadd.xlane.f32.xlu0 %v685
      %v687 = vpop.xlane.xlu0 %686
      %v688 = vpack.c.bf16 %v684, %v684
      %689 = vrot.lane.b32.xlu0 %v519, 88
      %v690 = vpop.permute.xlu0 %689
      %v693 = vsel %vm567, %v688, 0
      %695 = vmatprep.subr.bf16.mxu0 0
      %696 = vmatpush1.bf16.msra.mxu0 0
      %697 = vmatprep.subr.bf16.mxu0 0
      %698 = vmatpush1.bf16.msra.mxu0 0
      %699 = vmatprep.subr.bf16.mxu0 0
      %700 = vmatpush1.bf16.msra.mxu0 0
      %701 = vmatprep.subr.bf16.mxu0 0
      %702 = vmatpush1.bf16.msra.mxu0 0
      %703 = vmatprep.subr.bf16.mxu0 0
      %704 = vmatpush1.bf16.msra.mxu0 0
      %705 = vmatprep.subr.bf16.mxu0 0
      %706 = vmatpush1.bf16.msra.mxu0 0
      %707 = vmatprep.subr.bf16.mxu0 0
      %708 = vmatpush1.bf16.msra.mxu0 0
      %709 = vmatprep.subr.bf16.mxu0 0
      %710 = vmatpush1.bf16.msra.mxu0 %v690
      %711 = vmatprep.subr.bf16.mxu0 0
      %712 = vmatpush2.bf16.msra.mxu0 0
      %713 = vmatprep.subr.bf16.mxu0 0
      %714 = vmatpush2.bf16.msra.mxu0 0
      %715 = vmatprep.subr.bf16.mxu0 0
      %716 = vmatpush2.bf16.msra.mxu0 0
      %717 = vmatprep.subr.bf16.mxu0 0
      %718 = vmatpush2.bf16.msra.mxu0 0
      %719 = vmatprep.subr.bf16.mxu0 0
      %720 = vmatpush2.bf16.msra.mxu0 0
      %721 = vmatprep.subr.bf16.mxu0 0
      %722 = vmatpush2.bf16.msra.mxu0 0
      %723 = vmatprep.subr.bf16.mxu0 0
      %724 = vmatpush2.bf16.msra.mxu0 0
      %725 = vmatprep.subr.bf16.mxu0 0
      %726 = vmatpush2.bf16.msra.mxu0 0
      %727 = vmatprep.mubr.bf16.mxu0 0
      %728 = vmatmul.mubr.bf16.gmra.mxu0 %v693
      %v729 = vpop.f32.mrf.mxu0
      %v730 = vadd.f32 0.0, %v729
      %v731 = vpop.f32.mrf.mxu0
      %v732 = vpop.f32.mrf.mxu0
      %v733 = vpop.f32.mrf.mxu0
      %734 = vdwg.mxu0
      %v735 = vrcp.pop %v687
      %v736 = vmul.f32 %v730, %v735
      %738 = vrot.lane.b32.xlu0 %v736, 8
      %v739 = vpop.permute.xlu0 %738
      %vm741 = vcmask 130112
      %742 = vst.msk [vmem:[#allocation2] sm:$0xff] %vm741, %v739
      %743 = vrot.lane.b32.xlu0 %v446, 112
      %v744 = vpop.permute.xlu0 %743
      %745 = vrot.lane.b32.xlu0 %v519, 112
      %v746 = vpop.permute.xlu0 %745
      %v748 = vsel %vm520, %v744, 0
      %v751 = vsel %vm520, %v746, 0
      %753 = vmatprep.subr.bf16.mxu0 0
      %754 = vmatpush1.bf16.xpose.msra.mxu0 0
      %755 = vmatprep.subr.bf16.mxu0 0
      %756 = vmatpush1.bf16.xpose.msra.mxu0 0
      %757 = vmatprep.subr.bf16.mxu0 0
      %758 = vmatpush1.bf16.xpose.msra.mxu0 0
      %759 = vmatprep.subr.bf16.mxu0 0
      %760 = vmatpush1.bf16.xpose.msra.mxu0 0
      %761 = vmatprep.subr.bf16.mxu0 0
      %762 = vmatpush1.bf16.xpose.msra.mxu0 0
      %763 = vmatprep.subr.bf16.mxu0 0
      %764 = vmatpush1.bf16.xpose.msra.mxu0 0
      %765 = vmatprep.subr.bf16.mxu0 0
      %766 = vmatpush1.bf16.xpose.msra.mxu0 0
      %767 = vmatprep.subr.bf16.mxu0 0
      %768 = vmatpush1.bf16.xpose.msra.mxu0 %v751
      %769 = vmatprep.subr.bf16.mxu0 0
      %770 = vmatpush2.bf16.xpose.msra.mxu0 0
      %771 = vmatprep.subr.bf16.mxu0 0
      %772 = vmatpush2.bf16.xpose.msra.mxu0 0
      %773 = vmatprep.subr.bf16.mxu0 0
      %774 = vmatpush2.bf16.xpose.msra.mxu0 0
      %775 = vmatprep.subr.bf16.mxu0 0
      %776 = vmatpush2.bf16.xpose.msra.mxu0 0
      %777 = vmatprep.subr.bf16.mxu0 0
      %778 = vmatpush2.bf16.xpose.msra.mxu0 0
      %779 = vmatprep.subr.bf16.mxu0 0
      %780 = vmatpush2.bf16.xpose.msra.mxu0 0
      %781 = vmatprep.subr.bf16.mxu0 0
      %782 = vmatpush2.bf16.xpose.msra.mxu0 0
      %783 = vmatprep.subr.bf16.mxu0 0
      %784 = vmatpush2.bf16.xpose.msra.mxu0 0
      %785 = vmatprep.mubr.bf16.mxu0 0
      %786 = vmatmul.mubr.bf16.gmra.mxu0 %v748
      %v787 = vpop.f32.mrf.mxu0
      %v788 = vadd.f32 0.0, %v787
      %v789 = vpop.f32.mrf.mxu0
      %v790 = vpop.f32.mrf.mxu0
      %v791 = vpop.f32.mrf.mxu0
      %792 = vdwg.mxu0
      %v793 = vsel %vm567, %v788, -inf
      %794 = vmax.xlane.f32.xlu0 %v793
      %v795 = vpop.xlane.xlu0 %794
      %v796 = vsub.f32 %v788, %v795
      %v797 = vmul.f32 %v796, 1.442695
      %v798 = vpow.pop %v797
      %v799 = vsel %vm567, %v798, 0.0
      %800 = vadd.xlane.f32.xlu0 %v799
      %v801 = vpop.xlane.xlu0 %800
      %v802 = vpack.c.bf16 %v798, %v798
      %803 = vrot.lane.b32.xlu0 %v519, 80
      %v804 = vpop.permute.xlu0 %803
      %v807 = vsel %vm567, %v802, 0
      %809 = vmatprep.subr.bf16.mxu0 0
      %810 = vmatpush1.bf16.msra.mxu0 0
      %811 = vmatprep.subr.bf16.mxu0 0
      %812 = vmatpush1.bf16.msra.mxu0 0
      %813 = vmatprep.subr.bf16.mxu0 0
      %814 = vmatpush1.bf16.msra.mxu0 0
      %815 = vmatprep.subr.bf16.mxu0 0
      %816 = vmatpush1.bf16.msra.mxu0 0
      %817 = vmatprep.subr.bf16.mxu0 0
      %818 = vmatpush1.bf16.msra.mxu0 0
      %819 = vmatprep.subr.bf16.mxu0 0
      %820 = vmatpush1.bf16.msra.mxu0 0
      %821 = vmatprep.subr.bf16.mxu0 0
      %822 = vmatpush1.bf16.msra.mxu0 0
      %823 = vmatprep.subr.bf16.mxu0 0
      %824 = vmatpush1.bf16.msra.mxu0 %v804
      %825 = vmatprep.subr.bf16.mxu0 0
      %826 = vmatpush2.bf16.msra.mxu0 0
      %827 = vmatprep.subr.bf16.mxu0 0
      %828 = vmatpush2.bf16.msra.mxu0 0
      %829 = vmatprep.subr.bf16.mxu0 0
      %830 = vmatpush2.bf16.msra.mxu0 0
      %831 = vmatprep.subr.bf16.mxu0 0
      %832 = vmatpush2.bf16.msra.mxu0 0
      %833 = vmatprep.subr.bf16.mxu0 0
      %834 = vmatpush2.bf16.msra.mxu0 0
      %835 = vmatprep.subr.bf16.mxu0 0
      %836 = vmatpush2.bf16.msra.mxu0 0
      %837 = vmatprep.subr.bf16.mxu0 0
      %838 = vmatpush2.bf16.msra.mxu0 0
      %839 = vmatprep.subr.bf16.mxu0 0
      %840 = vmatpush2.bf16.msra.mxu0 0
      %841 = vmatprep.mubr.bf16.mxu0 0
      %842 = vmatmul.mubr.bf16.gmra.mxu0 %v807
      %v843 = vpop.f32.mrf.mxu0
      %v844 = vadd.f32 0.0, %v843
      %v845 = vpop.f32.mrf.mxu0
      %v846 = vpop.f32.mrf.mxu0
      %v847 = vpop.f32.mrf.mxu0
      %848 = vdwg.mxu0
      %v849 = vrcp.pop %v801
      %v850 = vmul.f32 %v844, %v849
      %852 = vrot.lane.b32.xlu0 %v850, 16
      %v853 = vpop.permute.xlu0 %852
      %vm855 = vcmask 195712
      %856 = vst.msk [vmem:[#allocation2] sm:$0xff] %vm855, %v853
      %857 = vrot.lane.b32.xlu0 %v446, 104
      %v858 = vpop.permute.xlu0 %857
      %859 = vrot.lane.b32.xlu0 %v519, 104
      %v860 = vpop.permute.xlu0 %859
      %v862 = vsel %vm520, %v858, 0
      %v865 = vsel %vm520, %v860, 0
      %867 = vmatprep.subr.bf16.mxu0 0
      %868 = vmatpush1.bf16.xpose.msra.mxu0 0
      %869 = vmatprep.subr.bf16.mxu0 0
      %870 = vmatpush1.bf16.xpose.msra.mxu0 0
      %871 = vmatprep.subr.bf16.mxu0 0
      %872 = vmatpush1.bf16.xpose.msra.mxu0 0
      %873 = vmatprep.subr.bf16.mxu0 0
      %874 = vmatpush1.bf16.xpose.msra.mxu0 0
      %875 = vmatprep.subr.bf16.mxu0 0
      %876 = vmatpush1.bf16.xpose.msra.mxu0 0
      %877 = vmatprep.subr.bf16.mxu0 0
      %878 = vmatpush1.bf16.xpose.msra.mxu0 0
      %879 = vmatprep.subr.bf16.mxu0 0
      %880 = vmatpush1.bf16.xpose.msra.mxu0 0
      %881 = vmatprep.subr.bf16.mxu0 0
      %882 = vmatpush1.bf16.xpose.msra.mxu0 %v865
      %883 = vmatprep.subr.bf16.mxu0 0
      %884 = vmatpush2.bf16.xpose.msra.mxu0 0
      %885 = vmatprep.subr.bf16.mxu0 0
      %886 = vmatpush2.bf16.xpose.msra.mxu0 0
      %887 = vmatprep.subr.bf16.mxu0 0
      %888 = vmatpush2.bf16.xpose.msra.mxu0 0
      %889 = vmatprep.subr.bf16.mxu0 0
      %890 = vmatpush2.bf16.xpose.msra.mxu0 0
      %891 = vmatprep.subr.bf16.mxu0 0
      %892 = vmatpush2.bf16.xpose.msra.mxu0 0
      %893 = vmatprep.subr.bf16.mxu0 0
      %894 = vmatpush2.bf16.xpose.msra.mxu0 0
      %895 = vmatprep.subr.bf16.mxu0 0
      %896 = vmatpush2.bf16.xpose.msra.mxu0 0
      %897 = vmatprep.subr.bf16.mxu0 0
      %898 = vmatpush2.bf16.xpose.msra.mxu0 0
      %899 = vmatprep.mubr.bf16.mxu0 0
      %900 = vmatmul.mubr.bf16.gmra.mxu0 %v862
      %v901 = vpop.f32.mrf.mxu0
      %v902 = vadd.f32 0.0, %v901
      %v903 = vpop.f32.mrf.mxu0
      %v904 = vpop.f32.mrf.mxu0
      %v905 = vpop.f32.mrf.mxu0
      %906 = vdwg.mxu0
      %v907 = vsel %vm567, %v902, -inf
      %908 = vmax.xlane.f32.xlu0 %v907
      %v909 = vpop.xlane.xlu0 %908
      %v910 = vsub.f32 %v902, %v909
      %v911 = vmul.f32 %v910, 1.442695
      %v912 = vpow.pop %v911
      %v913 = vsel %vm567, %v912, 0.0
      %914 = vadd.xlane.f32.xlu0 %v913
      %v915 = vpop.xlane.xlu0 %914
      %v916 = vpack.c.bf16 %v912, %v912
      %917 = vrot.lane.b32.xlu0 %v519, 72
      %v918 = vpop.permute.xlu0 %917
      %v921 = vsel %vm567, %v916, 0
      %923 = vmatprep.subr.bf16.mxu0 0
      %924 = vmatpush1.bf16.msra.mxu0 0
      %925 = vmatprep.subr.bf16.mxu0 0
      %926 = vmatpush1.bf16.msra.mxu0 0
      %927 = vmatprep.subr.bf16.mxu0 0
      %928 = vmatpush1.bf16.msra.mxu0 0
      %929 = vmatprep.subr.bf16.mxu0 0
      %930 = vmatpush1.bf16.msra.mxu0 0
      %931 = vmatprep.subr.bf16.mxu0 0
      %932 = vmatpush1.bf16.msra.mxu0 0
      %933 = vmatprep.subr.bf16.mxu0 0
      %934 = vmatpush1.bf16.msra.mxu0 0
      %935 = vmatprep.subr.bf16.mxu0 0
      %936 = vmatpush1.bf16.msra.mxu0 0
      %937 = vmatprep.subr.bf16.mxu0 0
      %938 = vmatpush1.bf16.msra.mxu0 %v918
      %939 = vmatprep.subr.bf16.mxu0 0
      %940 = vmatpush2.bf16.msra.mxu0 0
      %941 = vmatprep.subr.bf16.mxu0 0
      %942 = vmatpush2.bf16.msra.mxu0 0
      %943 = vmatprep.subr.bf16.mxu0 0
      %944 = vmatpush2.bf16.msra.mxu0 0
      %945 = vmatprep.subr.bf16.mxu0 0
      %946 = vmatpush2.bf16.msra.mxu0 0
      %947 = vmatprep.subr.bf16.mxu0 0
      %948 = vmatpush2.bf16.msra.mxu0 0
      %949 = vmatprep.subr.bf16.mxu0 0
      %950 = vmatpush2.bf16.msra.mxu0 0
      %951 = vmatprep.subr.bf16.mxu0 0
      %952 = vmatpush2.bf16.msra.mxu0 0
      %953 = vmatprep.subr.bf16.mxu0 0
      %954 = vmatpush2.bf16.msra.mxu0 0
      %955 = vmatprep.mubr.bf16.mxu0 0
      %956 = vmatmul.mubr.bf16.gmra.mxu0 %v921
      %v957 = vpop.f32.mrf.mxu0
      %v958 = vadd.f32 0.0, %v957
      %v959 = vpop.f32.mrf.mxu0
      %v960 = vpop.f32.mrf.mxu0
      %v961 = vpop.f32.mrf.mxu0
      %962 = vdwg.mxu0
      %v963 = vrcp.pop %v915
      %v964 = vmul.f32 %v958, %v963
      %966 = vrot.lane.b32.xlu0 %v964, 24
      %v967 = vpop.permute.xlu0 %966
      %vm969 = vcmask 261312
      %970 = vst.msk [vmem:[#allocation2] sm:$0xff] %vm969, %v967
      %v971 = vld [vmem:[#allocation2] sm:$0xff]
      %v972 = vpack.c.bf16 %v971, %v971
      %v973 = vld [vmem:[%s6] sm:$0xf]
      %v974 = vld [vmem:[%s6 + $0x4] sm:$0xf]
      %v975 = vld [vmem:[%s6 + $0x8] sm:$0xf]
      %v976 = vld [vmem:[%s6 + $0xc] sm:$0xf]
      %v977 = vld [vmem:[%s7] sm:$0x1]
      %v979 = vlaneseq
      %v980 = vshrl.u32 %v979, 7
      %v981 = vsub.s32 0, %v980
      %v982 = vrot.slane %v977, %v981
      %v988 = vunpack.c.l.b16 %v973
      %v989 = vunpack.c.l.b16 %v974
      %v990 = vunpack.c.l.b16 %v975
      %v991 = vunpack.c.l.b16 %v976
      %v992 = vpack.c.b16 %v989, %v988
      %v993 = vpack.c.b16 %v991, %v990
      %v997 = vsel %vm402, %v972, 0
      %999 = vmatprep.subr.bf16.mxu0 0
      %1000 = vmatpush1.bf16.msra.mxu0 0
      %1001 = vmatprep.subr.bf16.mxu0 0
      %1002 = vmatpush1.bf16.msra.mxu0 0
      %1003 = vmatprep.subr.bf16.mxu0 0
      %1004 = vmatpush1.bf16.msra.mxu0 0
      %1005 = vmatprep.subr.bf16.mxu0 0
      %1006 = vmatpush1.bf16.msra.mxu0 0
      %1007 = vmatprep.subr.bf16.mxu0 0
      %1008 = vmatpush1.bf16.msra.mxu0 0
      %1009 = vmatprep.subr.bf16.mxu0 0
      %1010 = vmatpush1.bf16.msra.mxu0 0
      %1011 = vmatprep.subr.bf16.mxu0 0
      %1012 = vmatpush1.bf16.msra.mxu0 %v993
      %1013 = vmatprep.subr.bf16.mxu0 0
      %1014 = vmatpush1.bf16.msra.mxu0 %v992
      %1015 = vmatprep.subr.bf16.mxu0 0
      %1016 = vmatpush2.bf16.msra.mxu0 0
      %1017 = vmatprep.subr.bf16.mxu0 0
      %1018 = vmatpush2.bf16.msra.mxu0 0
      %1019 = vmatprep.subr.bf16.mxu0 0
      %1020 = vmatpush2.bf16.msra.mxu0 0
      %1021 = vmatprep.subr.bf16.mxu0 0
      %1022 = vmatpush2.bf16.msra.mxu0 0
      %1023 = vmatprep.subr.bf16.mxu0 0
      %1024 = vmatpush2.bf16.msra.mxu0 0
      %1025 = vmatprep.subr.bf16.mxu0 0
      %1026 = vmatpush2.bf16.msra.mxu0 0
      %1027 = vmatprep.subr.bf16.mxu0 0
      %1028 = vmatpush2.bf16.msra.mxu0 0
      %1029 = vmatprep.subr.bf16.mxu0 0
      %1030 = vmatpush2.bf16.msra.mxu0 0
      %1031 = vmatprep.mubr.bf16.mxu0 0
      %1032 = vmatmul.mubr.bf16.gmra.mxu0 %v997
      %v1033 = vpop.f32.mrf.mxu0
      %v1034 = vadd.f32 %v982, %v1033
      %v1035 = vpop.f32.mrf.mxu0
      %v1036 = vpop.f32.mrf.mxu0
      %v1037 = vpop.f32.mrf.mxu0
      %1038 = vdwg.mxu0
      %v1039 = vunpack.c.l.bf16 %v376
      %v1040 = vadd.f32 %v1034, %v1039
      %v1041 = vld [vmem:[%s8] sm:$0x1]
      %v1042 = vld [vmem:[%s9] sm:$0x1]
      %v1043 = vsel %vm402, %v1040, 0.0
      %1044 = vadd.xlane.f32.xlu0 %v1043
      %v1045 = vpop.xlane.xlu0 %1044
      %v1046 = vrcp.pop 32.0
      %v1047 = vmul.f32 %v1045, %v1046
      %v1048 = vsub.f32 %v1040, %v1047
      %v1049 = vmul.f32 %v1048, %v1048
      %v1050 = vsel %vm402, %v1049, 0.0
      %1051 = vadd.xlane.f32.xlu0 %v1050
      %v1052 = vpop.xlane.xlu0 %1051
      %v1053 = vmul.f32 %v1052, %v1046
      %v1054 = vadd.f32 %v1053, 1e-05
      %v1055 = vrsqrt.pop %v1054
      %v1056 = vmul.f32 %v1048, %v1055
      %v1058 = vlaneseq
      %v1059 = vshrl.u32 %v1058, 7
      %v1060 = vsub.s32 0, %v1059
      %v1061 = vrot.slane %v1041, %v1060
      %v1063 = vmul.f32 %v1056, %v1061
      %v1065 = vlaneseq
      %v1066 = vshrl.u32 %v1065, 7
      %v1067 = vsub.s32 0, %v1066
      %v1068 = vrot.slane %v1042, %v1067
      %v1070 = vadd.f32 %v1063, %v1068
      %v1071 = vpack.c.bf16 %v1070, %v1070
      %vm1072 = vcmask 257024
      %1073 = vst.msk [vmem:[%s374] sm:$0xf] %vm1072, %v1071
      %p1074 = scmp.lt.s32.totalorder %s21, 1
      %s1075 = scalar_select %p1074, %s21, 1
      %s1076 = smul.addr %s1075, 4
      %s1077 = scalar_lea.vmem %s10, %s1076
      // Predicated region
      $region61: #{event_painter_forward.19} parent=59 // pred_check
        %p1078 = pneg %p259
      $region62: #{event_painter_forward.19} parent=59 // pred_check_branch
        %1080 = sbr.rel (%p1078) target = $region64
      $region63: #{event_painter_forward.19} parent=59 // pred_region
        _
      $region64: #{event_painter_forward.19} parent=59 // pred_fallthru
        _
    $region60: #{event_painter_forward.19} parent=5 // pred_fallthru
      _
    %p1081 = scmp.le.s32.totalorder 2, %s16
    // Predicated region
    $region65: #{event_painter_forward.19} parent=5 // pred_check
      %p1082 = pneg %p1081
    $region66: #{event_painter_forward.19} parent=5 // pred_check_branch
      %1084 = sbr.rel (%p1082) target = $region68
    $region67: #{event_painter_forward.19} parent=5 // pred_region
      %s1085 = ssub.s32 %s16, 2
      // Predicated region
      $region69: #{event_painter_forward.19} parent=67 // pred_check
        %p1086 = pneg %p265
      $region70: #{event_painter_forward.19} parent=67 // pred_check_branch
        %1088 = sbr.rel (%p1086) target = $region72
      $region71: #{event_painter_forward.19} parent=67 // pred_region
        %p1089 = scmp.lt.s32.totalorder %s22, 1
        %s1090 = scalar_select %p1089, %s22, 1
        %s1091 = smul.addr %s1090, 4
        %s1092 = scalar_lea.vmem %s10, %s1091
      $region72: #{event_painter_forward.19} parent=67 // pred_fallthru
        _
    $region68: #{event_painter_forward.19} parent=5 // pred_fallthru
      _
  $region6: #{event_painter_forward.19} parent=0 // loop_footer
    %s20 = sadd.s32 1, %s16
  $region7: #{event_painter_forward.19} parent=0 // loop_footer_branch
    %15 = sbr.rel target = $region3
  $region8: #{event_painter_forward.19} parent=0 // loop_exit
    _

// kernel: event_painter_forward.25
$region0: #{event_painter_forward.25}
  #allocation0 [shape = 'u32[]', space=smem, size = 0x4, offset = 0x4, fixed_abs, tag = 'smem constant byte address 0x4 - core index']
  #allocation1 [shape = 'u32[144,128]{1,0:T(1,128)}', space=vmem, size = 0x12000, scoped, tag = 'internal scratch']
  %s0 = inlined_call_operand.vmem [shape: bf16[16,32], index: 0, kind: input, shape index: {}]
  %s1 = inlined_call_operand.vmem [shape: bf16[32,32], index: 1, kind: input, shape index: {}]
  %s2 = inlined_call_operand.vmem [shape: f32[1,32], index: 2, kind: input, shape index: {}]
  %s3 = inlined_call_operand.vmem [shape: bf16[32,32], index: 3, kind: input, shape index: {}]
  %s4 = inlined_call_operand.vmem [shape: f32[1,32], index: 4, kind: input, shape index: {}]
  %s5 = inlined_call_operand.vmem [shape: bf16[32,4], index: 5, kind: input, shape index: {}]
  %s6 = inlined_call_operand.vmem [shape: f32[1,4], index: 6, kind: input, shape index: {}]
  %s7 = inlined_call_operand.vmem [shape: f32[16,4], index: 7, kind: output, shape index: {}]
  %s8 = sld [smem:[#allocation0]]
  $region38: #{event_painter_forward.25} parent=0
    _
  %s10 = ssub.s32 1, %s8
  %s11 = scalar_select 0, %s10, %s8
  // Predicated region
  $region2: #{event_painter_forward.25} parent=0 // pred_check
    _
  $region3: #{event_painter_forward.25} parent=0 // pred_check_branch
    %13 = sbr.rel (0) target = $region5
  $region4: #{event_painter_forward.25} parent=0 // pred_region
    _
  $region5: #{event_painter_forward.25} parent=0 // pred_fallthru
    _
  // Predicated region
  $region6: #{event_painter_forward.25} parent=0 // pred_check
    _
  $region7: #{event_painter_forward.25} parent=0 // pred_check_branch
    %15 = sbr.rel (0) target = $region9
  $region8: #{event_painter_forward.25} parent=0 // pred_region
    _
  $region9: #{event_painter_forward.25} parent=0 // pred_fallthru
    _
  // Predicated region
  $region10: #{event_painter_forward.25} parent=0 // pred_check
    _
  $region11: #{event_painter_forward.25} parent=0 // pred_check_branch
    %17 = sbr.rel (0) target = $region13
  $region12: #{event_painter_forward.25} parent=0 // pred_region
    _
  $region13: #{event_painter_forward.25} parent=0 // pred_fallthru
    _
  // Predicated region
  $region14: #{event_painter_forward.25} parent=0 // pred_check
    _
  $region15: #{event_painter_forward.25} parent=0 // pred_check_branch
    %19 = sbr.rel (0) target = $region17
  $region16: #{event_painter_forward.25} parent=0 // pred_region
    _
  $region17: #{event_painter_forward.25} parent=0 // pred_fallthru
    _
  // Predicated region
  $region18: #{event_painter_forward.25} parent=0 // pred_check
    _
  $region19: #{event_painter_forward.25} parent=0 // pred_check_branch
    %21 = sbr.rel (0) target = $region21
  $region20: #{event_painter_forward.25} parent=0 // pred_region
    _
  $region21: #{event_painter_forward.25} parent=0 // pred_fallthru
    _
  // Predicated region
  $region22: #{event_painter_forward.25} parent=0 // pred_check
    _
  $region23: #{event_painter_forward.25} parent=0 // pred_check_branch
    %23 = sbr.rel (0) target = $region25
  $region24: #{event_painter_forward.25} parent=0 // pred_region
    _
  $region25: #{event_painter_forward.25} parent=0 // pred_fallthru
    _
  // Predicated region
  $region26: #{event_painter_forward.25} parent=0 // pred_check
    _
  $region27: #{event_painter_forward.25} parent=0 // pred_check_branch
    %25 = sbr.rel (0) target = $region29
  $region28: #{event_painter_forward.25} parent=0 // pred_region
    _
  $region29: #{event_painter_forward.25} parent=0 // pred_fallthru
    _
  %v27 = vld [vmem:[%s0] sm:$0xf]
  %v28 = vld [vmem:[%s0 + $0x4] sm:$0xf]
  %v29 = vld [vmem:[%s1] sm:$0xf]
  %v30 = vld [vmem:[%s1 + $0x4] sm:$0xf]
  %v31 = vld [vmem:[%s1 + $0x8] sm:$0xf]
  %v32 = vld [vmem:[%s1 + $0xc] sm:$0xf]
  %v33 = vld [vmem:[%s2] sm:$0x1]
  %v35 = vlaneseq
  %v36 = vshrl.u32 %v35, 7
  %v37 = vsub.s32 0, %v36
  %v38 = vrot.slane %v33, %v37
  %v42 = vunpack.c.l.b16 %v27
  %v43 = vunpack.c.l.b16 %v28
  %v44 = vpack.c.b16 %v43, %v42
  %v49 = vunpack.c.l.b16 %v29
  %v50 = vunpack.c.l.b16 %v30
  %v51 = vunpack.c.l.b16 %v31
  %v52 = vunpack.c.l.b16 %v32
  %v53 = vpack.c.b16 %v50, %v49
  %v54 = vpack.c.b16 %v52, %v51
  %vm57 = vcmask 261120
  %v59 = vsel %vm57, %v44, 0
  %61 = vmatprep.subr.bf16.mxu0 0
  %62 = vmatpush1.bf16.msra.mxu0 0
  %63 = vmatprep.subr.bf16.mxu0 0
  %64 = vmatpush1.bf16.msra.mxu0 0
  %65 = vmatprep.subr.bf16.mxu0 0
  %66 = vmatpush1.bf16.msra.mxu0 0
  %67 = vmatprep.subr.bf16.mxu0 0
  %68 = vmatpush1.bf16.msra.mxu0 0
  %69 = vmatprep.subr.bf16.mxu0 0
  %70 = vmatpush1.bf16.msra.mxu0 0
  %71 = vmatprep.subr.bf16.mxu0 0
  %72 = vmatpush1.bf16.msra.mxu0 0
  %73 = vmatprep.subr.bf16.mxu0 0
  %74 = vmatpush1.bf16.msra.mxu0 %v54
  %75 = vmatprep.subr.bf16.mxu0 0
  %76 = vmatpush1.bf16.msra.mxu0 %v53
  %77 = vmatprep.subr.bf16.mxu0 0
  %78 = vmatpush2.bf16.msra.mxu0 0
  %79 = vmatprep.subr.bf16.mxu0 0
  %80 = vmatpush2.bf16.msra.mxu0 0
  %81 = vmatprep.subr.bf16.mxu0 0
  %82 = vmatpush2.bf16.msra.mxu0 0
  %83 = vmatprep.subr.bf16.mxu0 0
  %84 = vmatpush2.bf16.msra.mxu0 0
  %85 = vmatprep.subr.bf16.mxu0 0
  %86 = vmatpush2.bf16.msra.mxu0 0
  %87 = vmatprep.subr.bf16.mxu0 0
  %88 = vmatpush2.bf16.msra.mxu0 0
  %89 = vmatprep.subr.bf16.mxu0 0
  %90 = vmatpush2.bf16.msra.mxu0 0
  %91 = vmatprep.subr.bf16.mxu0 0
  %92 = vmatpush2.bf16.msra.mxu0 0
  %93 = vmatprep.mubr.bf16.mxu0 0
  %94 = vmatmul.mubr.bf16.gmra.mxu0 %v59
  %v95 = vpop.f32.mrf.mxu0
  %v96 = vadd.f32 %v38, %v95
  %v97 = vpop.f32.mrf.mxu0
  %v98 = vpop.f32.mrf.mxu0
  %v99 = vadd.f32 %v38, %v98
  %v100 = vpop.f32.mrf.mxu0
  %101 = vdwg.mxu0
  %v102 = vmax.f32 %v96, 0.0
  %v103 = vmax.f32 %v99, 0.0
  %v104 = vpack.c.bf16 %v103, %v102
  %v105 = vld [vmem:[%s3] sm:$0xf]
  %v106 = vld [vmem:[%s3 + $0x4] sm:$0xf]
  %v107 = vld [vmem:[%s3 + $0x8] sm:$0xf]
  %v108 = vld [vmem:[%s3 + $0xc] sm:$0xf]
  %v109 = vld [vmem:[%s4] sm:$0x1]
  %v111 = vlaneseq
  %v112 = vshrl.u32 %v111, 7
  %v113 = vsub.s32 0, %v112
  %v114 = vrot.slane %v109, %v113
  %v120 = vunpack.c.l.b16 %v105
  %v121 = vunpack.c.l.b16 %v106
  %v122 = vunpack.c.l.b16 %v107
  %v123 = vunpack.c.l.b16 %v108
  %v124 = vpack.c.b16 %v121, %v120
  %v125 = vpack.c.b16 %v123, %v122
  %v129 = vsel %vm57, %v104, 0
  %131 = vmatprep.subr.bf16.mxu0 0
  %132 = vmatpush1.bf16.msra.mxu0 0
  %133 = vmatprep.subr.bf16.mxu0 0
  %134 = vmatpush1.bf16.msra.mxu0 0
  %135 = vmatprep.subr.bf16.mxu0 0
  %136 = vmatpush1.bf16.msra.mxu0 0
  %137 = vmatprep.subr.bf16.mxu0 0
  %138 = vmatpush1.bf16.msra.mxu0 0
  %139 = vmatprep.subr.bf16.mxu0 0
  %140 = vmatpush1.bf16.msra.mxu0 0
  %141 = vmatprep.subr.bf16.mxu0 0
  %142 = vmatpush1.bf16.msra.mxu0 0
  %143 = vmatprep.subr.bf16.mxu0 0
  %144 = vmatpush1.bf16.msra.mxu0 %v125
  %145 = vmatprep.subr.bf16.mxu0 0
  %146 = vmatpush1.bf16.msra.mxu0 %v124
  %147 = vmatprep.subr.bf16.mxu0 0
  %148 = vmatpush2.bf16.msra.mxu0 0
  %149 = vmatprep.subr.bf16.mxu0 0
  %150 = vmatpush2.bf16.msra.mxu0 0
  %151 = vmatprep.subr.bf16.mxu0 0
  %152 = vmatpush2.bf16.msra.mxu0 0
  %153 = vmatprep.subr.bf16.mxu0 0
  %154 = vmatpush2.bf16.msra.mxu0 0
  %155 = vmatprep.subr.bf16.mxu0 0
  %156 = vmatpush2.bf16.msra.mxu0 0
  %157 = vmatprep.subr.bf16.mxu0 0
  %158 = vmatpush2.bf16.msra.mxu0 0
  %159 = vmatprep.subr.bf16.mxu0 0
  %160 = vmatpush2.bf16.msra.mxu0 0
  %161 = vmatprep.subr.bf16.mxu0 0
  %162 = vmatpush2.bf16.msra.mxu0 0
  %163 = vmatprep.mubr.bf16.mxu0 0
  %164 = vmatmul.mubr.bf16.gmra.mxu0 %v129
  %v165 = vpop.f32.mrf.mxu0
  %v166 = vadd.f32 %v114, %v165
  %v167 = vpop.f32.mrf.mxu0
  %v168 = vpop.f32.mrf.mxu0
  %v169 = vadd.f32 %v114, %v168
  %v170 = vpop.f32.mrf.mxu0
  %171 = vdwg.mxu0
  %v172 = vmax.f32 %v166, 0.0
  %v173 = vmax.f32 %v169, 0.0
  %v174 = vpack.c.bf16 %v173, %v172
  %v175 = vld [vmem:[%s5] sm:$0xf]
  %v176 = vld [vmem:[%s5 + $0x4] sm:$0xf]
  %v177 = vld [vmem:[%s5 + $0x8] sm:$0xf]
  %v178 = vld [vmem:[%s5 + $0xc] sm:$0xf]
  %v179 = vld [vmem:[%s6] sm:$0x1]
  %v181 = vlaneseq
  %v182 = vshrl.u32 %v181, 7
  %v183 = vsub.s32 0, %v182
  %v184 = vrot.slane %v179, %v183
  %v190 = vunpack.c.l.b16 %v175
  %v191 = vunpack.c.l.b16 %v176
  %v192 = vunpack.c.l.b16 %v177
  %v193 = vunpack.c.l.b16 %v178
  %v194 = vpack.c.b16 %v191, %v190
  %v195 = vpack.c.b16 %v193, %v192
  %v199 = vsel %vm57, %v174, 0
  %201 = vmatprep.subr.bf16.mxu0 0
  %202 = vmatpush1.bf16.msra.mxu0 0
  %203 = vmatprep.subr.bf16.mxu0 0
  %204 = vmatpush1.bf16.msra.mxu0 0
  %205 = vmatprep.subr.bf16.mxu0 0
  %206 = vmatpush1.bf16.msra.mxu0 0
  %207 = vmatprep.subr.bf16.mxu0 0
  %208 = vmatpush1.bf16.msra.mxu0 0
  %209 = vmatprep.subr.bf16.mxu0 0
  %210 = vmatpush1.bf16.msra.mxu0 0
  %211 = vmatprep.subr.bf16.mxu0 0
  %212 = vmatpush1.bf16.msra.mxu0 0
  %213 = vmatprep.subr.bf16.mxu0 0
  %214 = vmatpush1.bf16.msra.mxu0 %v195
  %215 = vmatprep.subr.bf16.mxu0 0
  %216 = vmatpush1.bf16.msra.mxu0 %v194
  %217 = vmatprep.subr.bf16.mxu0 0
  %218 = vmatpush2.bf16.msra.mxu0 0
  %219 = vmatprep.subr.bf16.mxu0 0
  %220 = vmatpush2.bf16.msra.mxu0 0
  %221 = vmatprep.subr.bf16.mxu0 0
  %222 = vmatpush2.bf16.msra.mxu0 0
  %223 = vmatprep.subr.bf16.mxu0 0
  %224 = vmatpush2.bf16.msra.mxu0 0
  %225 = vmatprep.subr.bf16.mxu0 0
  %226 = vmatpush2.bf16.msra.mxu0 0
  %227 = vmatprep.subr.bf16.mxu0 0
  %228 = vmatpush2.bf16.msra.mxu0 0
  %229 = vmatprep.subr.bf16.mxu0 0
  %230 = vmatpush2.bf16.msra.mxu0 0
  %231 = vmatprep.subr.bf16.mxu0 0
  %232 = vmatpush2.bf16.msra.mxu0 0
  %233 = vmatprep.mubr.bf16.mxu0 0
  %234 = vmatmul.mubr.bf16.gmra.mxu0 %v199
  %v235 = vpop.f32.mrf.mxu0
  %v236 = vadd.f32 %v184, %v235
  %v237 = vpop.f32.mrf.mxu0
  %v238 = vpop.f32.mrf.mxu0
  %v239 = vadd.f32 %v184, %v238
  %v240 = vpop.f32.mrf.mxu0
  %241 = vdwg.mxu0
  %vm242 = vcmask 31744
  %243 = vst.msk [vmem:[%s7] sm:$0xff] %vm242, %v236
  %244 = vst.msk [vmem:[%s7 + $0x8] sm:$0xff] %vm242, %v239
  // Predicated region
  $region30: #{event_painter_forward.25} parent=0 // pred_check
    _
  $region31: #{event_painter_forward.25} parent=0 // pred_check_branch
    %246 = sbr.rel (0) target = $region33
  $region32: #{event_painter_forward.25} parent=0 // pred_region
    _
  $region33: #{event_painter_forward.25} parent=0 // pred_fallthru
    _
  // Predicated region
  $region34: #{event_painter_forward.25} parent=0 // pred_check
    _
  $region35: #{event_painter_forward.25} parent=0 // pred_check_branch
    %248 = sbr.rel (0) target = $region37
  $region36: #{event_painter_forward.25} parent=0 // pred_region
    _
  $region37: #{event_painter_forward.25} parent=0 // pred_fallthru
    _

</llo_original>
